<compile_context>
chip_gen: v5e
topology: v5e:2x2
jax: 0.10.0
libtpu: 0.0.40
codegen_flags: <defaults>
</compile_context>

<pallas_src>
import functools

import jax
import jax.numpy as jnp
from jax.experimental import pallas as pl
from jax.experimental.pallas import tpu as pltpu

EPS = 1e-8


# --------------------------------------------------------------------------- helpers
def _swap01(x):
    """(A, B, C) -> (B, A, C); prefer the layout-aware einshape when available."""
    if hasattr(pltpu, "einshape"):
        try:
            return pltpu.einshape("abc->bac", x)
        except Exception:
            pass
    return jnp.swapaxes(x, 0, 1)


def _round_up(n, m):
    return ((n + m - 1) // m) * m


def _pick_tile(total, target):
    """Largest multiple-of-8 divisor of `total` <= target (else the full size)."""
    if total <= target:
        return total
    t = (target // 8) * 8
    while t >= 8:
        if total % t == 0:
            return t
        t -= 8
    return total


def _pick_lane_tile(total, target):
    """Largest multiple-of-128 divisor of `total` <= target (else the full size)."""
    if total <= target:
        return total
    t = (target // 128) * 128
    while t >= 128:
        if total % t == 0:
            return t
        t -= 128
    return total


def _clamp_vmem(estimate):
    """Clamp the per-call VMEM request against the hardware capacity."""
    try:
        cap = int(pltpu.get_tpu_info().vmem_capacity_bytes)
    except Exception:
        cap = 64 << 20                       # conservative: v7x per-core VMEM
    return int(min(max(estimate, 16 << 20), int(cap * 0.85)))


def _weight_spec(shape, single_buffer):
    """Grid-invariant operand: request single buffering (no 2x weight VMEM)."""
    index_map = lambda *_: (0,) * len(shape)
    if single_buffer:
        try:
            return pl.BlockSpec(shape, index_map, pipeline_mode=pl.Buffered(1))
        except Exception:                    # pipeline_mode unsupported -> default
            pass
    return pl.BlockSpec(shape, index_map)


# --------------------------------------------------------------------------- stage 1
def _proj_rot_kernel(x_ref, rot_ref, g1_ref, wqk_ref, wv_ref,
                     q_ref, k_ref, v_ref, *, num_heads, head_dim, v_dim):
    """RMSNorm + TMHA `transformations` (q/k/v) + per-position rotation."""
    H, Hd = num_heads, head_dim
    x = x_ref[0]                                            # (Ts, D) f32
    Ts = x.shape[0]

    # RMSNorm: exact EUP rsqrt of the mean square
    # (max(sqrt(ms), EPS) == sqrt(max(ms, EPS^2)), so semantics are preserved).
    ms = jnp.mean(x * x, axis=-1, keepdims=True)
    xn = x * jax.lax.rsqrt(jnp.maximum(ms, EPS * EPS)) * g1_ref[...]
    xb = xn.astype(jnp.bfloat16)

    # q/k (q pre-scaled by 1/sqrt(Hd) on the host) and v projections: K=D MXU matmuls.
    qk = jnp.dot(xb, wqk_ref[...], preferred_element_type=jnp.float32)    # (Ts, 2*H*Hd)
    v = jnp.dot(xb, wv_ref[...], preferred_element_type=jnp.float32)      # (Ts, D)

    # Per-position rotation of q AND k for every head as Hd rank-1 VPU FMAs
    # (replaces S independent, badly shaped (2H,Hd)x(Hd,Hd) MXU matmuls).
    # Host packs the (mask-blended) rotator lane-dense, column-major by j:
    #   rot_ref[0][s, j*Hd + i] == rot_eff[s, i, j]
    qk3 = qk.reshape(Ts, 2 * H, Hd)
    rot = rot_ref[0]                                        # (Ts, Hd*Hd) bf16
    acc = qk3[:, :, 0:1] * rot[:, 0:Hd].astype(jnp.float32).reshape(Ts, 1, Hd)
    for j in range(1, Hd):                                  # static unroll, Hd <= 128
        col = rot[:, j * Hd:(j + 1) * Hd].astype(jnp.float32).reshape(Ts, 1, Hd)
        acc = acc + qk3[:, :, j:j + 1] * col

    # bf16 before the single head-major relayout (q and k relayout together).
    qk_hm = _swap01(acc.astype(jnp.bfloat16))               # (2H, Ts, Hd)
    q_ref[0] = qk_hm[:H]
    k_ref[0] = qk_hm[H:]
    v_ref[0] = _swap01(v.reshape(Ts, H, v_dim).astype(jnp.bfloat16))      # (H, Ts, vd)


# --------------------------------------------------------------------------- stage 2
def _attn_ffn_kernel(x_ref, mask_ref, q_ref, k_ref, v_ref,
                     wo_ref, g2_ref, win_ref, wgv_ref, wout_ref,
                     out_ref, num_acc, den_acc, *, num_heads, v_dim):
    """Flash-style Taylor attention over key tiles + fused wo/residual/FFN epilogue."""
    H, vd = num_heads, v_dim
    kt = pl.program_id(2)

    @pl.when(kt == 0)
    def _():
        num_acc[...] = jnp.zeros_like(num_acc)
        den_acc[...] = jnp.zeros_like(den_acc)

    # ---- accumulate Taylor numerator / denominator for this key tile ----
    q = q_ref[0]                               # (H, Tq, Hd) bf16
    k = k_ref[0]                               # (H, Tk, Hd) bf16
    v = v_ref[0]                               # (H, Tk, vd) bf16
    kmask = mask_ref[0]                        # (1, Tk) f32, 1.0 = valid key
    s = jnp.einsum('hqd,hkd->hqk', q, k, preferred_element_type=jnp.float32)
    w = (1.0 + s + 0.5 * (s * s)) * kmask      # 2nd-order Taylor of exp, padded keys dropped
    den_acc[...] += jnp.sum(w, axis=-1, keepdims=True)
    num_acc[...] += jnp.einsum('hqk,hkd->hqd', w.astype(jnp.bfloat16), v,
                               preferred_element_type=jnp.float32)

    # ---- last key tile: wo + residual + RMSNorm + SwiGLU FFN + residual ----
    @pl.when(kt == pl.num_programs(2) - 1)
    def _():
        x = x_ref[0]                                                       # (Tq, D) f32
        Tq = x.shape[0]
        attn = num_acc[...] * pl.reciprocal(jnp.maximum(den_acc[...], EPS))
        # collapse heads + wo into ONE K=D MXU matmul (no (H,S,D) intermediate)
        attn_q = _swap01(attn.astype(jnp.bfloat16)).reshape(Tq, H * vd)    # (Tq, D)
        ctx = jnp.dot(attn_q, wo_ref[...], preferred_element_type=jnp.float32)
        x1 = x + ctx                                                       # residual 1

        ms2 = jnp.mean(x1 * x1, axis=-1, keepdims=True)
        xn2 = x1 * jax.lax.rsqrt(jnp.maximum(ms2, EPS * EPS)) * g2_ref[...]
        xb2 = xn2.astype(jnp.bfloat16)
        h_in = jnp.dot(xb2, win_ref[...], preferred_element_type=jnp.float32)
        h_v = jnp.dot(xb2, wgv_ref[...], preferred_element_type=jnp.float32)
        gate = h_in * pl.reciprocal(1.0 + jnp.exp(-h_in), approx=True)     # SiLU via EUP
        hid = (gate * h_v).astype(jnp.bfloat16)
        ffn = jnp.dot(hid, wout_ref[...], preferred_element_type=jnp.float32)
        out_ref[0] = x1 + ffn                                              # residual 2


# --------------------------------------------------------------------------- wrapper
def _encoder_layer_impl(x, m_row, rot_cols, g1, wqk, wv, wo, g2, w_in, w_v, w_out,
                        *, num_heads, head_dim, single_buffer_weights):
    B, S, D = x.shape
    H, Hd = num_heads, head_dim
    vd = D // H
    qk2 = 2 * H * Hd
    inter = w_in.shape[1]
    sbw = single_buffer_weights
    wrep = 1 if sbw else 2

    ts = _pick_tile(S, 256)            # stage-1 sequence tile
    tq = _pick_tile(S, 256)            # stage-2 query tile
    tk = _pick_lane_tile(S, 512)       # stage-2 key tile (lane-dense mask block)

    # ---------------- stage 1: RMSNorm + projections + rotation ----------------
    proj_kernel = functools.partial(_proj_rot_kernel,
                                    num_heads=H, head_dim=Hd, v_dim=vd)
    w1 = wrep * (2 * D * qk2 + 2 * D * D + 4 * D)
    act1 = 2 * (4 * ts * D + 2 * ts * _round_up(Hd * Hd, 128)
                + 2 * 2 * H * ts * _round_up(Hd, 128)
                + 2 * H * ts * _round_up(vd, 128))
    tmp1 = 4 * ts * (qk2 + D) + 4 * ts * 2 * H * _round_up(Hd, 128)
    vmem1 = _clamp_vmem(int((w1 + act1 + tmp1) * 1.5) + (4 << 20))

    gs1 = pltpu.PrefetchScalarGridSpec(
        num_scalar_prefetch=0,
        grid=(B, S // ts),
        in_specs=[
            pl.BlockSpec((1, ts, D), lambda b, si: (b, si, 0)),            # x
            pl.BlockSpec((1, ts, Hd * Hd), lambda b, si: (b, si, 0)),      # packed rotator
            _weight_spec((1, D), sbw),                                     # g1
            _weight_spec((D, qk2), sbw),                                   # wqk (q pre-scaled)
            _weight_spec((D, D), sbw),                                     # wv
        ],
        out_specs=[
            pl.BlockSpec((1, H, ts, Hd), lambda b, si: (b, 0, si, 0)),     # q head-major
            pl.BlockSpec((1, H, ts, Hd), lambda b, si: (b, 0, si, 0)),     # k head-major
            pl.BlockSpec((1, H, ts, vd), lambda b, si: (b, 0, si, 0)),     # v head-major
        ])
    q_hm, k_hm, v_hm = pl.pallas_call(
        proj_kernel,
        out_shape=(jax.ShapeDtypeStruct((B, H, S, Hd), jnp.bfloat16),
                   jax.ShapeDtypeStruct((B, H, S, Hd), jnp.bfloat16),
                   jax.ShapeDtypeStruct((B, H, S, vd), jnp.bfloat16)),
        grid_spec=gs1,
        compiler_params=pltpu.CompilerParams(
            dimension_semantics=("parallel", "parallel"),
            vmem_limit_bytes=vmem1),
    )(x, rot_cols, g1, wqk, wv)

    # ---------------- stage 2: flash-style Taylor attention + wo + FFN ---------
    attn_kernel = functools.partial(_attn_ffn_kernel, num_heads=H, v_dim=vd)
    w2 = wrep * (2 * D * D + 2 * 2 * D * inter + 2 * inter * D + 4 * D)
    res2 = 2 * 4 * tq * D + 2 * H * tq * _round_up(Hd, 128)                 # x, out, q resident
    strm2 = 2 * (2 * H * tk * (_round_up(Hd, 128) + _round_up(vd, 128))
                 + 4 * _round_up(tk, 128))                                  # k/v/mask streams
    scr2 = 4 * H * tq * (_round_up(vd, 128) + 128)                          # num/den accumulators
    tmp2 = 2 * 4 * H * tq * tk + 4 * tq * (2 * inter + 2 * D)               # scores + FFN temps
    vmem2 = _clamp_vmem(int((w2 + res2 + strm2 + scr2 + tmp2) * 1.5) + (4 << 20))

    gs2 = pltpu.PrefetchScalarGridSpec(
        num_scalar_prefetch=0,
        grid=(B, S // tq, S // tk),
        in_specs=[
            pl.BlockSpec((1, tq, D), lambda b, qi, ki: (b, qi, 0)),          # x (residual)
            pl.BlockSpec((1, 1, tk), lambda b, qi, ki: (b, 0, ki)),          # key-validity row
            pl.BlockSpec((1, H, tq, Hd), lambda b, qi, ki: (b, 0, qi, 0)),   # q tile
            pl.BlockSpec((1, H, tk, Hd), lambda b, qi, ki: (b, 0, ki, 0)),   # k tile
            pl.BlockSpec((1, H, tk, vd), lambda b, qi, ki: (b, 0, ki, 0)),   # v tile
            _weight_spec((D, D), sbw),                                       # wo
            _weight_spec((1, D), sbw),                                       # g2
            _weight_spec((D, inter), sbw),                                   # w_in
            _weight_spec((D, inter), sbw),                                   # w_v
            _weight_spec((inter, D), sbw),                                   # w_out
        ],
        out_specs=pl.BlockSpec((1, tq, D), lambda b, qi, ki: (b, qi, 0)),
        scratch_shapes=[pltpu.VMEM((H, tq, vd), jnp.float32),                # Taylor numerator
                        pltpu.VMEM((H, tq, 1), jnp.float32)])                # Taylor denominator
    return pl.pallas_call(
        attn_kernel,
        out_shape=jax.ShapeDtypeStruct((B, S, D), jnp.float32),
        grid_spec=gs2,
        compiler_params=pltpu.CompilerParams(
            dimension_semantics=("parallel", "parallel", "arbitrary"),
            vmem_limit_bytes=vmem2),
    )(x, m_row, q_hm, k_hm, v_hm, wo, g2, w_in, w_v, w_out)


def encoder_layer(x, mask, rotator, params, *, num_heads, head_dim):
    B, S, D = x.shape
    H, Hd = num_heads, head_dim
    qk_dim = H * Hd

    # --- one-time host-side prep (tiny) ---
    # split the fused TMHA projection (no in-kernel lane slicing), fold the
    # attention scale 1/sqrt(Hd) into wq (rotation is linear, so it commutes),
    # blend the rotator with identity where the mask is False and pack it
    # lane-dense column-major by j, cast all MXU weights to bf16.
    wt = params["wt"]
    wq = wt[:, :qk_dim] * (Hd ** -0.5)
    wk = wt[:, qk_dim:2 * qk_dim]
    wqk = jnp.concatenate([wq, wk], axis=1).astype(jnp.bfloat16)          # (D, 2*H*Hd)
    wv = wt[:, 2 * qk_dim:].astype(jnp.bfloat16)                          # (D, D)
    wo = params["wo"].astype(jnp.bfloat16)                                # (D, D)
    w_in = params["w_in"].astype(jnp.bfloat16)
    w_v = params["w_v"].astype(jnp.bfloat16)
    w_out = params["w_out"].astype(jnp.bfloat16)

    eye = jnp.eye(Hd, dtype=rotator.dtype)
    rot_eff = jnp.where(mask[..., None, None], rotator, eye)
    rot_cols = jnp.swapaxes(rot_eff, -1, -2).reshape(B, S, Hd * Hd).astype(jnp.bfloat16)
    m_row = mask.astype(jnp.float32).reshape(B, 1, S)

    args = (x, m_row, rot_cols, params["g1"], wqk, wv, wo,
            params["g2"], w_in, w_v, w_out)
    kwargs = dict(num_heads=H, head_dim=Hd)
    try:
        return _encoder_layer_impl(*args, single_buffer_weights=hasattr(pl, "Buffered"),
                                   **kwargs)
    except Exception:
        # graceful fallback if Buffered(1) single-buffering is rejected
        return _encoder_layer_impl(*args, single_buffer_weights=False, **kwargs)


# --------------------------------------------------------------------------- reference
def encoder_layer_ref(x, mask, rotator, params, *, num_heads, head_dim):
    """Pure-JAX f32 reference mirroring the PyTorch forward (dropout = identity)."""
    B, S, D = x.shape
    hp = jax.lax.Precision.HIGHEST
    rms_scale = D ** -0.5

    def rmsnorm(y, g):
        n = jnp.sqrt(jnp.sum(y * y, -1, keepdims=True)) * rms_scale
        return y / jnp.maximum(n, EPS) * g

    qk = num_heads * head_dim
    v_dim = D // num_heads

    xn = rmsnorm(x, params["g1"])
    t = jnp.dot(xn, params["wt"], precision=hp)
    qs = t[..., :qk].reshape(B, S, num_heads, head_dim)
    ks = t[..., qk:2 * qk].reshape(B, S, num_heads, head_dim)
    vs = t[..., 2 * qk:].reshape(B, S, num_heads, v_dim)
    q_rot = jnp.einsum('bsij,bshj->bshi', rotator, qs, precision=hp)
    k_rot = jnp.einsum('bsij,bshj->bshi', rotator, ks, precision=hp)
    sel = mask[..., None, None]
    qs = jnp.where(sel, q_rot, qs)
    ks = jnp.where(sel, k_rot, ks)
    s = jnp.einsum('bqhd,bkhd->bhqk', qs, ks, precision=hp) * head_dim ** -0.5
    w = 1.0 + s + 0.5 * s * s
    w = w * mask[:, None, None, :].astype(jnp.float32)
    w = w / jnp.sum(w, -1, keepdims=True)
    attn = jnp.einsum('bhqk,bkhd->bqhd', w, vs, precision=hp).reshape(B, S, D)
    attn = jnp.dot(attn, params["wo"], precision=hp)
    x1 = x + attn

    xn2 = rmsnorm(x1, params["g2"])
    h_in = jnp.dot(xn2, params["w_in"], precision=hp)
    h_v = jnp.dot(xn2, params["w_v"], precision=hp)
    h = jax.nn.silu(h_in) * h_v
    return jnp.dot(h, params["w_out"], precision=hp) + x1


if __name__ == "__main__":
    B, S, D, H, Hd = 2, 8, 32, 4, 8      # v_dim = D // H = 8, intermediate = 4*D = 128
    t_dim = 2 * H * Hd + D
    inter = 4 * D

    key = jax.random.PRNGKey(0)
    k = jax.random.split(key, 8)
    params = {
        "g1": jnp.ones((1, D), jnp.float32),
        "g2": jnp.ones((1, D), jnp.float32),
        "wt": jax.random.normal(k[0], (D, t_dim), jnp.float32) * D ** -0.5,
        "wo": jax.random.normal(k[1], (D, D), jnp.float32) * D ** -0.5,
        "w_in": jax.random.normal(k[2], (D, inter), jnp.float32) * D ** -0.5,
        "w_v": jax.random.normal(k[3], (D, inter), jnp.float32) * D ** -0.5,
        "w_out": jax.random.normal(k[4], (inter, D), jnp.float32) * inter ** -0.5,
    }
    x = jax.random.normal(k[5], (B, S, D), jnp.float32)
    rotator = jax.random.normal(k[6], (B, S, Hd, Hd), jnp.float32) * Hd ** -0.5
    mask = jnp.array([[True] * S, [True] * (S - 2) + [False] * 2])

    out = encoder_layer(x, mask, rotator, params, num_heads=H, head_dim=Hd)
    out = jax.block_until_ready(out)

    ref = encoder_layer_ref(x, mask, rotator, params, num_heads=H, head_dim=Hd)
    max_err = float(jnp.max(jnp.abs(out - ref)))
    # bf16 MXU operands with f32 accumulation -> mixed-precision tolerance
    assert jnp.allclose(out, ref, atol=3e-2, rtol=3e-2), f"max abs err {max_err}"
    print("KERNEL_OK")
</pallas_src>

<mosaic_0001>
module attributes {stable_mosaic.version = 11 : i64} {
  func.func @_proj_rot_kernel(%arg0: i32, %arg1: i32, %arg2: memref<1x8x32xf32, #tpu.memory_space<vmem>>, %arg3: memref<1x8x64xbf16, #tpu.memory_space<vmem>>, %arg4: memref<1x32xf32, #tpu.memory_space<vmem>>, %arg5: memref<32x64xbf16, #tpu.memory_space<vmem>>, %arg6: memref<32x32xbf16, #tpu.memory_space<vmem>>, %arg7: memref<1x4x8x8xbf16, #tpu.memory_space<vmem>>, %arg8: memref<1x4x8x8xbf16, #tpu.memory_space<vmem>>, %arg9: memref<1x4x8x8xbf16, #tpu.memory_space<vmem>>) attributes {dimension_semantics = [#tpu.dimension_semantics<parallel>, #tpu.dimension_semantics<parallel>], iteration_bounds = array<i64: 2, 1>, scalar_prefetch = 0 : i64, scratch_operands = 0 : i64, tpu.core_type = #tpu.core_type<tc>, window_params = [{transform_indices = @transform_0, window_bounds = array<i64: 1, 8, 32>}, {transform_indices = @transform_1, window_bounds = array<i64: 1, 8, 64>}, {pipeline_mode = #tpu.pipeline_mode<synchronous>, transform_indices = @transform_2, window_bounds = array<i64: 1, 32>}, {pipeline_mode = #tpu.pipeline_mode<synchronous>, transform_indices = @transform_3, window_bounds = array<i64: 32, 64>}, {pipeline_mode = #tpu.pipeline_mode<synchronous>, transform_indices = @transform_4, window_bounds = array<i64: 32, 32>}, {transform_indices = @transform_5, window_bounds = array<i64: 1, 4, 8, 8>}, {transform_indices = @transform_6, window_bounds = array<i64: 1, 4, 8, 8>}, {transform_indices = @transform_7, window_bounds = array<i64: 1, 4, 8, 8>}]} {
    %c0 = arith.constant 0 : index
    %c0_0 = arith.constant 0 : index
    %c0_1 = arith.constant 0 : index
    %0 = vector.load %arg2[%c0, %c0_0, %c0_1] : memref<1x8x32xf32, #tpu.memory_space<vmem>>, vector<1x8x32xf32>
    %1 = vector.shape_cast %0 : vector<1x8x32xf32> to vector<8x32xf32>
    %2 = arith.mulf %1, %1 : vector<8x32xf32>
    %cst = arith.constant dense<0.000000e+00> : vector<8xf32>
    %3 = vector.multi_reduction <add>, %2, %cst [1] : vector<8x32xf32> to vector<8xf32>
    %4 = vector.shape_cast %3 : vector<8xf32> to vector<8x1xf32>
    %cst_2 = arith.constant 3.200000e+01 : f32
    %5 = vector.broadcast %cst_2 : f32 to vector<8x1xf32>
    %6 = arith.divf %4, %5 : vector<8x1xf32>
    %cst_3 = arith.constant 1.000000e-16 : f32
    %7 = vector.broadcast %cst_3 : f32 to vector<8x1xf32>
    %8 = arith.maximumf %6, %7 : vector<8x1xf32>
    %9 = math.rsqrt %8 : vector<8x1xf32>
    %10 = vector.broadcast %9 : vector<8x1xf32> to vector<8x32xf32>
    %11 = arith.mulf %1, %10 : vector<8x32xf32>
    %c0_4 = arith.constant 0 : index
    %c0_5 = arith.constant 0 : index
    %12 = vector.load %arg4[%c0_4, %c0_5] : memref<1x32xf32, #tpu.memory_space<vmem>>, vector<1x32xf32>
    %13 = vector.broadcast %12 : vector<1x32xf32> to vector<8x32xf32>
    %14 = arith.mulf %11, %13 : vector<8x32xf32>
    %15 = arith.truncf %14 : vector<8x32xf32> to vector<8x32xbf16>
    %c0_6 = arith.constant 0 : index
    %c0_7 = arith.constant 0 : index
    %16 = vector.load %arg5[%c0_6, %c0_7] : memref<32x64xbf16, #tpu.memory_space<vmem>>, vector<32x64xbf16>
    %cst_8 = arith.constant dense<0.000000e+00> : vector<8x64xf32>
    %17 = tpu.matmul %15, %16, %cst_8 {dimension_numbers = #tpu.dot_dimension_numbers<[1], [0], [0], [1], [0, 0, 1, 1], [], []>} : vector<8x32xbf16>, vector<32x64xbf16>, vector<8x64xf32> -> vector<8x64xf32>
    %c0_9 = arith.constant 0 : index
    %c0_10 = arith.constant 0 : index
    %18 = vector.load %arg6[%c0_9, %c0_10] : memref<32x32xbf16, #tpu.memory_space<vmem>>, vector<32x32xbf16>
    %cst_11 = arith.constant dense<0.000000e+00> : vector<8x32xf32>
    %19 = tpu.matmul %15, %18, %cst_11 {dimension_numbers = #tpu.dot_dimension_numbers<[1], [0], [0], [1], [0, 0, 1, 1], [], []>} : vector<8x32xbf16>, vector<32x32xbf16>, vector<8x32xf32> -> vector<8x32xf32>
    %20 = vector.shape_cast %17 : vector<8x64xf32> to vector<8x8x8xf32>
    %c0_12 = arith.constant 0 : index
    %c0_13 = arith.constant 0 : index
    %c0_14 = arith.constant 0 : index
    %21 = vector.load %arg3[%c0_12, %c0_13, %c0_14] : memref<1x8x64xbf16, #tpu.memory_space<vmem>>, vector<1x8x64xbf16>
    %22 = vector.shape_cast %21 : vector<1x8x64xbf16> to vector<8x64xbf16>
    %23 = vector.extract_strided_slice %20 {offsets = [0, 0, 0], sizes = [8, 8, 1], strides = [1, 1, 1]} : vector<8x8x8xf32> to vector<8x8x1xf32>
    %24 = vector.extract_strided_slice %22 {offsets = [0, 0], sizes = [8, 8], strides = [1, 1]} : vector<8x64xbf16> to vector<8x8xbf16>
    %25 = arith.extf %24 : vector<8x8xbf16> to vector<8x8xf32>
    %26 = vector.shape_cast %25 : vector<8x8xf32> to vector<8x1x8xf32>
    %27 = vector.broadcast %23 : vector<8x8x1xf32> to vector<8x8x8xf32>
    %28 = vector.broadcast %26 : vector<8x1x8xf32> to vector<8x8x8xf32>
    %29 = arith.mulf %27, %28 : vector<8x8x8xf32>
    %30 = vector.extract_strided_slice %22 {offsets = [0, 8], sizes = [8, 8], strides = [1, 1]} : vector<8x64xbf16> to vector<8x8xbf16>
    %31 = arith.extf %30 : vector<8x8xbf16> to vector<8x8xf32>
    %32 = vector.shape_cast %31 : vector<8x8xf32> to vector<8x1x8xf32>
    %33 = vector.extract_strided_slice %20 {offsets = [0, 0, 1], sizes = [8, 8, 1], strides = [1, 1, 1]} : vector<8x8x8xf32> to vector<8x8x1xf32>
    %34 = vector.broadcast %33 : vector<8x8x1xf32> to vector<8x8x8xf32>
    %35 = vector.broadcast %32 : vector<8x1x8xf32> to vector<8x8x8xf32>
    %36 = arith.mulf %34, %35 : vector<8x8x8xf32>
    %37 = arith.addf %29, %36 : vector<8x8x8xf32>
    %38 = vector.extract_strided_slice %22 {offsets = [0, 16], sizes = [8, 8], strides = [1, 1]} : vector<8x64xbf16> to vector<8x8xbf16>
    %39 = arith.extf %38 : vector<8x8xbf16> to vector<8x8xf32>
    %40 = vector.shape_cast %39 : vector<8x8xf32> to vector<8x1x8xf32>
    %41 = vector.extract_strided_slice %20 {offsets = [0, 0, 2], sizes = [8, 8, 1], strides = [1, 1, 1]} : vector<8x8x8xf32> to vector<8x8x1xf32>
    %42 = vector.broadcast %41 : vector<8x8x1xf32> to vector<8x8x8xf32>
    %43 = vector.broadcast %40 : vector<8x1x8xf32> to vector<8x8x8xf32>
    %44 = arith.mulf %42, %43 : vector<8x8x8xf32>
    %45 = arith.addf %37, %44 : vector<8x8x8xf32>
    %46 = vector.extract_strided_slice %22 {offsets = [0, 24], sizes = [8, 8], strides = [1, 1]} : vector<8x64xbf16> to vector<8x8xbf16>
    %47 = arith.extf %46 : vector<8x8xbf16> to vector<8x8xf32>
    %48 = vector.shape_cast %47 : vector<8x8xf32> to vector<8x1x8xf32>
    %49 = vector.extract_strided_slice %20 {offsets = [0, 0, 3], sizes = [8, 8, 1], strides = [1, 1, 1]} : vector<8x8x8xf32> to vector<8x8x1xf32>
    %50 = vector.broadcast %49 : vector<8x8x1xf32> to vector<8x8x8xf32>
    %51 = vector.broadcast %48 : vector<8x1x8xf32> to vector<8x8x8xf32>
    %52 = arith.mulf %50, %51 : vector<8x8x8xf32>
    %53 = arith.addf %45, %52 : vector<8x8x8xf32>
    %54 = vector.extract_strided_slice %22 {offsets = [0, 32], sizes = [8, 8], strides = [1, 1]} : vector<8x64xbf16> to vector<8x8xbf16>
    %55 = arith.extf %54 : vector<8x8xbf16> to vector<8x8xf32>
    %56 = vector.shape_cast %55 : vector<8x8xf32> to vector<8x1x8xf32>
    %57 = vector.extract_strided_slice %20 {offsets = [0, 0, 4], sizes = [8, 8, 1], strides = [1, 1, 1]} : vector<8x8x8xf32> to vector<8x8x1xf32>
    %58 = vector.broadcast %57 : vector<8x8x1xf32> to vector<8x8x8xf32>
    %59 = vector.broadcast %56 : vector<8x1x8xf32> to vector<8x8x8xf32>
    %60 = arith.mulf %58, %59 : vector<8x8x8xf32>
    %61 = arith.addf %53, %60 : vector<8x8x8xf32>
    %62 = vector.extract_strided_slice %22 {offsets = [0, 40], sizes = [8, 8], strides = [1, 1]} : vector<8x64xbf16> to vector<8x8xbf16>
    %63 = arith.extf %62 : vector<8x8xbf16> to vector<8x8xf32>
    %64 = vector.shape_cast %63 : vector<8x8xf32> to vector<8x1x8xf32>
    %65 = vector.extract_strided_slice %20 {offsets = [0, 0, 5], sizes = [8, 8, 1], strides = [1, 1, 1]} : vector<8x8x8xf32> to vector<8x8x1xf32>
    %66 = vector.broadcast %65 : vector<8x8x1xf32> to vector<8x8x8xf32>
    %67 = vector.broadcast %64 : vector<8x1x8xf32> to vector<8x8x8xf32>
    %68 = arith.mulf %66, %67 : vector<8x8x8xf32>
    %69 = arith.addf %61, %68 : vector<8x8x8xf32>
    %70 = vector.extract_strided_slice %22 {offsets = [0, 48], sizes = [8, 8], strides = [1, 1]} : vector<8x64xbf16> to vector<8x8xbf16>
    %71 = arith.extf %70 : vector<8x8xbf16> to vector<8x8xf32>
    %72 = vector.shape_cast %71 : vector<8x8xf32> to vector<8x1x8xf32>
    %73 = vector.extract_strided_slice %20 {offsets = [0, 0, 6], sizes = [8, 8, 1], strides = [1, 1, 1]} : vector<8x8x8xf32> to vector<8x8x1xf32>
    %74 = vector.broadcast %73 : vector<8x8x1xf32> to vector<8x8x8xf32>
    %75 = vector.broadcast %72 : vector<8x1x8xf32> to vector<8x8x8xf32>
    %76 = arith.mulf %74, %75 : vector<8x8x8xf32>
    %77 = arith.addf %69, %76 : vector<8x8x8xf32>
    %78 = vector.extract_strided_slice %22 {offsets = [0, 56], sizes = [8, 8], strides = [1, 1]} : vector<8x64xbf16> to vector<8x8xbf16>
    %79 = arith.extf %78 : vector<8x8xbf16> to vector<8x8xf32>
    %80 = vector.shape_cast %79 : vector<8x8xf32> to vector<8x1x8xf32>
    %81 = vector.extract_strided_slice %20 {offsets = [0, 0, 7], sizes = [8, 8, 1], strides = [1, 1, 1]} : vector<8x8x8xf32> to vector<8x8x1xf32>
    %82 = vector.broadcast %81 : vector<8x8x1xf32> to vector<8x8x8xf32>
    %83 = vector.broadcast %80 : vector<8x1x8xf32> to vector<8x8x8xf32>
    %84 = arith.mulf %82, %83 : vector<8x8x8xf32>
    %85 = arith.addf %77, %84 : vector<8x8x8xf32>
    %86 = arith.truncf %85 : vector<8x8x8xf32> to vector<8x8x8xbf16>
    %87 = tpu.transpose %86, [1, 0, 2] : vector<8x8x8xbf16> -> vector<8x8x8xbf16>
    %88 = vector.extract_strided_slice %87 {offsets = [0, 0, 0], sizes = [4, 8, 8], strides = [1, 1, 1]} : vector<8x8x8xbf16> to vector<4x8x8xbf16>
    %c0_15 = arith.constant 0 : index
    %c0_16 = arith.constant 0 : index
    %c0_17 = arith.constant 0 : index
    %c0_18 = arith.constant 0 : index
    %89 = vector.load %arg7[%c0_15, %c0_16, %c0_17, %c0_18] : memref<1x4x8x8xbf16, #tpu.memory_space<vmem>>, vector<1x4x8x8xbf16>
    %90 = vector.shape_cast %89 : vector<1x4x8x8xbf16> to vector<4x8x8xbf16>
    %91 = vector.shape_cast %88 : vector<4x8x8xbf16> to vector<1x4x8x8xbf16>
    tpu.vector_store %arg7[%c0_15, %c0_16, %c0_17, %c0_18], %91 {strides = array<i32>} : memref<1x4x8x8xbf16, #tpu.memory_space<vmem>>, vector<1x4x8x8xbf16>,
    %92 = vector.extract_strided_slice %87 {offsets = [4, 0, 0], sizes = [4, 8, 8], strides = [1, 1, 1]} : vector<8x8x8xbf16> to vector<4x8x8xbf16>
    %c0_19 = arith.constant 0 : index
    %c0_20 = arith.constant 0 : index
    %c0_21 = arith.constant 0 : index
    %c0_22 = arith.constant 0 : index
    %93 = vector.load %arg8[%c0_19, %c0_20, %c0_21, %c0_22] : memref<1x4x8x8xbf16, #tpu.memory_space<vmem>>, vector<1x4x8x8xbf16>
    %94 = vector.shape_cast %93 : vector<1x4x8x8xbf16> to vector<4x8x8xbf16>
    %95 = vector.shape_cast %92 : vector<4x8x8xbf16> to vector<1x4x8x8xbf16>
    tpu.vector_store %arg8[%c0_19, %c0_20, %c0_21, %c0_22], %95 {strides = array<i32>} : memref<1x4x8x8xbf16, #tpu.memory_space<vmem>>, vector<1x4x8x8xbf16>,
    %96 = vector.shape_cast %19 : vector<8x32xf32> to vector<8x4x8xf32>
    %97 = arith.truncf %96 : vector<8x4x8xf32> to vector<8x4x8xbf16>
    %98 = tpu.transpose %97, [1, 0, 2] : vector<8x4x8xbf16> -> vector<4x8x8xbf16>
    %c0_23 = arith.constant 0 : index
    %c0_24 = arith.constant 0 : index
    %c0_25 = arith.constant 0 : index
    %c0_26 = arith.constant 0 : index
    %99 = vector.load %arg9[%c0_23, %c0_24, %c0_25, %c0_26] : memref<1x4x8x8xbf16, #tpu.memory_space<vmem>>, vector<1x4x8x8xbf16>
    %100 = vector.shape_cast %99 : vector<1x4x8x8xbf16> to vector<4x8x8xbf16>
    %101 = vector.shape_cast %98 : vector<4x8x8xbf16> to vector<1x4x8x8xbf16>
    tpu.vector_store %arg9[%c0_23, %c0_24, %c0_25, %c0_26], %101 {strides = array<i32>} : memref<1x4x8x8xbf16, #tpu.memory_space<vmem>>, vector<1x4x8x8xbf16>,
    return
  }
  func.func @transform_0(%arg0: i32, %arg1: i32) -> (i32, i32, i32) {
    %c0_i32 = arith.constant 0 : i32
    %c0_i32_0 = arith.constant 0 : i32
    return %arg0, %arg1, %c0_i32 : i32, i32, i32
  }
  func.func @transform_1(%arg0: i32, %arg1: i32) -> (i32, i32, i32) {
    %c0_i32 = arith.constant 0 : i32
    %c0_i32_0 = arith.constant 0 : i32
    return %arg0, %arg1, %c0_i32 : i32, i32, i32
  }
  func.func @transform_2(%arg0: i32, %arg1: i32) -> (i32, i32) {
    %c0_i32 = arith.constant 0 : i32
    %c0_i32_0 = arith.constant 0 : i32
    %c0_i32_1 = arith.constant 0 : i32
    return %c0_i32, %c0_i32_0 : i32, i32
  }
  func.func @transform_3(%arg0: i32, %arg1: i32) -> (i32, i32) {
    %c0_i32 = arith.constant 0 : i32
    %c0_i32_0 = arith.constant 0 : i32
    %c0_i32_1 = arith.constant 0 : i32
    return %c0_i32, %c0_i32_0 : i32, i32
  }
  func.func @transform_4(%arg0: i32, %arg1: i32) -> (i32, i32) {
    %c0_i32 = arith.constant 0 : i32
    %c0_i32_0 = arith.constant 0 : i32
    %c0_i32_1 = arith.constant 0 : i32
    return %c0_i32, %c0_i32_0 : i32, i32
  }
  func.func @transform_5(%arg0: i32, %arg1: i32) -> (i32, i32, i32, i32) {
    %c0_i32 = arith.constant 0 : i32
    %c0_i32_0 = arith.constant 0 : i32
    %c0_i32_1 = arith.constant 0 : i32
    return %arg0, %c0_i32, %arg1, %c0_i32_0 : i32, i32, i32, i32
  }
  func.func @transform_6(%arg0: i32, %arg1: i32) -> (i32, i32, i32, i32) {
    %c0_i32 = arith.constant 0 : i32
    %c0_i32_0 = arith.constant 0 : i32
    %c0_i32_1 = arith.constant 0 : i32
    return %arg0, %c0_i32, %arg1, %c0_i32_0 : i32, i32, i32, i32
  }
  func.func @transform_7(%arg0: i32, %arg1: i32) -> (i32, i32, i32, i32) {
    %c0_i32 = arith.constant 0 : i32
    %c0_i32_0 = arith.constant 0 : i32
    %c0_i32_1 = arith.constant 0 : i32
    return %arg0, %c0_i32, %arg1, %c0_i32_0 : i32, i32, i32, i32
  }
}

module attributes {stable_mosaic.version = 11 : i64} {
  func.func @_proj_rot_kernel(%arg0: i32, %arg1: i32, %arg2: memref<1x8x32xf32, #tpu.memory_space<vmem>>, %arg3: memref<1x8x64xbf16, #tpu.memory_space<vmem>>, %arg4: memref<1x32xf32, #tpu.memory_space<vmem>>, %arg5: memref<32x64xbf16, #tpu.memory_space<vmem>>, %arg6: memref<32x32xbf16, #tpu.memory_space<vmem>>, %arg7: memref<1x4x8x8xbf16, #tpu.memory_space<vmem>>, %arg8: memref<1x4x8x8xbf16, #tpu.memory_space<vmem>>, %arg9: memref<1x4x8x8xbf16, #tpu.memory_space<vmem>>) attributes {dimension_semantics = [#tpu.dimension_semantics<parallel>, #tpu.dimension_semantics<parallel>], iteration_bounds = array<i64: 2, 1>, scalar_prefetch = 0 : i64, scratch_operands = 0 : i64, tpu.core_type = #tpu.core_type<tc>, window_params = [{transform_indices = @transform_0, window_bounds = array<i64: 1, 8, 32>}, {transform_indices = @transform_1, window_bounds = array<i64: 1, 8, 64>}, {pipeline_mode = #tpu.pipeline_mode<synchronous>, transform_indices = @transform_2, window_bounds = array<i64: 1, 32>}, {pipeline_mode = #tpu.pipeline_mode<synchronous>, transform_indices = @transform_3, window_bounds = array<i64: 32, 64>}, {pipeline_mode = #tpu.pipeline_mode<synchronous>, transform_indices = @transform_4, window_bounds = array<i64: 32, 32>}, {transform_indices = @transform_5, window_bounds = array<i64: 1, 4, 8, 8>}, {transform_indices = @transform_6, window_bounds = array<i64: 1, 4, 8, 8>}, {transform_indices = @transform_7, window_bounds = array<i64: 1, 4, 8, 8>}]} {
    %c0 = arith.constant 0 : index
    %c0_0 = arith.constant 0 : index
    %c0_1 = arith.constant 0 : index
    %0 = vector.load %arg2[%c0, %c0_0, %c0_1] : memref<1x8x32xf32, #tpu.memory_space<vmem>>, vector<1x8x32xf32>
    %1 = vector.shape_cast %0 : vector<1x8x32xf32> to vector<8x32xf32>
    %2 = arith.mulf %1, %1 : vector<8x32xf32>
    %cst = arith.constant dense<0.000000e+00> : vector<8xf32>
    %3 = vector.multi_reduction <add>, %2, %cst [1] : vector<8x32xf32> to vector<8xf32>
    %4 = vector.shape_cast %3 : vector<8xf32> to vector<8x1xf32>
    %cst_2 = arith.constant 3.200000e+01 : f32
    %5 = vector.broadcast %cst_2 : f32 to vector<8x1xf32>
    %6 = arith.divf %4, %5 : vector<8x1xf32>
    %cst_3 = arith.constant 1.000000e-16 : f32
    %7 = vector.broadcast %cst_3 : f32 to vector<8x1xf32>
    %8 = arith.maximumf %6, %7 : vector<8x1xf32>
    %9 = math.rsqrt %8 : vector<8x1xf32>
    %10 = vector.broadcast %9 : vector<8x1xf32> to vector<8x32xf32>
    %11 = arith.mulf %1, %10 : vector<8x32xf32>
    %c0_4 = arith.constant 0 : index
    %c0_5 = arith.constant 0 : index
    %12 = vector.load %arg4[%c0_4, %c0_5] : memref<1x32xf32, #tpu.memory_space<vmem>>, vector<1x32xf32>
    %13 = vector.broadcast %12 : vector<1x32xf32> to vector<8x32xf32>
    %14 = arith.mulf %11, %13 : vector<8x32xf32>
    %15 = arith.truncf %14 : vector<8x32xf32> to vector<8x32xbf16>
    %c0_6 = arith.constant 0 : index
    %c0_7 = arith.constant 0 : index
    %16 = vector.load %arg5[%c0_6, %c0_7] : memref<32x64xbf16, #tpu.memory_space<vmem>>, vector<32x64xbf16>
    %cst_8 = arith.constant dense<0.000000e+00> : vector<8x64xf32>
    %17 = tpu.matmul %15, %16, %cst_8 {dimension_numbers = #tpu.dot_dimension_numbers<[1], [0], [0], [1], [0, 0, 1, 1], [], []>} : vector<8x32xbf16>, vector<32x64xbf16>, vector<8x64xf32> -> vector<8x64xf32>
    %c0_9 = arith.constant 0 : index
    %c0_10 = arith.constant 0 : index
    %18 = vector.load %arg6[%c0_9, %c0_10] : memref<32x32xbf16, #tpu.memory_space<vmem>>, vector<32x32xbf16>
    %cst_11 = arith.constant dense<0.000000e+00> : vector<8x32xf32>
    %19 = tpu.matmul %15, %18, %cst_11 {dimension_numbers = #tpu.dot_dimension_numbers<[1], [0], [0], [1], [0, 0, 1, 1], [], []>} : vector<8x32xbf16>, vector<32x32xbf16>, vector<8x32xf32> -> vector<8x32xf32>
    %20 = vector.shape_cast %17 : vector<8x64xf32> to vector<8x8x8xf32>
    %c0_12 = arith.constant 0 : index
    %c0_13 = arith.constant 0 : index
    %c0_14 = arith.constant 0 : index
    %21 = vector.load %arg3[%c0_12, %c0_13, %c0_14] : memref<1x8x64xbf16, #tpu.memory_space<vmem>>, vector<1x8x64xbf16>
    %22 = vector.shape_cast %21 : vector<1x8x64xbf16> to vector<8x64xbf16>
    %23 = vector.extract_strided_slice %20 {offsets = [0, 0, 0], sizes = [8, 8, 1], strides = [1, 1, 1]} : vector<8x8x8xf32> to vector<8x8x1xf32>
    %24 = vector.extract_strided_slice %22 {offsets = [0, 0], sizes = [8, 8], strides = [1, 1]} : vector<8x64xbf16> to vector<8x8xbf16>
    %25 = arith.extf %24 : vector<8x8xbf16> to vector<8x8xf32>
    %26 = vector.shape_cast %25 : vector<8x8xf32> to vector<8x1x8xf32>
    %27 = vector.broadcast %23 : vector<8x8x1xf32> to vector<8x8x8xf32>
    %28 = vector.broadcast %26 : vector<8x1x8xf32> to vector<8x8x8xf32>
    %29 = arith.mulf %27, %28 : vector<8x8x8xf32>
    %30 = vector.extract_strided_slice %22 {offsets = [0, 8], sizes = [8, 8], strides = [1, 1]} : vector<8x64xbf16> to vector<8x8xbf16>
    %31 = arith.extf %30 : vector<8x8xbf16> to vector<8x8xf32>
    %32 = vector.shape_cast %31 : vector<8x8xf32> to vector<8x1x8xf32>
    %33 = vector.extract_strided_slice %20 {offsets = [0, 0, 1], sizes = [8, 8, 1], strides = [1, 1, 1]} : vector<8x8x8xf32> to vector<8x8x1xf32>
    %34 = vector.broadcast %33 : vector<8x8x1xf32> to vector<8x8x8xf32>
    %35 = vector.broadcast %32 : vector<8x1x8xf32> to vector<8x8x8xf32>
    %36 = arith.mulf %34, %35 : vector<8x8x8xf32>
    %37 = arith.addf %29, %36 : vector<8x8x8xf32>
    %38 = vector.extract_strided_slice %22 {offsets = [0, 16], sizes = [8, 8], strides = [1, 1]} : vector<8x64xbf16> to vector<8x8xbf16>
    %39 = arith.extf %38 : vector<8x8xbf16> to vector<8x8xf32>
    %40 = vector.shape_cast %39 : vector<8x8xf32> to vector<8x1x8xf32>
    %41 = vector.extract_strided_slice %20 {offsets = [0, 0, 2], sizes = [8, 8, 1], strides = [1, 1, 1]} : vector<8x8x8xf32> to vector<8x8x1xf32>
    %42 = vector.broadcast %41 : vector<8x8x1xf32> to vector<8x8x8xf32>
    %43 = vector.broadcast %40 : vector<8x1x8xf32> to vector<8x8x8xf32>
    %44 = arith.mulf %42, %43 : vector<8x8x8xf32>
    %45 = arith.addf %37, %44 : vector<8x8x8xf32>
    %46 = vector.extract_strided_slice %22 {offsets = [0, 24], sizes = [8, 8], strides = [1, 1]} : vector<8x64xbf16> to vector<8x8xbf16>
    %47 = arith.extf %46 : vector<8x8xbf16> to vector<8x8xf32>
    %48 = vector.shape_cast %47 : vector<8x8xf32> to vector<8x1x8xf32>
    %49 = vector.extract_strided_slice %20 {offsets = [0, 0, 3], sizes = [8, 8, 1], strides = [1, 1, 1]} : vector<8x8x8xf32> to vector<8x8x1xf32>
    %50 = vector.broadcast %49 : vector<8x8x1xf32> to vector<8x8x8xf32>
    %51 = vector.broadcast %48 : vector<8x1x8xf32> to vector<8x8x8xf32>
    %52 = arith.mulf %50, %51 : vector<8x8x8xf32>
    %53 = arith.addf %45, %52 : vector<8x8x8xf32>
    %54 = vector.extract_strided_slice %22 {offsets = [0, 32], sizes = [8, 8], strides = [1, 1]} : vector<8x64xbf16> to vector<8x8xbf16>
    %55 = arith.extf %54 : vector<8x8xbf16> to vector<8x8xf32>
    %56 = vector.shape_cast %55 : vector<8x8xf32> to vector<8x1x8xf32>
    %57 = vector.extract_strided_slice %20 {offsets = [0, 0, 4], sizes = [8, 8, 1], strides = [1, 1, 1]} : vector<8x8x8xf32> to vector<8x8x1xf32>
    %58 = vector.broadcast %57 : vector<8x8x1xf32> to vector<8x8x8xf32>
    %59 = vector.broadcast %56 : vector<8x1x8xf32> to vector<8x8x8xf32>
    %60 = arith.mulf %58, %59 : vector<8x8x8xf32>
    %61 = arith.addf %53, %60 : vector<8x8x8xf32>
    %62 = vector.extract_strided_slice %22 {offsets = [0, 40], sizes = [8, 8], strides = [1, 1]} : vector<8x64xbf16> to vector<8x8xbf16>
    %63 = arith.extf %62 : vector<8x8xbf16> to vector<8x8xf32>
    %64 = vector.shape_cast %63 : vector<8x8xf32> to vector<8x1x8xf32>
    %65 = vector.extract_strided_slice %20 {offsets = [0, 0, 5], sizes = [8, 8, 1], strides = [1, 1, 1]} : vector<8x8x8xf32> to vector<8x8x1xf32>
    %66 = vector.broadcast %65 : vector<8x8x1xf32> to vector<8x8x8xf32>
    %67 = vector.broadcast %64 : vector<8x1x8xf32> to vector<8x8x8xf32>
    %68 = arith.mulf %66, %67 : vector<8x8x8xf32>
    %69 = arith.addf %61, %68 : vector<8x8x8xf32>
    %70 = vector.extract_strided_slice %22 {offsets = [0, 48], sizes = [8, 8], strides = [1, 1]} : vector<8x64xbf16> to vector<8x8xbf16>
    %71 = arith.extf %70 : vector<8x8xbf16> to vector<8x8xf32>
    %72 = vector.shape_cast %71 : vector<8x8xf32> to vector<8x1x8xf32>
    %73 = vector.extract_strided_slice %20 {offsets = [0, 0, 6], sizes = [8, 8, 1], strides = [1, 1, 1]} : vector<8x8x8xf32> to vector<8x8x1xf32>
    %74 = vector.broadcast %73 : vector<8x8x1xf32> to vector<8x8x8xf32>
    %75 = vector.broadcast %72 : vector<8x1x8xf32> to vector<8x8x8xf32>
    %76 = arith.mulf %74, %75 : vector<8x8x8xf32>
    %77 = arith.addf %69, %76 : vector<8x8x8xf32>
    %78 = vector.extract_strided_slice %22 {offsets = [0, 56], sizes = [8, 8], strides = [1, 1]} : vector<8x64xbf16> to vector<8x8xbf16>
    %79 = arith.extf %78 : vector<8x8xbf16> to vector<8x8xf32>
    %80 = vector.shape_cast %79 : vector<8x8xf32> to vector<8x1x8xf32>
    %81 = vector.extract_strided_slice %20 {offsets = [0, 0, 7], sizes = [8, 8, 1], strides = [1, 1, 1]} : vector<8x8x8xf32> to vector<8x8x1xf32>
    %82 = vector.broadcast %81 : vector<8x8x1xf32> to vector<8x8x8xf32>
    %83 = vector.broadcast %80 : vector<8x1x8xf32> to vector<8x8x8xf32>
    %84 = arith.mulf %82, %83 : vector<8x8x8xf32>
    %85 = arith.addf %77, %84 : vector<8x8x8xf32>
    %86 = arith.truncf %85 : vector<8x8x8xf32> to vector<8x8x8xbf16>
    %87 = tpu.transpose %86, [1, 0, 2] : vector<8x8x8xbf16> -> vector<8x8x8xbf16>
    %88 = vector.extract_strided_slice %87 {offsets = [0, 0, 0], sizes = [4, 8, 8], strides = [1, 1, 1]} : vector<8x8x8xbf16> to vector<4x8x8xbf16>
    %c0_15 = arith.constant 0 : index
    %c0_16 = arith.constant 0 : index
    %c0_17 = arith.constant 0 : index
    %c0_18 = arith.constant 0 : index
    %89 = vector.load %arg7[%c0_15, %c0_16, %c0_17, %c0_18] : memref<1x4x8x8xbf16, #tpu.memory_space<vmem>>, vector<1x4x8x8xbf16>
    %90 = vector.shape_cast %89 : vector<1x4x8x8xbf16> to vector<4x8x8xbf16>
    %91 = vector.shape_cast %88 : vector<4x8x8xbf16> to vector<1x4x8x8xbf16>
    tpu.vector_store %arg7[%c0_15, %c0_16, %c0_17, %c0_18], %91 {strides = array<i32>} : memref<1x4x8x8xbf16, #tpu.memory_space<vmem>>, vector<1x4x8x8xbf16>,
    %92 = vector.extract_strided_slice %87 {offsets = [4, 0, 0], sizes = [4, 8, 8], strides = [1, 1, 1]} : vector<8x8x8xbf16> to vector<4x8x8xbf16>
    %c0_19 = arith.constant 0 : index
    %c0_20 = arith.constant 0 : index
    %c0_21 = arith.constant 0 : index
    %c0_22 = arith.constant 0 : index
    %93 = vector.load %arg8[%c0_19, %c0_20, %c0_21, %c0_22] : memref<1x4x8x8xbf16, #tpu.memory_space<vmem>>, vector<1x4x8x8xbf16>
    %94 = vector.shape_cast %93 : vector<1x4x8x8xbf16> to vector<4x8x8xbf16>
    %95 = vector.shape_cast %92 : vector<4x8x8xbf16> to vector<1x4x8x8xbf16>
    tpu.vector_store %arg8[%c0_19, %c0_20, %c0_21, %c0_22], %95 {strides = array<i32>} : memref<1x4x8x8xbf16, #tpu.memory_space<vmem>>, vector<1x4x8x8xbf16>,
    %96 = vector.shape_cast %19 : vector<8x32xf32> to vector<8x4x8xf32>
    %97 = arith.truncf %96 : vector<8x4x8xf32> to vector<8x4x8xbf16>
    %98 = tpu.transpose %97, [1, 0, 2] : vector<8x4x8xbf16> -> vector<4x8x8xbf16>
    %c0_23 = arith.constant 0 : index
    %c0_24 = arith.constant 0 : index
    %c0_25 = arith.constant 0 : index
    %c0_26 = arith.constant 0 : index
    %99 = vector.load %arg9[%c0_23, %c0_24, %c0_25, %c0_26] : memref<1x4x8x8xbf16, #tpu.memory_space<vmem>>, vector<1x4x8x8xbf16>
    %100 = vector.shape_cast %99 : vector<1x4x8x8xbf16> to vector<4x8x8xbf16>
    %101 = vector.shape_cast %98 : vector<4x8x8xbf16> to vector<1x4x8x8xbf16>
    tpu.vector_store %arg9[%c0_23, %c0_24, %c0_25, %c0_26], %101 {strides = array<i32>} : memref<1x4x8x8xbf16, #tpu.memory_space<vmem>>, vector<1x4x8x8xbf16>,
    return
  }
  func.func @transform_0(%arg0: i32, %arg1: i32) -> (i32, i32, i32) {
    %c0_i32 = arith.constant 0 : i32
    %c0_i32_0 = arith.constant 0 : i32
    return %arg0, %arg1, %c0_i32 : i32, i32, i32
  }
  func.func @transform_1(%arg0: i32, %arg1: i32) -> (i32, i32, i32) {
    %c0_i32 = arith.constant 0 : i32
    %c0_i32_0 = arith.constant 0 : i32
    return %arg0, %arg1, %c0_i32 : i32, i32, i32
  }
  func.func @transform_2(%arg0: i32, %arg1: i32) -> (i32, i32) {
    %c0_i32 = arith.constant 0 : i32
    %c0_i32_0 = arith.constant 0 : i32
    %c0_i32_1 = arith.constant 0 : i32
    return %c0_i32, %c0_i32_0 : i32, i32
  }
  func.func @transform_3(%arg0: i32, %arg1: i32) -> (i32, i32) {
    %c0_i32 = arith.constant 0 : i32
    %c0_i32_0 = arith.constant 0 : i32
    %c0_i32_1 = arith.constant 0 : i32
    return %c0_i32, %c0_i32_0 : i32, i32
  }
  func.func @transform_4(%arg0: i32, %arg1: i32) -> (i32, i32) {
    %c0_i32 = arith.constant 0 : i32
    %c0_i32_0 = arith.constant 0 : i32
    %c0_i32_1 = arith.constant 0 : i32
    return %c0_i32, %c0_i32_0 : i32, i32
  }
  func.func @transform_5(%arg0: i32, %arg1: i32) -> (i32, i32, i32, i32) {
    %c0_i32 = arith.constant 0 : i32
    %c0_i32_0 = arith.constant 0 : i32
    %c0_i32_1 = arith.constant 0 : i32
    return %arg0, %c0_i32, %arg1, %c0_i32_0 : i32, i32, i32, i32
  }
  func.func @transform_6(%arg0: i32, %arg1: i32) -> (i32, i32, i32, i32) {
    %c0_i32 = arith.constant 0 : i32
    %c0_i32_0 = arith.constant 0 : i32
    %c0_i32_1 = arith.constant 0 : i32
    return %arg0, %c0_i32, %arg1, %c0_i32_0 : i32, i32, i32, i32
  }
  func.func @transform_7(%arg0: i32, %arg1: i32) -> (i32, i32, i32, i32) {
    %c0_i32 = arith.constant 0 : i32
    %c0_i32_0 = arith.constant 0 : i32
    %c0_i32_1 = arith.constant 0 : i32
    return %arg0, %c0_i32, %arg1, %c0_i32_0 : i32, i32, i32, i32
  }
}

</mosaic_0001>

<llo_original>
// kernel: tpu_custom_call.1
$region0: #{tpu_custom_call.1}
  #allocation0 [shape = 'u32[]', space=smem, size = 0x4, offset = 0x4, fixed_abs, tag = 'smem constant byte address 0x4 - core index']
  #allocation1 [shape = 'u32[72,128]{1,0:T(1,128)}', space=vmem, size = 0x9000, scoped, tag = 'internal scratch']
  %s0 = inlined_call_operand.hbm [shape: f32[2,8,32], index: 0, kind: input, shape index: {}]
  %s1 = inlined_call_operand.hbm [shape: bf16[2,8,64], index: 1, kind: input, shape index: {}]
  %s2 = inlined_call_operand.vmem [shape: f32[1,32], index: 2, kind: input, shape index: {}]
  %s3 = inlined_call_operand.hbm [shape: bf16[32,64], index: 3, kind: input, shape index: {}]
  %s4 = inlined_call_operand.hbm [shape: bf16[32,32], index: 4, kind: input, shape index: {}]
  %s5 = inlined_call_operand.hbm [shape: bf16[2,4,8,8], index: 5, kind: output, shape index: {0}]
  %s6 = inlined_call_operand.hbm [shape: bf16[2,4,8,8], index: 6, kind: output, shape index: {1}]
  %s7 = inlined_call_operand.hbm [shape: bf16[2,4,8,8], index: 7, kind: output, shape index: {2}]
  %8 = xla_tuple %s5, %s6, %s7
  %s9 = sld [smem:[#allocation0]]
  $region85: #{tpu_custom_call.1} parent=0
    _
  %s11 = ssub.s32 1, %s9
  %s12 = scalar_select 0, %s11, %s9
  $region1: #{tpu_custom_call.1} parent=0
    #allocation2 [shape = 'u8[8192]{0}', space=vmem, size = 0x2000, scoped, tag = 'input window, operand 0']
    #allocation3 [shape = 's32[2]{0}', space=sflag, size = 0x8, scoped, tag = 'scoped memory for tpu_custom_call.1']
    #allocation4 [shape = 's32[2]{0}', space=sflag, size = 0x8, scoped, tag = 'scoped memory for tpu_custom_call.1']
    #allocation5 [shape = 'u8[4096]{0}', space=vmem, size = 0x1000, scoped, tag = 'input window, operand 1']
    #allocation6 [shape = 's32[2]{0}', space=sflag, size = 0x8, scoped, tag = 'scoped memory for tpu_custom_call.1']
    #allocation7 [shape = 'u8[8192]{0}', space=vmem, size = 0x2000, scoped, tag = 'input window, operand 3, single buffered']
    #allocation8 [shape = 'u8[8192]{0}', space=vmem, size = 0x2000, scoped, tag = 'input window, operand 4, single buffered']
    #allocation9 [shape = 's32[1]{0}', space=sflag, size = 0x4, scoped, tag = 'scoped memory for tpu_custom_call.1']
    #allocation10 [shape = 'u8[16384]{0}', space=vmem, size = 0x4000, scoped, tag = 'output window, operand 0']
    #allocation11 [shape = 'u8[16384]{0}', space=vmem, size = 0x4000, scoped, tag = 'output window, operand 1']
    #allocation12 [shape = 's32[2]{0}', space=sflag, size = 0x8, scoped, tag = 'scoped memory for tpu_custom_call.1']
    #allocation13 [shape = 'u8[16384]{0}', space=vmem, size = 0x4000, scoped, tag = 'output window, operand 2']
    %13 = vsyncpa [#allocation3], 0
    %s14 = scalar_lea.sflag [#allocation3], 1
    %15 = vsyncpa %s14, 0
    %16 = vsyncpa [#allocation6], 0
    %s17 = scalar_lea.sflag [#allocation6], 1
    %18 = vsyncpa %s17, 0
    %19 = vsyncpa [#allocation9], 0
    %20 = vsyncpa [#allocation4], 0
    %s21 = scalar_lea.sflag [#allocation4], 1
    %22 = vsyncpa %s21, 0
    %23 = vsyncpa [#allocation12], 0
    %s24 = scalar_lea.sflag [#allocation12], 1
    %25 = vsyncpa %s24, 0
    loop: start=0, step=1, limit=4
    $region2: #{tpu_custom_call.1} parent=1 // loop_pre_header
      _
    $region3: #{tpu_custom_call.1} parent=1 // loop_header
      %s27 = sphi 0, %s31
      %p28 = scmp.ge.s32.totalorder %s27, 4
      %s34 = sphi 0, %s46
      %s35 = sphi 0, %s42
      %s36 = sphi 0, %s34
      %s37 = sphi 0, %s35
      %s38 = sphi 0, %s36
      %s39 = sphi 0, %s37
      %s51 = sphi 0, %s53
      %s54 = sphi 0, %s51
      %s55 = sphi 0, %s54
      %s71 = sphi 0, %s55
      %s79 = sphi 0, %s81
      %s82 = sphi 0, %s79
      %s83 = sphi 0, %s82
      %s99 = sphi 0, %s83
      %s103 = sphi 0, %s103
      %s105 = sphi 0, %s103
      %s106 = sphi 0, %s105
      %s120 = sphi 0, %s106
      %s124 = sphi 0, %s124
      %s126 = sphi 0, %s124
      %s127 = sphi 0, %s126
      %s141 = sphi 0, %s127
      %s145 = sphi 0, %s145
      %s147 = sphi 0, %s145
      %s148 = sphi 0, %s147
      %s162 = sphi 0, %s148
      %s170 = sphi 0, %s172
      %s173 = sphi 0, %s170
      %s174 = sphi 0, %s173
      %s190 = sphi 0, %s174
      %s198 = sphi 0, %s200
      %s201 = sphi 0, %s198
      %s202 = sphi 0, %s201
      %s218 = sphi 0, %s202
      %s226 = sphi 0, %s228
      %s229 = sphi 0, %s226
      %s230 = sphi 0, %s229
      %s246 = sphi 0, %s230
    $region4: #{tpu_custom_call.1} parent=1 // loop_header_branch
      %30 = sbr.rel (%p28) target = $region8
    $region5: #{tpu_custom_call.1} parent=1 // loop_body
      %s32 = ssub.s32 %s27, 1
      %s33 = ssub.s32 %s27, 2
      %s40 = sadd.s32 1, %s35
      %p41 = scmp.ge.s32.totalorder %s40, 1
      %s42 = scalar_select %p41, 0, %s40
      %s43 = sadd.s32 1, %s34
      %s44 = scalar_select %p41, %s43, %s34
      %p45 = scmp.ge.s32.totalorder %s44, 2
      %s46 = scalar_select %p45, 0, %s44
      %s47 = ssub.s32 %s34, %s46
      %s48 = ssub.s32 %s35, %s42
      %s49 = sor.u32 %s47, %s48
      %p50 = scmp.eq.s32.totalorder %s49, 0
      %s52 = sadd.s32 %s51, 1
      %s53 = scalar_select %p50, %s51, %s52
      %p56 = pneg %p50
      %p57 = scmp.eq.s32.totalorder %s27, 1
      %p58 = por %p56, %p57
      %p59 = scmp.ne.s32.totalorder %s51, %s54
      %p60 = scmp.eq.s32.totalorder %s27, 0
      %p61 = por %p59, %p60
      %p62 = scmp.ne.s32.totalorder %s51, %s54
      %p63 = scmp.eq.s32.totalorder %s32, 1
      %p64 = por %p62, %p63
      %p65 = scmp.ne.s32.totalorder %s54, %s55
      %p66 = scmp.eq.s32.totalorder %s32, 0
      %p67 = por %p65, %p66
      %p68 = scmp.ne.s32.totalorder %s54, %s55
      %p69 = scmp.eq.s32.totalorder %s33, 1
      %p70 = por %p68, %p69
      %p72 = scmp.ne.s32.totalorder %s55, %s71
      %p73 = scmp.eq.s32.totalorder %s33, 0
      %p74 = por %p72, %p73
      %s75 = ssub.s32 %s34, %s46
      %s76 = ssub.s32 %s35, %s42
      %s77 = sor.u32 %s75, %s76
      %p78 = scmp.eq.s32.totalorder %s77, 0
      %s80 = sadd.s32 %s79, 1
      %s81 = scalar_select %p78, %s79, %s80
      %p84 = pneg %p78
      %p85 = scmp.eq.s32.totalorder %s27, 1
      %p86 = por %p84, %p85
      %p87 = scmp.ne.s32.totalorder %s79, %s82
      %p88 = scmp.eq.s32.totalorder %s27, 0
      %p89 = por %p87, %p88
      %p90 = scmp.ne.s32.totalorder %s79, %s82
      %p91 = scmp.eq.s32.totalorder %s32, 1
      %p92 = por %p90, %p91
      %p93 = scmp.ne.s32.totalorder %s82, %s83
      %p94 = scmp.eq.s32.totalorder %s32, 0
      %p95 = por %p93, %p94
      %p96 = scmp.ne.s32.totalorder %s82, %s83
      %p97 = scmp.eq.s32.totalorder %s33, 1
      %p98 = por %p96, %p97
      %p100 = scmp.ne.s32.totalorder %s83, %s99
      %p101 = scmp.eq.s32.totalorder %s33, 0
      %p102 = por %p100, %p101
      %s104 = sadd.s32 %s103, 1
      %p107 = scmp.eq.s32.totalorder %s27, 1
      %p108 = scmp.ne.s32.totalorder %s103, %s105
      %p109 = scmp.eq.s32.totalorder %s27, 0
      %p110 = por %p108, %p109
      %p111 = scmp.ne.s32.totalorder %s103, %s105
      %p112 = scmp.eq.s32.totalorder %s32, 1
      %p113 = por %p111, %p112
      %p114 = scmp.ne.s32.totalorder %s105, %s106
      %p115 = scmp.eq.s32.totalorder %s32, 0
      %p116 = por %p114, %p115
      %p117 = scmp.ne.s32.totalorder %s105, %s106
      %p118 = scmp.eq.s32.totalorder %s33, 1
      %p119 = por %p117, %p118
      %p121 = scmp.ne.s32.totalorder %s106, %s120
      %p122 = scmp.eq.s32.totalorder %s33, 0
      %p123 = por %p121, %p122
      %s125 = sadd.s32 %s124, 1
      %p128 = scmp.eq.s32.totalorder %s27, 1
      %p129 = scmp.ne.s32.totalorder %s124, %s126
      %p130 = scmp.eq.s32.totalorder %s27, 0
      %p131 = por %p129, %p130
      %p132 = scmp.ne.s32.totalorder %s124, %s126
      %p133 = scmp.eq.s32.totalorder %s32, 1
      %p134 = por %p132, %p133
      %p135 = scmp.ne.s32.totalorder %s126, %s127
      %p136 = scmp.eq.s32.totalorder %s32, 0
      %p137 = por %p135, %p136
      %p138 = scmp.ne.s32.totalorder %s126, %s127
      %p139 = scmp.eq.s32.totalorder %s33, 1
      %p140 = por %p138, %p139
      %p142 = scmp.ne.s32.totalorder %s127, %s141
      %p143 = scmp.eq.s32.totalorder %s33, 0
      %p144 = por %p142, %p143
      %s146 = sadd.s32 %s145, 1
      %p149 = scmp.eq.s32.totalorder %s27, 1
      %p150 = scmp.ne.s32.totalorder %s145, %s147
      %p151 = scmp.eq.s32.totalorder %s27, 0
      %p152 = por %p150, %p151
      %p153 = scmp.ne.s32.totalorder %s145, %s147
      %p154 = scmp.eq.s32.totalorder %s32, 1
      %p155 = por %p153, %p154
      %p156 = scmp.ne.s32.totalorder %s147, %s148
      %p157 = scmp.eq.s32.totalorder %s32, 0
      %p158 = por %p156, %p157
      %p159 = scmp.ne.s32.totalorder %s147, %s148
      %p160 = scmp.eq.s32.totalorder %s33, 1
      %p161 = por %p159, %p160
      %p163 = scmp.ne.s32.totalorder %s148, %s162
      %p164 = scmp.eq.s32.totalorder %s33, 0
      %p165 = por %p163, %p164
      %s166 = ssub.s32 %s34, %s46
      %s167 = ssub.s32 %s35, %s42
      %s168 = sor.u32 %s166, %s167
      %p169 = scmp.eq.s32.totalorder %s168, 0
      %s171 = sadd.s32 %s170, 1
      %s172 = scalar_select %p169, %s170, %s171
      %p175 = pneg %p169
      %p176 = scmp.eq.s32.totalorder %s27, 1
      %p177 = por %p175, %p176
      %p178 = scmp.ne.s32.totalorder %s170, %s173
      %p179 = scmp.eq.s32.totalorder %s27, 0
      %p180 = por %p178, %p179
      %p181 = scmp.ne.s32.totalorder %s170, %s173
      %p182 = scmp.eq.s32.totalorder %s32, 1
      %p183 = por %p181, %p182
      %p184 = scmp.ne.s32.totalorder %s173, %s174
      %p185 = scmp.eq.s32.totalorder %s32, 0
      %p186 = por %p184, %p185
      %p187 = scmp.ne.s32.totalorder %s173, %s174
      %p188 = scmp.eq.s32.totalorder %s33, 1
      %p189 = por %p187, %p188
      %p191 = scmp.ne.s32.totalorder %s174, %s190
      %p192 = scmp.eq.s32.totalorder %s33, 0
      %p193 = por %p191, %p192
      %s194 = ssub.s32 %s34, %s46
      %s195 = ssub.s32 %s35, %s42
      %s196 = sor.u32 %s194, %s195
      %p197 = scmp.eq.s32.totalorder %s196, 0
      %s199 = sadd.s32 %s198, 1
      %s200 = scalar_select %p197, %s198, %s199
      %p203 = pneg %p197
      %p204 = scmp.eq.s32.totalorder %s27, 1
      %p205 = por %p203, %p204
      %p206 = scmp.ne.s32.totalorder %s198, %s201
      %p207 = scmp.eq.s32.totalorder %s27, 0
      %p208 = por %p206, %p207
      %p209 = scmp.ne.s32.totalorder %s198, %s201
      %p210 = scmp.eq.s32.totalorder %s32, 1
      %p211 = por %p209, %p210
      %p212 = scmp.ne.s32.totalorder %s201, %s202
      %p213 = scmp.eq.s32.totalorder %s32, 0
      %p214 = por %p212, %p213
      %p215 = scmp.ne.s32.totalorder %s201, %s202
      %p216 = scmp.eq.s32.totalorder %s33, 1
      %p217 = por %p215, %p216
      %p219 = scmp.ne.s32.totalorder %s202, %s218
      %p220 = scmp.eq.s32.totalorder %s33, 0
      %p221 = por %p219, %p220
      %s222 = ssub.s32 %s34, %s46
      %s223 = ssub.s32 %s35, %s42
      %s224 = sor.u32 %s222, %s223
      %p225 = scmp.eq.s32.totalorder %s224, 0
      %s227 = sadd.s32 %s226, 1
      %s228 = scalar_select %p225, %s226, %s227
      %p231 = pneg %p225
      %p232 = scmp.eq.s32.totalorder %s27, 1
      %p233 = por %p231, %p232
      %p234 = scmp.ne.s32.totalorder %s226, %s229
      %p235 = scmp.eq.s32.totalorder %s27, 0
      %p236 = por %p234, %p235
      %p237 = scmp.ne.s32.totalorder %s226, %s229
      %p238 = scmp.eq.s32.totalorder %s32, 1
      %p239 = por %p237, %p238
      %p240 = scmp.ne.s32.totalorder %s229, %s230
      %p241 = scmp.eq.s32.totalorder %s32, 0
      %p242 = por %p240, %p241
      %p243 = scmp.ne.s32.totalorder %s229, %s230
      %p244 = scmp.eq.s32.totalorder %s33, 1
      %p245 = por %p243, %p244
      %p247 = scmp.ne.s32.totalorder %s230, %s246
      %p248 = scmp.eq.s32.totalorder %s33, 0
      %p249 = por %p247, %p248
      %p250 = scmp.le.s32.totalorder 1, %s27
      %p251 = scmp.lt.s32.totalorder %s27, 3
      %p252 = pnand %p250, %p251
      %p253 = pneg %p252
      // Predicated region
      $region9: #{tpu_custom_call.1} parent=5 // pred_check
        _
      $region10: #{tpu_custom_call.1} parent=5 // pred_check_branch
        %255 = sbr.rel (%p252) target = $region12
      $region11: #{tpu_custom_call.1} parent=5 // pred_region
        %s256 = ssub.s32 %s27, 1
        // Predicated region
        $region13: #{tpu_custom_call.1} parent=11 // pred_check
          %p257 = pneg %p116
        $region14: #{tpu_custom_call.1} parent=11 // pred_check_branch
          %259 = sbr.rel (%p257) target = $region16
        $region15: #{tpu_custom_call.1} parent=11 // pred_region
          _
        $region16: #{tpu_custom_call.1} parent=11 // pred_fallthru
          _
        // Predicated region
        $region17: #{tpu_custom_call.1} parent=11 // pred_check
          %p260 = pneg %p137
        $region18: #{tpu_custom_call.1} parent=11 // pred_check_branch
          %262 = sbr.rel (%p260) target = $region20
        $region19: #{tpu_custom_call.1} parent=11 // pred_region
          %264 = vsyncadd [#allocation6], 0
          %s265 = sshll.u32 %s3, 4
          %s266 = int_to_ptr.hbm [resolvable:$true] %s265
          %s267 = sshll.u32 [#allocation7], 4
          %s268 = int_to_ptr.vmem [resolvable:$true] %s267
          %273 = dma.hbm_to_vmem [thread:$0]  %s266, 256, %s268, [#allocation6], 64, 64, 4
        $region20: #{tpu_custom_call.1} parent=11 // pred_fallthru
          _
        // Predicated region
        $region21: #{tpu_custom_call.1} parent=11 // pred_check
          %p274 = pneg %p158
        $region22: #{tpu_custom_call.1} parent=11 // pred_check_branch
          %276 = sbr.rel (%p274) target = $region24
        $region23: #{tpu_custom_call.1} parent=11 // pred_region
          %278 = vsyncadd [#allocation9], 0
          %s279 = sshll.u32 %s4, 4
          %s280 = int_to_ptr.hbm [resolvable:$true] %s279
          %s281 = sshll.u32 [#allocation8], 4
          %s282 = int_to_ptr.vmem [resolvable:$true] %s281
          %287 = dma.hbm_to_vmem [thread:$0]  %s280, 256, %s282, [#allocation9], 64, 64, 4
        $region24: #{tpu_custom_call.1} parent=11 // pred_fallthru
          _
      $region12: #{tpu_custom_call.1} parent=5 // pred_fallthru
        _
      %p288 = scmp.lt.s32.totalorder %s27, 2
      // Predicated region
      $region25: #{tpu_custom_call.1} parent=5 // pred_check
        %p289 = pneg %p288
      $region26: #{tpu_custom_call.1} parent=5 // pred_check_branch
        %291 = sbr.rel (%p289) target = $region28
      $region27: #{tpu_custom_call.1} parent=5 // pred_region
        // Predicated region
        $region29: #{tpu_custom_call.1} parent=27 // pred_check
          %p292 = pneg %p61
        $region30: #{tpu_custom_call.1} parent=27 // pred_check_branch
          %294 = sbr.rel (%p292) target = $region32
        $region31: #{tpu_custom_call.1} parent=27 // pred_region
          %s295 = sand.u32 %s51, 1
          %s296 = scalar_lea.sflag [#allocation3], %s295
          %s297 = sand.u32 %s51, 1
          %s298 = smul.addr %s297, 8
          %s299 = scalar_lea.vmem [#allocation2], %s298
          %301 = vsyncadd %s296, 0
          %s302 = sadd.s32 %s35, %s34
          %s303 = smul.addr %s302, 8
          %s304 = scalar_lea.hbm %s0, %s303
          %s306 = sshll.u32 %s304, 4
          %s307 = int_to_ptr.hbm [resolvable:$true] %s306
          %s308 = sshll.u32 %s299, 4
          %s309 = int_to_ptr.vmem [resolvable:$true] %s308
          %311 = dma.hbm_to_vmem [thread:$0]  %s307, 128, %s309, %s296
        $region32: #{tpu_custom_call.1} parent=27 // pred_fallthru
          _
        // Predicated region
        $region33: #{tpu_custom_call.1} parent=27 // pred_check
          %p312 = pneg %p89
        $region34: #{tpu_custom_call.1} parent=27 // pred_check_branch
          %314 = sbr.rel (%p312) target = $region36
        $region35: #{tpu_custom_call.1} parent=27 // pred_region
          %s315 = sand.u32 %s27, 1
          %s316 = scalar_lea.sflag [#allocation6], %s315
          %s317 = sand.u32 %s79, 1
          %s318 = smul.addr %s317, 4
          %s319 = scalar_lea.vmem [#allocation5], %s318
          %321 = vsyncadd %s316, 0
          %s322 = sadd.s32 %s35, %s34
          %s323 = smul.addr %s322, 4
          %s324 = scalar_lea.hbm %s1, %s323
          %s326 = sshll.u32 %s324, 4
          %s327 = int_to_ptr.hbm [resolvable:$true] %s326
          %s328 = sshll.u32 %s319, 4
          %s329 = int_to_ptr.vmem [resolvable:$true] %s328
          %331 = dma.hbm_to_vmem [thread:$0]  %s327, 64, %s329, %s316
        $region36: #{tpu_custom_call.1} parent=27 // pred_fallthru
          _
      $region28: #{tpu_custom_call.1} parent=5 // pred_fallthru
        _
      %p332 = scmp.le.s32.totalorder 1, %s27
      %p333 = scmp.lt.s32.totalorder %s27, 3
      %p334 = pnand %p332, %p333
      %p335 = pneg %p334
      // Predicated region
      $region37: #{tpu_custom_call.1} parent=5 // pred_check
        _
      $region38: #{tpu_custom_call.1} parent=5 // pred_check_branch
        %337 = sbr.rel (%p334) target = $region40
      $region39: #{tpu_custom_call.1} parent=5 // pred_region
        %s338 = ssub.s32 %s27, 1
        %s339 = sand.u32 %s54, 1
        %s340 = scalar_lea.sflag [#allocation3], %s339
        %s341 = sand.u32 %s54, 1
        %s342 = smul.addr %s341, 8
        %s343 = scalar_lea.vmem [#allocation2], %s342
        // Predicated region
        $region41: #{tpu_custom_call.1} parent=39 // pred_check
          %p344 = pneg %p67
        $region42: #{tpu_custom_call.1} parent=39 // pred_check_branch
          %346 = sbr.rel (%p344) target = $region44
        $region43: #{tpu_custom_call.1} parent=39 // pred_region
          %348 = dma.done %s340, 128
        $region44: #{tpu_custom_call.1} parent=39 // pred_fallthru
          _
        %s349 = sand.u32 %s32, 1
        %s350 = scalar_lea.sflag [#allocation6], %s349
        %s351 = sand.u32 %s82, 1
        %s352 = smul.addr %s351, 4
        %s353 = scalar_lea.vmem [#allocation5], %s352
        // Predicated region
        $region45: #{tpu_custom_call.1} parent=39 // pred_check
          %p354 = pneg %p95
        $region46: #{tpu_custom_call.1} parent=39 // pred_check_branch
          %356 = sbr.rel (%p354) target = $region48
        $region47: #{tpu_custom_call.1} parent=39 // pred_region
          %358 = dma.done %s350, 64
        $region48: #{tpu_custom_call.1} parent=39 // pred_fallthru
          _
        // Predicated region
        $region49: #{tpu_custom_call.1} parent=39 // pred_check
          %p359 = pneg %p137
        $region50: #{tpu_custom_call.1} parent=39 // pred_check_branch
          %361 = sbr.rel (%p359) target = $region52
        $region51: #{tpu_custom_call.1} parent=39 // pred_region
          %363 = dma.done [#allocation6], 256
        $region52: #{tpu_custom_call.1} parent=39 // pred_fallthru
          _
        // Predicated region
        $region53: #{tpu_custom_call.1} parent=39 // pred_check
          %p364 = pneg %p158
        $region54: #{tpu_custom_call.1} parent=39 // pred_check_branch
          %366 = sbr.rel (%p364) target = $region56
        $region55: #{tpu_custom_call.1} parent=39 // pred_region
          %368 = dma.done [#allocation9], 256
        $region56: #{tpu_custom_call.1} parent=39 // pred_fallthru
          _
        %s369 = sand.u32 %s54, 1
        %s370 = scalar_lea.sflag [#allocation3], %s369
        %s371 = sand.u32 %s54, 1
        %s372 = smul.addr %s371, 8
        %s373 = scalar_lea.vmem [#allocation2], %s372
        %p374 = pneg %p67
        %p375 = pneg %p64
        %s376 = sand.u32 %s32, 1
        %s377 = scalar_lea.sflag [#allocation6], %s376
        %s378 = sand.u32 %s82, 1
        %s379 = smul.addr %s378, 4
        %s380 = scalar_lea.vmem [#allocation5], %s379
        %p381 = pneg %p95
        %p382 = pneg %p92
        %p383 = pneg %p116
        %p384 = pneg %p113
        %p385 = pneg %p137
        %p386 = pneg %p134
        %p387 = pneg %p158
        %p388 = pneg %p155
        %p389 = pneg %p186
        %p390 = pneg %p183
        %s391 = sand.u32 %s173, 1
        %s392 = scalar_lea.sflag [#allocation4], %s391
        %s393 = sand.u32 %s173, 1
        %s394 = smul.addr %s393, 16
        %s395 = scalar_lea.vmem [#allocation10], %s394
        %p396 = pneg %p214
        %p397 = pneg %p211
        %s398 = sand.u32 %s32, 1
        %s399 = scalar_lea.sflag [#allocation12], %s398
        %s400 = sand.u32 %s201, 1
        %s401 = smul.addr %s400, 16
        %s402 = scalar_lea.vmem [#allocation11], %s401
        %p403 = pneg %p242
        %p404 = pneg %p239
        %s405 = sand.u32 %s32, 1
        %s406 = scalar_lea.sflag [#allocation12], %s405
        %s407 = sand.u32 %s229, 1
        %s408 = smul.addr %s407, 16
        %s409 = scalar_lea.vmem [#allocation13], %s408
        %v411 = vld [vmem:[%s343] sm:$0xff]
        %v412 = vmul.f32 %v411, %v411
        %vm413 = vcmask 261120
        %v414 = vsel %vm413, %v412, 0.0
        %415 = vadd.xlane.f32.xlu0 %v414
        %v416 = vpop.xlane.xlu0 %415
        %v417 = vrcp.pop 32.0
        %v418 = vmul.f32 32.0, %v417
        %v419 = vsub.f32 1.0, %v418
        %v420 = vmul.f32 %v417, %v419
        %v421 = vadd.f32 %v417, %v420
        %vm422 = vweird.f32 %v417
        %v423 = vsel %vm422, %v417, %v421
        %v424 = vmul.f32 %v416, %v423
        %v425 = vmax.f32 %v424, 1e-16
        %v426 = vrsqrt.pop %v425
        %v427 = vmul.f32 %v426, %v425
        %v428 = vmul.f32 %v427, %v426
        %v429 = vmul.f32 0.5, %v428
        %v430 = vsub.f32 1.5, %v429
        %v431 = vmul.f32 %v426, %v430
        %vm432 = vweird.f32 %v425
        %vm433 = vweird.f32 %v426
        %vm434 = vmor %vm432, %vm433
        %v435 = vsel %vm434, %v426, %v431
        %v436 = vmul.f32 %v411, %v435
        %v437 = vld [vmem:[%s2] sm:$0x1]
        %v439 = vperm.slane %v437, 0
        %v441 = vmul.f32 %v436, %v439
        %v442 = vpack.c.bf16 %v441, %v441
        %v443 = vld [vmem:[#allocation7] sm:$0xf]
        %v444 = vld [vmem:[#allocation7 + $0x4] sm:$0xf]
        %v445 = vld [vmem:[#allocation7 + $0x8] sm:$0xf]
        %v446 = vld [vmem:[#allocation7 + $0xc] sm:$0xf]
        %v451 = vunpack.c.l.b16 %v443
        %v452 = vunpack.c.l.b16 %v444
        %v453 = vunpack.c.l.b16 %v445
        %v454 = vunpack.c.l.b16 %v446
        %v455 = vpack.c.b16 %v452, %v451
        %v456 = vpack.c.b16 %v454, %v453
        %v460 = vsel %vm413, %v442, 0
        %462 = vmatpush.bf16.msra.mxu0 0
        %463 = vmatpush.bf16.msra.mxu0 0
        %464 = vmatpush.bf16.msra.mxu0 0
        %465 = vmatpush.bf16.msra.mxu0 0
        %466 = vmatpush.bf16.msra.mxu0 0
        %467 = vmatpush.bf16.msra.mxu0 0
        %468 = vmatpush.bf16.msra.mxu0 %v456
        %469 = vmatpush.bf16.msra.mxu0 %v455
        %470 = vmatmul.bf16.gmra.mxu0 %v460
        %v471 = vpop.f32.mrf.mxu0
        %v472 = vadd.f32 0.0, %v471
        %v473 = vpop.f32.mrf.mxu0
        %474 = vdwg.mxu0
        %v475 = vld [vmem:[#allocation8] sm:$0xf]
        %v476 = vld [vmem:[#allocation8 + $0x4] sm:$0xf]
        %v477 = vld [vmem:[#allocation8 + $0x8] sm:$0xf]
        %v478 = vld [vmem:[#allocation8 + $0xc] sm:$0xf]
        %v483 = vunpack.c.l.b16 %v475
        %v484 = vunpack.c.l.b16 %v476
        %v485 = vunpack.c.l.b16 %v477
        %v486 = vunpack.c.l.b16 %v478
        %v487 = vpack.c.b16 %v484, %v483
        %v488 = vpack.c.b16 %v486, %v485
        %491 = vmatpush.bf16.msra.mxu0 0
        %492 = vmatpush.bf16.msra.mxu0 0
        %493 = vmatpush.bf16.msra.mxu0 0
        %494 = vmatpush.bf16.msra.mxu0 0
        %495 = vmatpush.bf16.msra.mxu0 0
        %496 = vmatpush.bf16.msra.mxu0 0
        %497 = vmatpush.bf16.msra.mxu0 %v488
        %498 = vmatpush.bf16.msra.mxu0 %v487
        %499 = vmatmul.bf16.gmra.mxu0 %v460
        %v500 = vpop.f32.mrf.mxu0
        %v501 = vadd.f32 0.0, %v500
        %v502 = vpop.f32.mrf.mxu0
        %503 = vdwg.mxu0
        %505 = vrot.lane.b32.xlu0 %v472, 120
        %v506 = vpop.permute.xlu0 %505
        %508 = vrot.lane.b32.xlu0 %v472, 112
        %v509 = vpop.permute.xlu0 %508
        %511 = vrot.lane.b32.xlu0 %v472, 104
        %v512 = vpop.permute.xlu0 %511
        %514 = vrot.lane.b32.xlu0 %v472, 96
        %v515 = vpop.permute.xlu0 %514
        %517 = vrot.lane.b32.xlu0 %v472, 88
        %v518 = vpop.permute.xlu0 %517
        %520 = vrot.lane.b32.xlu0 %v472, 80
        %v521 = vpop.permute.xlu0 %520
        %523 = vrot.lane.b32.xlu0 %v472, 72
        %v524 = vpop.permute.xlu0 %523
        %v526 = vrot.slane %v509, 4
        %vm527 = vcmask 1047556
        %v528 = vsel %vm527, %v526, %v472
        %v529 = vrot.slane %v472, 4
        %v530 = vsel %vm527, %v509, %v529
        %v532 = vunpack.c.l.s4 1983009808
        %v533 = vunpack.c.0.s8 %v532
        %v534 = vperm.slane %v528, %v533
        %v536 = vunpack.c.l.s4 1983009808
        %v537 = vunpack.c.0.s8 %v536
        %v538 = vperm.slane %v530, %v537
        %v539 = vrot.slane %v512, 4
        %v540 = vsel %vm527, %v539, %v506
        %v541 = vrot.slane %v506, 4
        %v542 = vsel %vm527, %v512, %v541
        %v544 = vunpack.c.l.s4 1983009808
        %v545 = vunpack.c.0.s8 %v544
        %v546 = vperm.slane %v540, %v545
        %v548 = vunpack.c.l.s4 1983009808
        %v549 = vunpack.c.0.s8 %v548
        %v550 = vperm.slane %v542, %v549
        %v551 = vrot.slane %v521, 4
        %v552 = vsel %vm527, %v551, %v515
        %v553 = vrot.slane %v515, 4
        %v554 = vsel %vm527, %v521, %v553
        %v556 = vunpack.c.l.s4 1983009808
        %v557 = vunpack.c.0.s8 %v556
        %v558 = vperm.slane %v552, %v557
        %v560 = vunpack.c.l.s4 1983009808
        %v561 = vunpack.c.0.s8 %v560
        %v562 = vperm.slane %v554, %v561
        %v563 = vrot.slane %v524, 4
        %v564 = vsel %vm527, %v563, %v518
        %v565 = vrot.slane %v518, 4
        %v566 = vsel %vm527, %v524, %v565
        %v568 = vunpack.c.l.s4 1983009808
        %v569 = vunpack.c.0.s8 %v568
        %v570 = vperm.slane %v564, %v569
        %v572 = vunpack.c.l.s4 1983009808
        %v573 = vunpack.c.0.s8 %v572
        %v574 = vperm.slane %v566, %v573
        %v575 = vrot.slane %v546, 4
        %v576 = vsel %vm527, %v575, %v534
        %v577 = vrot.slane %v534, 4
        %v578 = vsel %vm527, %v546, %v577
        %v580 = vunpack.c.l.s4 1934713408
        %v581 = vunpack.c.0.s8 %v580
        %v582 = vperm.slane %v576, %v581
        %v584 = vunpack.c.l.s4 1934713408
        %v585 = vunpack.c.0.s8 %v584
        %v586 = vperm.slane %v578, %v585
        %v587 = vrot.slane %v550, 4
        %v588 = vsel %vm527, %v587, %v538
        %v589 = vrot.slane %v538, 4
        %v590 = vsel %vm527, %v550, %v589
        %v592 = vunpack.c.l.s4 1934713408
        %v593 = vunpack.c.0.s8 %v592
        %v594 = vperm.slane %v588, %v593
        %v596 = vunpack.c.l.s4 1934713408
        %v597 = vunpack.c.0.s8 %v596
        %v598 = vperm.slane %v590, %v597
        %v599 = vrot.slane %v570, 4
        %v600 = vsel %vm527, %v599, %v558
        %v601 = vrot.slane %v558, 4
        %v602 = vsel %vm527, %v570, %v601
        %v604 = vunpack.c.l.s4 1934713408
        %v605 = vunpack.c.0.s8 %v604
        %v606 = vperm.slane %v600, %v605
        %v608 = vunpack.c.l.s4 1934713408
        %v609 = vunpack.c.0.s8 %v608
        %v610 = vperm.slane %v602, %v609
        %v611 = vrot.slane %v574, 4
        %v612 = vsel %vm527, %v611, %v562
        %v613 = vrot.slane %v562, 4
        %v614 = vsel %vm527, %v574, %v613
        %v616 = vunpack.c.l.s4 1934713408
        %v617 = vunpack.c.0.s8 %v616
        %v618 = vperm.slane %v612, %v617
        %v620 = vunpack.c.l.s4 1934713408
        %v621 = vunpack.c.0.s8 %v620
        %v622 = vperm.slane %v614, %v621
        %v623 = vrot.slane %v606, 4
        %v624 = vsel %vm527, %v623, %v582
        %v625 = vrot.slane %v582, 4
        %v626 = vsel %vm527, %v606, %v625
        %v627 = vrot.slane %v610, 4
        %v628 = vsel %vm527, %v627, %v586
        %v629 = vrot.slane %v586, 4
        %v630 = vsel %vm527, %v610, %v629
        %v631 = vrot.slane %v618, 4
        %v632 = vsel %vm527, %v631, %v594
        %v633 = vrot.slane %v594, 4
        %v634 = vsel %vm527, %v618, %v633
        %v635 = vrot.slane %v622, 4
        %v636 = vsel %vm527, %v635, %v598
        %v637 = vrot.slane %v598, 4
        %v638 = vsel %vm527, %v622, %v637
        %v639 = vld [vmem:[%s353] sm:$0xf]
        %v640 = vunpack.c.l.bf16 %v639
        %v642 = vrot.slane %v640, 1
        %v643 = vrot.slane %v640, 2
        %v644 = vrot.slane %v640, 3
        %v645 = vrot.slane %v640, 4
        %v646 = vrot.slane %v640, 5
        %v647 = vrot.slane %v640, 6
        %v648 = vrot.slane %v640, 7
        %650 = vset.pattern.permute.xlu0 0
        %651 = vperm.xlu0 %650, %v624
        %v652 = vpop.permute.xlu0 %651
        %655 = vset.pattern.permute.xlu0 0
        %656 = vperm.xlu0 %655, %v626
        %v657 = vpop.permute.xlu0 %656
        %660 = vset.pattern.permute.xlu0 0
        %661 = vperm.xlu0 %660, %v628
        %v662 = vpop.permute.xlu0 %661
        %665 = vset.pattern.permute.xlu0 0
        %666 = vperm.xlu0 %665, %v630
        %v667 = vpop.permute.xlu0 %666
        %670 = vset.pattern.permute.xlu0 0
        %671 = vperm.xlu0 %670, %v632
        %v672 = vpop.permute.xlu0 %671
        %675 = vset.pattern.permute.xlu0 0
        %676 = vperm.xlu0 %675, %v634
        %v677 = vpop.permute.xlu0 %676
        %680 = vset.pattern.permute.xlu0 0
        %681 = vperm.xlu0 %680, %v636
        %v682 = vpop.permute.xlu0 %681
        %685 = vset.pattern.permute.xlu0 0
        %686 = vperm.xlu0 %685, %v638
        %v687 = vpop.permute.xlu0 %686
        %v689 = vperm.slane %v640, 0
        %v690 = vperm.slane %v642, 0
        %v691 = vperm.slane %v643, 0
        %v692 = vperm.slane %v644, 0
        %v693 = vperm.slane %v645, 0
        %v694 = vperm.slane %v646, 0
        %v695 = vperm.slane %v647, 0
        %v696 = vperm.slane %v648, 0
        %v705 = vmul.f32 %v652, %v689
        %v706 = vmul.f32 %v657, %v690
        %v707 = vmul.f32 %v662, %v691
        %v708 = vmul.f32 %v667, %v692
        %v709 = vmul.f32 %v672, %v693
        %v710 = vmul.f32 %v677, %v694
        %v711 = vmul.f32 %v682, %v695
        %v712 = vmul.f32 %v687, %v696
        %713 = vset.pattern.permute.xlu0 1
        %714 = vperm.xlu0 %713, %v624
        %v715 = vpop.permute.xlu0 %714
        %717 = vset.pattern.permute.xlu0 1
        %718 = vperm.xlu0 %717, %v626
        %v719 = vpop.permute.xlu0 %718
        %721 = vset.pattern.permute.xlu0 1
        %722 = vperm.xlu0 %721, %v628
        %v723 = vpop.permute.xlu0 %722
        %725 = vset.pattern.permute.xlu0 1
        %726 = vperm.xlu0 %725, %v630
        %v727 = vpop.permute.xlu0 %726
        %729 = vset.pattern.permute.xlu0 1
        %730 = vperm.xlu0 %729, %v632
        %v731 = vpop.permute.xlu0 %730
        %733 = vset.pattern.permute.xlu0 1
        %734 = vperm.xlu0 %733, %v634
        %v735 = vpop.permute.xlu0 %734
        %737 = vset.pattern.permute.xlu0 1
        %738 = vperm.xlu0 %737, %v636
        %v739 = vpop.permute.xlu0 %738
        %741 = vset.pattern.permute.xlu0 1
        %742 = vperm.xlu0 %741, %v638
        %v743 = vpop.permute.xlu0 %742
        %v745 = vmul.f32 %v715, %v689
        %v746 = vmul.f32 %v719, %v690
        %v747 = vmul.f32 %v723, %v691
        %v748 = vmul.f32 %v727, %v692
        %v749 = vmul.f32 %v731, %v693
        %v750 = vmul.f32 %v735, %v694
        %v751 = vmul.f32 %v739, %v695
        %v752 = vmul.f32 %v743, %v696
        %761 = vrot.lane.b32.xlu0 %v745, 120
        %v762 = vpop.permute.xlu0 %761
        %763 = vrot.lane.b32.xlu0 %v746, 120
        %v764 = vpop.permute.xlu0 %763
        %765 = vrot.lane.b32.xlu0 %v747, 120
        %v766 = vpop.permute.xlu0 %765
        %767 = vrot.lane.b32.xlu0 %v748, 120
        %v768 = vpop.permute.xlu0 %767
        %769 = vrot.lane.b32.xlu0 %v749, 120
        %v770 = vpop.permute.xlu0 %769
        %771 = vrot.lane.b32.xlu0 %v750, 120
        %v772 = vpop.permute.xlu0 %771
        %773 = vrot.lane.b32.xlu0 %v751, 120
        %v774 = vpop.permute.xlu0 %773
        %775 = vrot.lane.b32.xlu0 %v752, 120
        %v776 = vpop.permute.xlu0 %775
        %v785 = vadd.f32 %v705, %v762
        %v786 = vadd.f32 %v706, %v764
        %v787 = vadd.f32 %v707, %v766
        %v788 = vadd.f32 %v708, %v768
        %v789 = vadd.f32 %v709, %v770
        %v790 = vadd.f32 %v710, %v772
        %v791 = vadd.f32 %v711, %v774
        %v792 = vadd.f32 %v712, %v776
        %793 = vset.pattern.permute.xlu0 2
        %794 = vperm.xlu0 %793, %v624
        %v795 = vpop.permute.xlu0 %794
        %797 = vset.pattern.permute.xlu0 2
        %798 = vperm.xlu0 %797, %v626
        %v799 = vpop.permute.xlu0 %798
        %801 = vset.pattern.permute.xlu0 2
        %802 = vperm.xlu0 %801, %v628
        %v803 = vpop.permute.xlu0 %802
        %805 = vset.pattern.permute.xlu0 2
        %806 = vperm.xlu0 %805, %v630
        %v807 = vpop.permute.xlu0 %806
        %809 = vset.pattern.permute.xlu0 2
        %810 = vperm.xlu0 %809, %v632
        %v811 = vpop.permute.xlu0 %810
        %813 = vset.pattern.permute.xlu0 2
        %814 = vperm.xlu0 %813, %v634
        %v815 = vpop.permute.xlu0 %814
        %817 = vset.pattern.permute.xlu0 2
        %818 = vperm.xlu0 %817, %v636
        %v819 = vpop.permute.xlu0 %818
        %821 = vset.pattern.permute.xlu0 2
        %822 = vperm.xlu0 %821, %v638
        %v823 = vpop.permute.xlu0 %822
        %v825 = vmul.f32 %v795, %v689
        %v826 = vmul.f32 %v799, %v690
        %v827 = vmul.f32 %v803, %v691
        %v828 = vmul.f32 %v807, %v692
        %v829 = vmul.f32 %v811, %v693
        %v830 = vmul.f32 %v815, %v694
        %v831 = vmul.f32 %v819, %v695
        %v832 = vmul.f32 %v823, %v696
        %841 = vrot.lane.b32.xlu0 %v825, 112
        %v842 = vpop.permute.xlu0 %841
        %843 = vrot.lane.b32.xlu0 %v826, 112
        %v844 = vpop.permute.xlu0 %843
        %845 = vrot.lane.b32.xlu0 %v827, 112
        %v846 = vpop.permute.xlu0 %845
        %847 = vrot.lane.b32.xlu0 %v828, 112
        %v848 = vpop.permute.xlu0 %847
        %849 = vrot.lane.b32.xlu0 %v829, 112
        %v850 = vpop.permute.xlu0 %849
        %851 = vrot.lane.b32.xlu0 %v830, 112
        %v852 = vpop.permute.xlu0 %851
        %853 = vrot.lane.b32.xlu0 %v831, 112
        %v854 = vpop.permute.xlu0 %853
        %855 = vrot.lane.b32.xlu0 %v832, 112
        %v856 = vpop.permute.xlu0 %855
        %v865 = vadd.f32 %v785, %v842
        %v866 = vadd.f32 %v786, %v844
        %v867 = vadd.f32 %v787, %v846
        %v868 = vadd.f32 %v788, %v848
        %v869 = vadd.f32 %v789, %v850
        %v870 = vadd.f32 %v790, %v852
        %v871 = vadd.f32 %v791, %v854
        %v872 = vadd.f32 %v792, %v856
        %873 = vset.pattern.permute.xlu0 3
        %874 = vperm.xlu0 %873, %v624
        %v875 = vpop.permute.xlu0 %874
        %877 = vset.pattern.permute.xlu0 3
        %878 = vperm.xlu0 %877, %v626
        %v879 = vpop.permute.xlu0 %878
        %881 = vset.pattern.permute.xlu0 3
        %882 = vperm.xlu0 %881, %v628
        %v883 = vpop.permute.xlu0 %882
        %885 = vset.pattern.permute.xlu0 3
        %886 = vperm.xlu0 %885, %v630
        %v887 = vpop.permute.xlu0 %886
        %889 = vset.pattern.permute.xlu0 3
        %890 = vperm.xlu0 %889, %v632
        %v891 = vpop.permute.xlu0 %890
        %893 = vset.pattern.permute.xlu0 3
        %894 = vperm.xlu0 %893, %v634
        %v895 = vpop.permute.xlu0 %894
        %897 = vset.pattern.permute.xlu0 3
        %898 = vperm.xlu0 %897, %v636
        %v899 = vpop.permute.xlu0 %898
        %901 = vset.pattern.permute.xlu0 3
        %902 = vperm.xlu0 %901, %v638
        %v903 = vpop.permute.xlu0 %902
        %v905 = vmul.f32 %v875, %v689
        %v906 = vmul.f32 %v879, %v690
        %v907 = vmul.f32 %v883, %v691
        %v908 = vmul.f32 %v887, %v692
        %v909 = vmul.f32 %v891, %v693
        %v910 = vmul.f32 %v895, %v694
        %v911 = vmul.f32 %v899, %v695
        %v912 = vmul.f32 %v903, %v696
        %921 = vrot.lane.b32.xlu0 %v905, 104
        %v922 = vpop.permute.xlu0 %921
        %923 = vrot.lane.b32.xlu0 %v906, 104
        %v924 = vpop.permute.xlu0 %923
        %925 = vrot.lane.b32.xlu0 %v907, 104
        %v926 = vpop.permute.xlu0 %925
        %927 = vrot.lane.b32.xlu0 %v908, 104
        %v928 = vpop.permute.xlu0 %927
        %929 = vrot.lane.b32.xlu0 %v909, 104
        %v930 = vpop.permute.xlu0 %929
        %931 = vrot.lane.b32.xlu0 %v910, 104
        %v932 = vpop.permute.xlu0 %931
        %933 = vrot.lane.b32.xlu0 %v911, 104
        %v934 = vpop.permute.xlu0 %933
        %935 = vrot.lane.b32.xlu0 %v912, 104
        %v936 = vpop.permute.xlu0 %935
        %v945 = vadd.f32 %v865, %v922
        %v946 = vadd.f32 %v866, %v924
        %v947 = vadd.f32 %v867, %v926
        %v948 = vadd.f32 %v868, %v928
        %v949 = vadd.f32 %v869, %v930
        %v950 = vadd.f32 %v870, %v932
        %v951 = vadd.f32 %v871, %v934
        %v952 = vadd.f32 %v872, %v936
        %953 = vset.pattern.permute.xlu0 4
        %954 = vperm.xlu0 %953, %v624
        %v955 = vpop.permute.xlu0 %954
        %957 = vset.pattern.permute.xlu0 4
        %958 = vperm.xlu0 %957, %v626
        %v959 = vpop.permute.xlu0 %958
        %961 = vset.pattern.permute.xlu0 4
        %962 = vperm.xlu0 %961, %v628
        %v963 = vpop.permute.xlu0 %962
        %965 = vset.pattern.permute.xlu0 4
        %966 = vperm.xlu0 %965, %v630
        %v967 = vpop.permute.xlu0 %966
        %969 = vset.pattern.permute.xlu0 4
        %970 = vperm.xlu0 %969, %v632
        %v971 = vpop.permute.xlu0 %970
        %973 = vset.pattern.permute.xlu0 4
        %974 = vperm.xlu0 %973, %v634
        %v975 = vpop.permute.xlu0 %974
        %977 = vset.pattern.permute.xlu0 4
        %978 = vperm.xlu0 %977, %v636
        %v979 = vpop.permute.xlu0 %978
        %981 = vset.pattern.permute.xlu0 4
        %982 = vperm.xlu0 %981, %v638
        %v983 = vpop.permute.xlu0 %982
        %v985 = vmul.f32 %v955, %v689
        %v986 = vmul.f32 %v959, %v690
        %v987 = vmul.f32 %v963, %v691
        %v988 = vmul.f32 %v967, %v692
        %v989 = vmul.f32 %v971, %v693
        %v990 = vmul.f32 %v975, %v694
        %v991 = vmul.f32 %v979, %v695
        %v992 = vmul.f32 %v983, %v696
        %1001 = vrot.lane.b32.xlu0 %v985, 96
        %v1002 = vpop.permute.xlu0 %1001
        %1003 = vrot.lane.b32.xlu0 %v986, 96
        %v1004 = vpop.permute.xlu0 %1003
        %1005 = vrot.lane.b32.xlu0 %v987, 96
        %v1006 = vpop.permute.xlu0 %1005
        %1007 = vrot.lane.b32.xlu0 %v988, 96
        %v1008 = vpop.permute.xlu0 %1007
        %1009 = vrot.lane.b32.xlu0 %v989, 96
        %v1010 = vpop.permute.xlu0 %1009
        %1011 = vrot.lane.b32.xlu0 %v990, 96
        %v1012 = vpop.permute.xlu0 %1011
        %1013 = vrot.lane.b32.xlu0 %v991, 96
        %v1014 = vpop.permute.xlu0 %1013
        %1015 = vrot.lane.b32.xlu0 %v992, 96
        %v1016 = vpop.permute.xlu0 %1015
        %v1025 = vadd.f32 %v945, %v1002
        %v1026 = vadd.f32 %v946, %v1004
        %v1027 = vadd.f32 %v947, %v1006
        %v1028 = vadd.f32 %v948, %v1008
        %v1029 = vadd.f32 %v949, %v1010
        %v1030 = vadd.f32 %v950, %v1012
        %v1031 = vadd.f32 %v951, %v1014
        %v1032 = vadd.f32 %v952, %v1016
        %1033 = vset.pattern.permute.xlu0 5
        %1034 = vperm.xlu0 %1033, %v624
        %v1035 = vpop.permute.xlu0 %1034
        %1037 = vset.pattern.permute.xlu0 5
        %1038 = vperm.xlu0 %1037, %v626
        %v1039 = vpop.permute.xlu0 %1038
        %1041 = vset.pattern.permute.xlu0 5
        %1042 = vperm.xlu0 %1041, %v628
        %v1043 = vpop.permute.xlu0 %1042
        %1045 = vset.pattern.permute.xlu0 5
        %1046 = vperm.xlu0 %1045, %v630
        %v1047 = vpop.permute.xlu0 %1046
        %1049 = vset.pattern.permute.xlu0 5
        %1050 = vperm.xlu0 %1049, %v632
        %v1051 = vpop.permute.xlu0 %1050
        %1053 = vset.pattern.permute.xlu0 5
        %1054 = vperm.xlu0 %1053, %v634
        %v1055 = vpop.permute.xlu0 %1054
        %1057 = vset.pattern.permute.xlu0 5
        %1058 = vperm.xlu0 %1057, %v636
        %v1059 = vpop.permute.xlu0 %1058
        %1061 = vset.pattern.permute.xlu0 5
        %1062 = vperm.xlu0 %1061, %v638
        %v1063 = vpop.permute.xlu0 %1062
        %v1065 = vmul.f32 %v1035, %v689
        %v1066 = vmul.f32 %v1039, %v690
        %v1067 = vmul.f32 %v1043, %v691
        %v1068 = vmul.f32 %v1047, %v692
        %v1069 = vmul.f32 %v1051, %v693
        %v1070 = vmul.f32 %v1055, %v694
        %v1071 = vmul.f32 %v1059, %v695
        %v1072 = vmul.f32 %v1063, %v696
        %1081 = vrot.lane.b32.xlu0 %v1065, 88
        %v1082 = vpop.permute.xlu0 %1081
        %1083 = vrot.lane.b32.xlu0 %v1066, 88
        %v1084 = vpop.permute.xlu0 %1083
        %1085 = vrot.lane.b32.xlu0 %v1067, 88
        %v1086 = vpop.permute.xlu0 %1085
        %1087 = vrot.lane.b32.xlu0 %v1068, 88
        %v1088 = vpop.permute.xlu0 %1087
        %1089 = vrot.lane.b32.xlu0 %v1069, 88
        %v1090 = vpop.permute.xlu0 %1089
        %1091 = vrot.lane.b32.xlu0 %v1070, 88
        %v1092 = vpop.permute.xlu0 %1091
        %1093 = vrot.lane.b32.xlu0 %v1071, 88
        %v1094 = vpop.permute.xlu0 %1093
        %1095 = vrot.lane.b32.xlu0 %v1072, 88
        %v1096 = vpop.permute.xlu0 %1095
        %v1105 = vadd.f32 %v1025, %v1082
        %v1106 = vadd.f32 %v1026, %v1084
        %v1107 = vadd.f32 %v1027, %v1086
        %v1108 = vadd.f32 %v1028, %v1088
        %v1109 = vadd.f32 %v1029, %v1090
        %v1110 = vadd.f32 %v1030, %v1092
        %v1111 = vadd.f32 %v1031, %v1094
        %v1112 = vadd.f32 %v1032, %v1096
        %1113 = vset.pattern.permute.xlu0 6
        %1114 = vperm.xlu0 %1113, %v624
        %v1115 = vpop.permute.xlu0 %1114
        %1117 = vset.pattern.permute.xlu0 6
        %1118 = vperm.xlu0 %1117, %v626
        %v1119 = vpop.permute.xlu0 %1118
        %1121 = vset.pattern.permute.xlu0 6
        %1122 = vperm.xlu0 %1121, %v628
        %v1123 = vpop.permute.xlu0 %1122
        %1125 = vset.pattern.permute.xlu0 6
        %1126 = vperm.xlu0 %1125, %v630
        %v1127 = vpop.permute.xlu0 %1126
        %1129 = vset.pattern.permute.xlu0 6
        %1130 = vperm.xlu0 %1129, %v632
        %v1131 = vpop.permute.xlu0 %1130
        %1133 = vset.pattern.permute.xlu0 6
        %1134 = vperm.xlu0 %1133, %v634
        %v1135 = vpop.permute.xlu0 %1134
        %1137 = vset.pattern.permute.xlu0 6
        %1138 = vperm.xlu0 %1137, %v636
        %v1139 = vpop.permute.xlu0 %1138
        %1141 = vset.pattern.permute.xlu0 6
        %1142 = vperm.xlu0 %1141, %v638
        %v1143 = vpop.permute.xlu0 %1142
        %v1145 = vmul.f32 %v1115, %v689
        %v1146 = vmul.f32 %v1119, %v690
        %v1147 = vmul.f32 %v1123, %v691
        %v1148 = vmul.f32 %v1127, %v692
        %v1149 = vmul.f32 %v1131, %v693
        %v1150 = vmul.f32 %v1135, %v694
        %v1151 = vmul.f32 %v1139, %v695
        %v1152 = vmul.f32 %v1143, %v696
        %1161 = vrot.lane.b32.xlu0 %v1145, 80
        %v1162 = vpop.permute.xlu0 %1161
        %1163 = vrot.lane.b32.xlu0 %v1146, 80
        %v1164 = vpop.permute.xlu0 %1163
        %1165 = vrot.lane.b32.xlu0 %v1147, 80
        %v1166 = vpop.permute.xlu0 %1165
        %1167 = vrot.lane.b32.xlu0 %v1148, 80
        %v1168 = vpop.permute.xlu0 %1167
        %1169 = vrot.lane.b32.xlu0 %v1149, 80
        %v1170 = vpop.permute.xlu0 %1169
        %1171 = vrot.lane.b32.xlu0 %v1150, 80
        %v1172 = vpop.permute.xlu0 %1171
        %1173 = vrot.lane.b32.xlu0 %v1151, 80
        %v1174 = vpop.permute.xlu0 %1173
        %1175 = vrot.lane.b32.xlu0 %v1152, 80
        %v1176 = vpop.permute.xlu0 %1175
        %v1185 = vadd.f32 %v1105, %v1162
        %v1186 = vadd.f32 %v1106, %v1164
        %v1187 = vadd.f32 %v1107, %v1166
        %v1188 = vadd.f32 %v1108, %v1168
        %v1189 = vadd.f32 %v1109, %v1170
        %v1190 = vadd.f32 %v1110, %v1172
        %v1191 = vadd.f32 %v1111, %v1174
        %v1192 = vadd.f32 %v1112, %v1176
        %1193 = vset.pattern.permute.xlu0 7
        %1194 = vperm.xlu0 %1193, %v624
        %v1195 = vpop.permute.xlu0 %1194
        %1197 = vset.pattern.permute.xlu0 7
        %1198 = vperm.xlu0 %1197, %v626
        %v1199 = vpop.permute.xlu0 %1198
        %1201 = vset.pattern.permute.xlu0 7
        %1202 = vperm.xlu0 %1201, %v628
        %v1203 = vpop.permute.xlu0 %1202
        %1205 = vset.pattern.permute.xlu0 7
        %1206 = vperm.xlu0 %1205, %v630
        %v1207 = vpop.permute.xlu0 %1206
        %1209 = vset.pattern.permute.xlu0 7
        %1210 = vperm.xlu0 %1209, %v632
        %v1211 = vpop.permute.xlu0 %1210
        %1213 = vset.pattern.permute.xlu0 7
        %1214 = vperm.xlu0 %1213, %v634
        %v1215 = vpop.permute.xlu0 %1214
        %1217 = vset.pattern.permute.xlu0 7
        %1218 = vperm.xlu0 %1217, %v636
        %v1219 = vpop.permute.xlu0 %1218
        %1221 = vset.pattern.permute.xlu0 7
        %1222 = vperm.xlu0 %1221, %v638
        %v1223 = vpop.permute.xlu0 %1222
        %v1225 = vmul.f32 %v1195, %v689
        %v1226 = vmul.f32 %v1199, %v690
        %v1227 = vmul.f32 %v1203, %v691
        %v1228 = vmul.f32 %v1207, %v692
        %v1229 = vmul.f32 %v1211, %v693
        %v1230 = vmul.f32 %v1215, %v694
        %v1231 = vmul.f32 %v1219, %v695
        %v1232 = vmul.f32 %v1223, %v696
        %1241 = vrot.lane.b32.xlu0 %v1225, 72
        %v1242 = vpop.permute.xlu0 %1241
        %1243 = vrot.lane.b32.xlu0 %v1226, 72
        %v1244 = vpop.permute.xlu0 %1243
        %1245 = vrot.lane.b32.xlu0 %v1227, 72
        %v1246 = vpop.permute.xlu0 %1245
        %1247 = vrot.lane.b32.xlu0 %v1228, 72
        %v1248 = vpop.permute.xlu0 %1247
        %1249 = vrot.lane.b32.xlu0 %v1229, 72
        %v1250 = vpop.permute.xlu0 %1249
        %1251 = vrot.lane.b32.xlu0 %v1230, 72
        %v1252 = vpop.permute.xlu0 %1251
        %1253 = vrot.lane.b32.xlu0 %v1231, 72
        %v1254 = vpop.permute.xlu0 %1253
        %1255 = vrot.lane.b32.xlu0 %v1232, 72
        %v1256 = vpop.permute.xlu0 %1255
        %v1265 = vadd.f32 %v1185, %v1242
        %v1266 = vadd.f32 %v1186, %v1244
        %v1267 = vadd.f32 %v1187, %v1246
        %v1268 = vadd.f32 %v1188, %v1248
        %v1269 = vadd.f32 %v1189, %v1250
        %v1270 = vadd.f32 %v1190, %v1252
        %v1271 = vadd.f32 %v1191, %v1254
        %v1272 = vadd.f32 %v1192, %v1256
        %v1273 = vpack.c.bf16 %v1265, %v1265
        %v1274 = vpack.c.bf16 %v1266, %v1266
        %v1275 = vpack.c.bf16 %v1267, %v1267
        %v1276 = vpack.c.bf16 %v1268, %v1268
        %v1277 = vpack.c.bf16 %v1269, %v1269
        %v1278 = vpack.c.bf16 %v1270, %v1270
        %v1279 = vpack.c.bf16 %v1271, %v1271
        %v1280 = vpack.c.bf16 %v1272, %v1272
        %v1281 = vrot.slane %v1277, 4
        %vm1282 = vcmask 1047556
        %v1283 = vsel %vm1282, %v1281, %v1273
        %v1285 = vunpack.c.l.s4 1983009808
        %v1286 = vunpack.c.0.s8 %v1285
        %v1287 = vperm.slane %v1283, %v1286
        %v1288 = vrot.slane %v1279, 4
        %v1289 = vsel %vm1282, %v1288, %v1275
        %v1291 = vunpack.c.l.s4 1983009808
        %v1292 = vunpack.c.0.s8 %v1291
        %v1293 = vperm.slane %v1289, %v1292
        %v1294 = vrot.slane %v1293, 4
        %v1295 = vsel %vm1282, %v1294, %v1287
        %v1296 = vrot.slane %v1287, 4
        %v1297 = vsel %vm1282, %v1293, %v1296
        %v1299 = vunpack.c.l.s4 1934713408
        %v1300 = vunpack.c.0.s8 %v1299
        %v1301 = vperm.slane %v1295, %v1300
        %v1303 = vunpack.c.l.s4 1934713408
        %v1304 = vunpack.c.0.s8 %v1303
        %v1305 = vperm.slane %v1297, %v1304
        %v1306 = vrot.slane %v1301, 4
        %v1307 = vsel %vm1282, 0, %v1306
        %v1308 = vrot.slane %v1305, 4
        %v1309 = vsel %vm1282, 0, %v1308
        %v1310 = vrot.slane %v1278, 4
        %v1311 = vsel %vm1282, %v1310, %v1274
        %v1313 = vunpack.c.l.s4 1983009808
        %v1314 = vunpack.c.0.s8 %v1313
        %v1315 = vperm.slane %v1311, %v1314
        %v1316 = vrot.slane %v1280, 4
        %v1317 = vsel %vm1282, %v1316, %v1276
        %v1319 = vunpack.c.l.s4 1983009808
        %v1320 = vunpack.c.0.s8 %v1319
        %v1321 = vperm.slane %v1317, %v1320
        %v1322 = vrot.slane %v1321, 4
        %v1323 = vsel %vm1282, %v1322, %v1315
        %v1324 = vrot.slane %v1315, 4
        %v1325 = vsel %vm1282, %v1321, %v1324
        %v1327 = vunpack.c.l.s4 1934713408
        %v1328 = vunpack.c.0.s8 %v1327
        %v1329 = vperm.slane %v1323, %v1328
        %v1331 = vunpack.c.l.s4 1934713408
        %v1332 = vunpack.c.0.s8 %v1331
        %v1333 = vperm.slane %v1325, %v1332
        %v1334 = vrot.slane %v1329, 4
        %v1335 = vsel %vm1282, 0, %v1334
        %v1336 = vrot.slane %v1333, 4
        %v1337 = vsel %vm1282, 0, %v1336
        %v1340 = vpack.i.b16 %v1329, %v1301
        %v1342 = vshrl.u32 %v1301, 16
        %v1343 = vshrl.u32 %v1329, 16
        %v1344 = vpack.i.b16 %v1343, %v1342
        %v1348 = vpack.i.b16 %v1335, %v1307
        %v1350 = vshrl.u32 %v1307, 16
        %v1351 = vshrl.u32 %v1335, 16
        %v1352 = vpack.i.b16 %v1351, %v1350
        %v1356 = vpack.i.b16 %v1333, %v1305
        %v1358 = vshrl.u32 %v1305, 16
        %v1359 = vshrl.u32 %v1333, 16
        %v1360 = vpack.i.b16 %v1359, %v1358
        %v1364 = vpack.i.b16 %v1337, %v1309
        %v1366 = vshrl.u32 %v1309, 16
        %v1367 = vshrl.u32 %v1337, 16
        %v1368 = vpack.i.b16 %v1367, %v1366
        %vm1370 = vcmask 60416
        %1371 = vst.msk [vmem:[%s395] sm:$0xf] %vm1370, %v1340
        %1372 = vst.msk [vmem:[%s395 + $0x4] sm:$0xf] %vm1370, %v1344
        %1373 = vst.msk [vmem:[%s395 + $0x8] sm:$0xf] %vm1370, %v1348
        %1374 = vst.msk [vmem:[%s395 + $0xc] sm:$0xf] %vm1370, %v1352
        %1375 = vst.msk [vmem:[%s402] sm:$0xf] %vm1370, %v1356
        %1376 = vst.msk [vmem:[%s402 + $0x4] sm:$0xf] %vm1370, %v1360
        %1377 = vst.msk [vmem:[%s402 + $0x8] sm:$0xf] %vm1370, %v1364
        %1378 = vst.msk [vmem:[%s402 + $0xc] sm:$0xf] %vm1370, %v1368
        %1380 = vrot.lane.b32.xlu0 %v501, 120
        %v1381 = vpop.permute.xlu0 %1380
        %1383 = vrot.lane.b32.xlu0 %v501, 112
        %v1384 = vpop.permute.xlu0 %1383
        %1386 = vrot.lane.b32.xlu0 %v501, 104
        %v1387 = vpop.permute.xlu0 %1386
        %v1389 = vrot.slane %v1384, 4
        %v1390 = vsel %vm527, %v1389, %v501
        %v1391 = vrot.slane %v501, 4
        %v1392 = vsel %vm527, %v1384, %v1391
        %v1394 = vunpack.c.l.s4 1983009808
        %v1395 = vunpack.c.0.s8 %v1394
        %v1396 = vperm.slane %v1390, %v1395
        %v1398 = vunpack.c.l.s4 1983009808
        %v1399 = vunpack.c.0.s8 %v1398
        %v1400 = vperm.slane %v1392, %v1399
        %v1401 = vrot.slane %v1387, 4
        %v1402 = vsel %vm527, %v1401, %v1381
        %v1403 = vrot.slane %v1381, 4
        %v1404 = vsel %vm527, %v1387, %v1403
        %v1406 = vunpack.c.l.s4 1983009808
        %v1407 = vunpack.c.0.s8 %v1406
        %v1408 = vperm.slane %v1402, %v1407
        %v1410 = vunpack.c.l.s4 1983009808
        %v1411 = vunpack.c.0.s8 %v1410
        %v1412 = vperm.slane %v1404, %v1411
        %v1413 = vrot.slane %v1408, 4
        %v1414 = vsel %vm527, %v1413, %v1396
        %v1415 = vrot.slane %v1396, 4
        %v1416 = vsel %vm527, %v1408, %v1415
        %v1418 = vunpack.c.l.s4 1934713408
        %v1419 = vunpack.c.0.s8 %v1418
        %v1420 = vperm.slane %v1414, %v1419
        %v1422 = vunpack.c.l.s4 1934713408
        %v1423 = vunpack.c.0.s8 %v1422
        %v1424 = vperm.slane %v1416, %v1423
        %v1425 = vrot.slane %v1412, 4
        %v1426 = vsel %vm527, %v1425, %v1400
        %v1427 = vrot.slane %v1400, 4
        %v1428 = vsel %vm527, %v1412, %v1427
        %v1430 = vunpack.c.l.s4 1934713408
        %v1431 = vunpack.c.0.s8 %v1430
        %v1432 = vperm.slane %v1426, %v1431
        %v1434 = vunpack.c.l.s4 1934713408
        %v1435 = vunpack.c.0.s8 %v1434
        %v1436 = vperm.slane %v1428, %v1435
        %v1437 = vrot.slane %v1420, 4
        %v1438 = vsel %vm527, 0.0, %v1437
        %v1439 = vrot.slane %v1424, 4
        %v1440 = vsel %vm527, 0.0, %v1439
        %v1441 = vrot.slane %v1432, 4
        %v1442 = vsel %vm527, 0.0, %v1441
        %v1443 = vrot.slane %v1436, 4
        %v1444 = vsel %vm527, 0.0, %v1443
        %v1445 = vpack.c.bf16 %v1420, %v1420
        %v1446 = vpack.c.bf16 %v1438, %v1438
        %v1447 = vpack.c.bf16 %v1424, %v1424
        %v1448 = vpack.c.bf16 %v1440, %v1440
        %v1449 = vpack.c.bf16 %v1432, %v1432
        %v1450 = vpack.c.bf16 %v1442, %v1442
        %v1451 = vpack.c.bf16 %v1436, %v1436
        %v1452 = vpack.c.bf16 %v1444, %v1444
        %v1453 = vrot.slane %v1449, 4
        %v1454 = vsel %vm1282, %v1453, %v1445
        %v1456 = vunpack.c.l.s4 1983009808
        %v1457 = vunpack.c.0.s8 %v1456
        %v1458 = vperm.slane %v1454, %v1457
        %v1459 = vrot.slane %v1451, 4
        %v1460 = vsel %vm1282, %v1459, %v1447
        %v1462 = vunpack.c.l.s4 1983009808
        %v1463 = vunpack.c.0.s8 %v1462
        %v1464 = vperm.slane %v1460, %v1463
        %v1465 = vrot.slane %v1464, 4
        %v1466 = vsel %vm1282, %v1465, %v1458
        %v1468 = vunpack.c.l.s4 1934713408
        %v1469 = vunpack.c.0.s8 %v1468
        %v1470 = vperm.slane %v1466, %v1469
        %v1471 = vrot.slane %v1470, 4
        %v1472 = vsel %vm1282, 0, %v1471
        %v1473 = vrot.slane %v1450, 4
        %v1474 = vsel %vm1282, %v1473, %v1446
        %v1476 = vunpack.c.l.s4 1983009808
        %v1477 = vunpack.c.0.s8 %v1476
        %v1478 = vperm.slane %v1474, %v1477
        %v1479 = vrot.slane %v1452, 4
        %v1480 = vsel %vm1282, %v1479, %v1448
        %v1482 = vunpack.c.l.s4 1983009808
        %v1483 = vunpack.c.0.s8 %v1482
        %v1484 = vperm.slane %v1480, %v1483
        %v1485 = vrot.slane %v1484, 4
        %v1486 = vsel %vm1282, %v1485, %v1478
        %v1488 = vunpack.c.l.s4 1934713408
        %v1489 = vunpack.c.0.s8 %v1488
        %v1490 = vperm.slane %v1486, %v1489
        %v1491 = vrot.slane %v1490, 4
        %v1492 = vsel %vm1282, 0, %v1491
        %v1495 = vpack.i.b16 %v1490, %v1470
        %v1497 = vshrl.u32 %v1470, 16
        %v1498 = vshrl.u32 %v1490, 16
        %v1499 = vpack.i.b16 %v1498, %v1497
        %v1503 = vpack.i.b16 %v1492, %v1472
        %v1505 = vshrl.u32 %v1472, 16
        %v1506 = vshrl.u32 %v1492, 16
        %v1507 = vpack.i.b16 %v1506, %v1505
        %1509 = vst.msk [vmem:[%s409] sm:$0xf] %vm1370, %v1495
        %1510 = vst.msk [vmem:[%s409 + $0x4] sm:$0xf] %vm1370, %v1499
        %1511 = vst.msk [vmem:[%s409 + $0x8] sm:$0xf] %vm1370, %v1503
        %1512 = vst.msk [vmem:[%s409 + $0xc] sm:$0xf] %vm1370, %v1507
        %s1513 = sand.u32 %s173, 1
        %s1514 = scalar_lea.sflag [#allocation4], %s1513
        %s1515 = sand.u32 %s173, 1
        %s1516 = smul.addr %s1515, 16
        %s1517 = scalar_lea.vmem [#allocation10], %s1516
        %s1518 = sand.u32 %s32, 1
        %s1519 = scalar_lea.sflag [#allocation12], %s1518
        %s1520 = sand.u32 %s201, 1
        %s1521 = smul.addr %s1520, 16
        %s1522 = scalar_lea.vmem [#allocation11], %s1521
        %s1523 = sand.u32 %s32, 1
        %s1524 = scalar_lea.sflag [#allocation12], %s1523
        %s1525 = sand.u32 %s229, 1
        %s1526 = smul.addr %s1525, 16
        %s1527 = scalar_lea.vmem [#allocation13], %s1526
        // Predicated region
        $region57: #{tpu_custom_call.1} parent=39 // pred_check
          %p1528 = pneg %p183
        $region58: #{tpu_custom_call.1} parent=39 // pred_check_branch
          %1530 = sbr.rel (%p1528) target = $region60
        $region59: #{tpu_custom_call.1} parent=39 // pred_region
          %1532 = vsyncadd %s1514, 0
          %s1533 = smul.addr %s36, 4
          %s1534 = sadd.s32 %s37, %s1533
          %s1535 = smul.addr %s1534, 4
          %s1536 = scalar_lea.hbm %s5, %s1535
          %s1537 = sshll.u32 %s1517, 4
          %s1538 = int_to_ptr.vmem [resolvable:$true] %s1537
          %s1539 = sshll.u32 %s1536, 4
          %s1540 = int_to_ptr.hbm [resolvable:$true] %s1539
          %1545 = dma.vmem_to_hbm [thread:$0]  %s1538, 256, %s1540, %s1514, 64, 64, 4
        $region60: #{tpu_custom_call.1} parent=39 // pred_fallthru
          _
        // Predicated region
        $region61: #{tpu_custom_call.1} parent=39 // pred_check
          %p1546 = pneg %p211
        $region62: #{tpu_custom_call.1} parent=39 // pred_check_branch
          %1548 = sbr.rel (%p1546) target = $region64
        $region63: #{tpu_custom_call.1} parent=39 // pred_region
          %1550 = vsyncadd %s1519, 0
          %s1551 = smul.addr %s36, 4
          %s1552 = sadd.s32 %s37, %s1551
          %s1553 = smul.addr %s1552, 4
          %s1554 = scalar_lea.hbm %s6, %s1553
          %s1555 = sshll.u32 %s1522, 4
          %s1556 = int_to_ptr.vmem [resolvable:$true] %s1555
          %s1557 = sshll.u32 %s1554, 4
          %s1558 = int_to_ptr.hbm [resolvable:$true] %s1557
          %1563 = dma.vmem_to_hbm [thread:$0]  %s1556, 256, %s1558, %s1519, 64, 64, 4
        $region64: #{tpu_custom_call.1} parent=39 // pred_fallthru
          _
        // Predicated region
        $region65: #{tpu_custom_call.1} parent=39 // pred_check
          %p1564 = pneg %p239
        $region66: #{tpu_custom_call.1} parent=39 // pred_check_branch
          %1566 = sbr.rel (%p1564) target = $region68
        $region67: #{tpu_custom_call.1} parent=39 // pred_region
          %1568 = vsyncadd %s1524, 0
          %s1569 = smul.addr %s36, 4
          %s1570 = sadd.s32 %s37, %s1569
          %s1571 = smul.addr %s1570, 4
          %s1572 = scalar_lea.hbm %s7, %s1571
          %s1573 = sshll.u32 %s1527, 4
          %s1574 = int_to_ptr.vmem [resolvable:$true] %s1573
          %s1575 = sshll.u32 %s1572, 4
          %s1576 = int_to_ptr.hbm [resolvable:$true] %s1575
          %1581 = dma.vmem_to_hbm [thread:$0]  %s1574, 256, %s1576, %s1524, 64, 64, 4
        $region68: #{tpu_custom_call.1} parent=39 // pred_fallthru
          _
      $region40: #{tpu_custom_call.1} parent=5 // pred_fallthru
        _
      %p1582 = scmp.le.s32.totalorder 2, %s27
      // Predicated region
      $region69: #{tpu_custom_call.1} parent=5 // pred_check
        %p1583 = pneg %p1582
      $region70: #{tpu_custom_call.1} parent=5 // pred_check_branch
        %1585 = sbr.rel (%p1583) target = $region72
      $region71: #{tpu_custom_call.1} parent=5 // pred_region
        %s1586 = ssub.s32 %s27, 2
        // Predicated region
        $region73: #{tpu_custom_call.1} parent=71 // pred_check
          %p1587 = pneg %p189
        $region74: #{tpu_custom_call.1} parent=71 // pred_check_branch
          %1589 = sbr.rel (%p1587) target = $region76
        $region75: #{tpu_custom_call.1} parent=71 // pred_region
          %s1590 = sand.u32 %s174, 1
          %s1591 = scalar_lea.sflag [#allocation4], %s1590
          %s1592 = sand.u32 %s174, 1
          %s1593 = smul.addr %s1592, 16
          %s1594 = scalar_lea.vmem [#allocation10], %s1593
          %1596 = dma.done %s1591, 256
        $region76: #{tpu_custom_call.1} parent=71 // pred_fallthru
          _
        // Predicated region
        $region77: #{tpu_custom_call.1} parent=71 // pred_check
          %p1597 = pneg %p217
        $region78: #{tpu_custom_call.1} parent=71 // pred_check_branch
          %1599 = sbr.rel (%p1597) target = $region80
        $region79: #{tpu_custom_call.1} parent=71 // pred_region
          %s1600 = sand.u32 %s33, 1
          %s1601 = scalar_lea.sflag [#allocation12], %s1600
          %s1602 = sand.u32 %s202, 1
          %s1603 = smul.addr %s1602, 16
          %s1604 = scalar_lea.vmem [#allocation11], %s1603
          %1606 = dma.done %s1601, 256
        $region80: #{tpu_custom_call.1} parent=71 // pred_fallthru
          _
        // Predicated region
        $region81: #{tpu_custom_call.1} parent=71 // pred_check
          %p1607 = pneg %p245
        $region82: #{tpu_custom_call.1} parent=71 // pred_check_branch
          %1609 = sbr.rel (%p1607) target = $region84
        $region83: #{tpu_custom_call.1} parent=71 // pred_region
          %s1610 = sand.u32 %s33, 1
          %s1611 = scalar_lea.sflag [#allocation12], %s1610
          %s1612 = sand.u32 %s230, 1
          %s1613 = smul.addr %s1612, 16
          %s1614 = scalar_lea.vmem [#allocation13], %s1613
          %1616 = dma.done %s1611, 256
        $region84: #{tpu_custom_call.1} parent=71 // pred_fallthru
          _
      $region72: #{tpu_custom_call.1} parent=5 // pred_fallthru
        _
    $region6: #{tpu_custom_call.1} parent=1 // loop_footer
      %s31 = sadd.s32 1, %s27
    $region7: #{tpu_custom_call.1} parent=1 // loop_footer_branch
      %26 = sbr.rel target = $region3
    $region8: #{tpu_custom_call.1} parent=1 // loop_exit
      _
    %1617 = vsyncpa [#allocation3], 1
    %s1618 = scalar_lea.sflag [#allocation3], 1
    %1619 = vsyncpa %s1618, 1
    %1620 = vsyncpa [#allocation6], 1
    %s1621 = scalar_lea.sflag [#allocation6], 1
    %1622 = vsyncpa %s1621, 1
    %1623 = vsyncpa [#allocation9], 1
    %1624 = vsyncpa [#allocation4], 1
    %s1625 = scalar_lea.sflag [#allocation4], 1
    %1626 = vsyncpa %s1625, 1
    %1627 = vsyncpa [#allocation12], 1
    %s1628 = scalar_lea.sflag [#allocation12], 1
    %1629 = vsyncpa %s1628, 1

// kernel: tpu_custom_call.1
$region0: #{tpu_custom_call.1}
  #allocation0 [shape = 'u32[]', space=smem, size = 0x4, offset = 0x4, fixed_abs, tag = 'smem constant byte address 0x4 - core index']
  #allocation1 [shape = 'u32[72,128]{1,0:T(1,128)}', space=vmem, size = 0x9000, scoped, tag = 'internal scratch']
  %s0 = inlined_call_operand.hbm [shape: f32[2,8,32], index: 0, kind: input, shape index: {}]
  %s1 = inlined_call_operand.hbm [shape: bf16[2,8,64], index: 1, kind: input, shape index: {}]
  %s2 = inlined_call_operand.vmem [shape: f32[1,32], index: 2, kind: input, shape index: {}]
  %s3 = inlined_call_operand.hbm [shape: bf16[32,64], index: 3, kind: input, shape index: {}]
  %s4 = inlined_call_operand.hbm [shape: bf16[32,32], index: 4, kind: input, shape index: {}]
  %s5 = inlined_call_operand.hbm [shape: bf16[2,4,8,8], index: 5, kind: output, shape index: {0}]
  %s6 = inlined_call_operand.hbm [shape: bf16[2,4,8,8], index: 6, kind: output, shape index: {1}]
  %s7 = inlined_call_operand.hbm [shape: bf16[2,4,8,8], index: 7, kind: output, shape index: {2}]
  %8 = xla_tuple %s5, %s6, %s7
  %s9 = sld [smem:[#allocation0]]
  $region85: #{tpu_custom_call.1} parent=0
    _
  %s11 = ssub.s32 1, %s9
  %s12 = scalar_select 0, %s11, %s9
  $region1: #{tpu_custom_call.1} parent=0
    #allocation2 [shape = 'u8[8192]{0}', space=vmem, size = 0x2000, scoped, tag = 'input window, operand 0']
    #allocation3 [shape = 's32[2]{0}', space=sflag, size = 0x8, scoped, tag = 'scoped memory for tpu_custom_call.1']
    #allocation4 [shape = 's32[2]{0}', space=sflag, size = 0x8, scoped, tag = 'scoped memory for tpu_custom_call.1']
    #allocation5 [shape = 'u8[4096]{0}', space=vmem, size = 0x1000, scoped, tag = 'input window, operand 1']
    #allocation6 [shape = 's32[2]{0}', space=sflag, size = 0x8, scoped, tag = 'scoped memory for tpu_custom_call.1']
    #allocation7 [shape = 'u8[8192]{0}', space=vmem, size = 0x2000, scoped, tag = 'input window, operand 3, single buffered']
    #allocation8 [shape = 'u8[8192]{0}', space=vmem, size = 0x2000, scoped, tag = 'input window, operand 4, single buffered']
    #allocation9 [shape = 's32[1]{0}', space=sflag, size = 0x4, scoped, tag = 'scoped memory for tpu_custom_call.1']
    #allocation10 [shape = 'u8[16384]{0}', space=vmem, size = 0x4000, scoped, tag = 'output window, operand 0']
    #allocation11 [shape = 'u8[16384]{0}', space=vmem, size = 0x4000, scoped, tag = 'output window, operand 1']
    #allocation12 [shape = 's32[2]{0}', space=sflag, size = 0x8, scoped, tag = 'scoped memory for tpu_custom_call.1']
    #allocation13 [shape = 'u8[16384]{0}', space=vmem, size = 0x4000, scoped, tag = 'output window, operand 2']
    %13 = vsyncpa [#allocation3], 0
    %s14 = scalar_lea.sflag [#allocation3], 1
    %15 = vsyncpa %s14, 0
    %16 = vsyncpa [#allocation6], 0
    %s17 = scalar_lea.sflag [#allocation6], 1
    %18 = vsyncpa %s17, 0
    %19 = vsyncpa [#allocation9], 0
    %20 = vsyncpa [#allocation4], 0
    %s21 = scalar_lea.sflag [#allocation4], 1
    %22 = vsyncpa %s21, 0
    %23 = vsyncpa [#allocation12], 0
    %s24 = scalar_lea.sflag [#allocation12], 1
    %25 = vsyncpa %s24, 0
    loop: start=0, step=1, limit=4
    $region2: #{tpu_custom_call.1} parent=1 // loop_pre_header
      _
    $region3: #{tpu_custom_call.1} parent=1 // loop_header
      %s27 = sphi 0, %s31
      %p28 = scmp.ge.s32.totalorder %s27, 4
      %s34 = sphi 0, %s46
      %s35 = sphi 0, %s42
      %s36 = sphi 0, %s34
      %s37 = sphi 0, %s35
      %s38 = sphi 0, %s36
      %s39 = sphi 0, %s37
      %s51 = sphi 0, %s53
      %s54 = sphi 0, %s51
      %s55 = sphi 0, %s54
      %s71 = sphi 0, %s55
      %s79 = sphi 0, %s81
      %s82 = sphi 0, %s79
      %s83 = sphi 0, %s82
      %s99 = sphi 0, %s83
      %s103 = sphi 0, %s103
      %s105 = sphi 0, %s103
      %s106 = sphi 0, %s105
      %s120 = sphi 0, %s106
      %s124 = sphi 0, %s124
      %s126 = sphi 0, %s124
      %s127 = sphi 0, %s126
      %s141 = sphi 0, %s127
      %s145 = sphi 0, %s145
      %s147 = sphi 0, %s145
      %s148 = sphi 0, %s147
      %s162 = sphi 0, %s148
      %s170 = sphi 0, %s172
      %s173 = sphi 0, %s170
      %s174 = sphi 0, %s173
      %s190 = sphi 0, %s174
      %s198 = sphi 0, %s200
      %s201 = sphi 0, %s198
      %s202 = sphi 0, %s201
      %s218 = sphi 0, %s202
      %s226 = sphi 0, %s228
      %s229 = sphi 0, %s226
      %s230 = sphi 0, %s229
      %s246 = sphi 0, %s230
    $region4: #{tpu_custom_call.1} parent=1 // loop_header_branch
      %30 = sbr.rel (%p28) target = $region8
    $region5: #{tpu_custom_call.1} parent=1 // loop_body
      %s32 = ssub.s32 %s27, 1
      %s33 = ssub.s32 %s27, 2
      %s40 = sadd.s32 1, %s35
      %p41 = scmp.ge.s32.totalorder %s40, 1
      %s42 = scalar_select %p41, 0, %s40
      %s43 = sadd.s32 1, %s34
      %s44 = scalar_select %p41, %s43, %s34
      %p45 = scmp.ge.s32.totalorder %s44, 2
      %s46 = scalar_select %p45, 0, %s44
      %s47 = ssub.s32 %s34, %s46
      %s48 = ssub.s32 %s35, %s42
      %s49 = sor.u32 %s47, %s48
      %p50 = scmp.eq.s32.totalorder %s49, 0
      %s52 = sadd.s32 %s51, 1
      %s53 = scalar_select %p50, %s51, %s52
      %p56 = pneg %p50
      %p57 = scmp.eq.s32.totalorder %s27, 1
      %p58 = por %p56, %p57
      %p59 = scmp.ne.s32.totalorder %s51, %s54
      %p60 = scmp.eq.s32.totalorder %s27, 0
      %p61 = por %p59, %p60
      %p62 = scmp.ne.s32.totalorder %s51, %s54
      %p63 = scmp.eq.s32.totalorder %s32, 1
      %p64 = por %p62, %p63
      %p65 = scmp.ne.s32.totalorder %s54, %s55
      %p66 = scmp.eq.s32.totalorder %s32, 0
      %p67 = por %p65, %p66
      %p68 = scmp.ne.s32.totalorder %s54, %s55
      %p69 = scmp.eq.s32.totalorder %s33, 1
      %p70 = por %p68, %p69
      %p72 = scmp.ne.s32.totalorder %s55, %s71
      %p73 = scmp.eq.s32.totalorder %s33, 0
      %p74 = por %p72, %p73
      %s75 = ssub.s32 %s34, %s46
      %s76 = ssub.s32 %s35, %s42
      %s77 = sor.u32 %s75, %s76
      %p78 = scmp.eq.s32.totalorder %s77, 0
      %s80 = sadd.s32 %s79, 1
      %s81 = scalar_select %p78, %s79, %s80
      %p84 = pneg %p78
      %p85 = scmp.eq.s32.totalorder %s27, 1
      %p86 = por %p84, %p85
      %p87 = scmp.ne.s32.totalorder %s79, %s82
      %p88 = scmp.eq.s32.totalorder %s27, 0
      %p89 = por %p87, %p88
      %p90 = scmp.ne.s32.totalorder %s79, %s82
      %p91 = scmp.eq.s32.totalorder %s32, 1
      %p92 = por %p90, %p91
      %p93 = scmp.ne.s32.totalorder %s82, %s83
      %p94 = scmp.eq.s32.totalorder %s32, 0
      %p95 = por %p93, %p94
      %p96 = scmp.ne.s32.totalorder %s82, %s83
      %p97 = scmp.eq.s32.totalorder %s33, 1
      %p98 = por %p96, %p97
      %p100 = scmp.ne.s32.totalorder %s83, %s99
      %p101 = scmp.eq.s32.totalorder %s33, 0
      %p102 = por %p100, %p101
      %s104 = sadd.s32 %s103, 1
      %p107 = scmp.eq.s32.totalorder %s27, 1
      %p108 = scmp.ne.s32.totalorder %s103, %s105
      %p109 = scmp.eq.s32.totalorder %s27, 0
      %p110 = por %p108, %p109
      %p111 = scmp.ne.s32.totalorder %s103, %s105
      %p112 = scmp.eq.s32.totalorder %s32, 1
      %p113 = por %p111, %p112
      %p114 = scmp.ne.s32.totalorder %s105, %s106
      %p115 = scmp.eq.s32.totalorder %s32, 0
      %p116 = por %p114, %p115
      %p117 = scmp.ne.s32.totalorder %s105, %s106
      %p118 = scmp.eq.s32.totalorder %s33, 1
      %p119 = por %p117, %p118
      %p121 = scmp.ne.s32.totalorder %s106, %s120
      %p122 = scmp.eq.s32.totalorder %s33, 0
      %p123 = por %p121, %p122
      %s125 = sadd.s32 %s124, 1
      %p128 = scmp.eq.s32.totalorder %s27, 1
      %p129 = scmp.ne.s32.totalorder %s124, %s126
      %p130 = scmp.eq.s32.totalorder %s27, 0
      %p131 = por %p129, %p130
      %p132 = scmp.ne.s32.totalorder %s124, %s126
      %p133 = scmp.eq.s32.totalorder %s32, 1
      %p134 = por %p132, %p133
      %p135 = scmp.ne.s32.totalorder %s126, %s127
      %p136 = scmp.eq.s32.totalorder %s32, 0
      %p137 = por %p135, %p136
      %p138 = scmp.ne.s32.totalorder %s126, %s127
      %p139 = scmp.eq.s32.totalorder %s33, 1
      %p140 = por %p138, %p139
      %p142 = scmp.ne.s32.totalorder %s127, %s141
      %p143 = scmp.eq.s32.totalorder %s33, 0
      %p144 = por %p142, %p143
      %s146 = sadd.s32 %s145, 1
      %p149 = scmp.eq.s32.totalorder %s27, 1
      %p150 = scmp.ne.s32.totalorder %s145, %s147
      %p151 = scmp.eq.s32.totalorder %s27, 0
      %p152 = por %p150, %p151
      %p153 = scmp.ne.s32.totalorder %s145, %s147
      %p154 = scmp.eq.s32.totalorder %s32, 1
      %p155 = por %p153, %p154
      %p156 = scmp.ne.s32.totalorder %s147, %s148
      %p157 = scmp.eq.s32.totalorder %s32, 0
      %p158 = por %p156, %p157
      %p159 = scmp.ne.s32.totalorder %s147, %s148
      %p160 = scmp.eq.s32.totalorder %s33, 1
      %p161 = por %p159, %p160
      %p163 = scmp.ne.s32.totalorder %s148, %s162
      %p164 = scmp.eq.s32.totalorder %s33, 0
      %p165 = por %p163, %p164
      %s166 = ssub.s32 %s34, %s46
      %s167 = ssub.s32 %s35, %s42
      %s168 = sor.u32 %s166, %s167
      %p169 = scmp.eq.s32.totalorder %s168, 0
      %s171 = sadd.s32 %s170, 1
      %s172 = scalar_select %p169, %s170, %s171
      %p175 = pneg %p169
      %p176 = scmp.eq.s32.totalorder %s27, 1
      %p177 = por %p175, %p176
      %p178 = scmp.ne.s32.totalorder %s170, %s173
      %p179 = scmp.eq.s32.totalorder %s27, 0
      %p180 = por %p178, %p179
      %p181 = scmp.ne.s32.totalorder %s170, %s173
      %p182 = scmp.eq.s32.totalorder %s32, 1
      %p183 = por %p181, %p182
      %p184 = scmp.ne.s32.totalorder %s173, %s174
      %p185 = scmp.eq.s32.totalorder %s32, 0
      %p186 = por %p184, %p185
      %p187 = scmp.ne.s32.totalorder %s173, %s174
      %p188 = scmp.eq.s32.totalorder %s33, 1
      %p189 = por %p187, %p188
      %p191 = scmp.ne.s32.totalorder %s174, %s190
      %p192 = scmp.eq.s32.totalorder %s33, 0
      %p193 = por %p191, %p192
      %s194 = ssub.s32 %s34, %s46
      %s195 = ssub.s32 %s35, %s42
      %s196 = sor.u32 %s194, %s195
      %p197 = scmp.eq.s32.totalorder %s196, 0
      %s199 = sadd.s32 %s198, 1
      %s200 = scalar_select %p197, %s198, %s199
      %p203 = pneg %p197
      %p204 = scmp.eq.s32.totalorder %s27, 1
      %p205 = por %p203, %p204
      %p206 = scmp.ne.s32.totalorder %s198, %s201
      %p207 = scmp.eq.s32.totalorder %s27, 0
      %p208 = por %p206, %p207
      %p209 = scmp.ne.s32.totalorder %s198, %s201
      %p210 = scmp.eq.s32.totalorder %s32, 1
      %p211 = por %p209, %p210
      %p212 = scmp.ne.s32.totalorder %s201, %s202
      %p213 = scmp.eq.s32.totalorder %s32, 0
      %p214 = por %p212, %p213
      %p215 = scmp.ne.s32.totalorder %s201, %s202
      %p216 = scmp.eq.s32.totalorder %s33, 1
      %p217 = por %p215, %p216
      %p219 = scmp.ne.s32.totalorder %s202, %s218
      %p220 = scmp.eq.s32.totalorder %s33, 0
      %p221 = por %p219, %p220
      %s222 = ssub.s32 %s34, %s46
      %s223 = ssub.s32 %s35, %s42
      %s224 = sor.u32 %s222, %s223
      %p225 = scmp.eq.s32.totalorder %s224, 0
      %s227 = sadd.s32 %s226, 1
      %s228 = scalar_select %p225, %s226, %s227
      %p231 = pneg %p225
      %p232 = scmp.eq.s32.totalorder %s27, 1
      %p233 = por %p231, %p232
      %p234 = scmp.ne.s32.totalorder %s226, %s229
      %p235 = scmp.eq.s32.totalorder %s27, 0
      %p236 = por %p234, %p235
      %p237 = scmp.ne.s32.totalorder %s226, %s229
      %p238 = scmp.eq.s32.totalorder %s32, 1
      %p239 = por %p237, %p238
      %p240 = scmp.ne.s32.totalorder %s229, %s230
      %p241 = scmp.eq.s32.totalorder %s32, 0
      %p242 = por %p240, %p241
      %p243 = scmp.ne.s32.totalorder %s229, %s230
      %p244 = scmp.eq.s32.totalorder %s33, 1
      %p245 = por %p243, %p244
      %p247 = scmp.ne.s32.totalorder %s230, %s246
      %p248 = scmp.eq.s32.totalorder %s33, 0
      %p249 = por %p247, %p248
      %p250 = scmp.le.s32.totalorder 1, %s27
      %p251 = scmp.lt.s32.totalorder %s27, 3
      %p252 = pnand %p250, %p251
      %p253 = pneg %p252
      // Predicated region
      $region9: #{tpu_custom_call.1} parent=5 // pred_check
        _
      $region10: #{tpu_custom_call.1} parent=5 // pred_check_branch
        %255 = sbr.rel (%p252) target = $region12
      $region11: #{tpu_custom_call.1} parent=5 // pred_region
        %s256 = ssub.s32 %s27, 1
        // Predicated region
        $region13: #{tpu_custom_call.1} parent=11 // pred_check
          %p257 = pneg %p116
        $region14: #{tpu_custom_call.1} parent=11 // pred_check_branch
          %259 = sbr.rel (%p257) target = $region16
        $region15: #{tpu_custom_call.1} parent=11 // pred_region
          _
        $region16: #{tpu_custom_call.1} parent=11 // pred_fallthru
          _
        // Predicated region
        $region17: #{tpu_custom_call.1} parent=11 // pred_check
          %p260 = pneg %p137
        $region18: #{tpu_custom_call.1} parent=11 // pred_check_branch
          %262 = sbr.rel (%p260) target = $region20
        $region19: #{tpu_custom_call.1} parent=11 // pred_region
          %264 = vsyncadd [#allocation6], 0
          %s265 = sshll.u32 %s3, 4
          %s266 = int_to_ptr.hbm [resolvable:$true] %s265
          %s267 = sshll.u32 [#allocation7], 4
          %s268 = int_to_ptr.vmem [resolvable:$true] %s267
          %273 = dma.hbm_to_vmem [thread:$0]  %s266, 256, %s268, [#allocation6], 64, 64, 4
        $region20: #{tpu_custom_call.1} parent=11 // pred_fallthru
          _
        // Predicated region
        $region21: #{tpu_custom_call.1} parent=11 // pred_check
          %p274 = pneg %p158
        $region22: #{tpu_custom_call.1} parent=11 // pred_check_branch
          %276 = sbr.rel (%p274) target = $region24
        $region23: #{tpu_custom_call.1} parent=11 // pred_region
          %278 = vsyncadd [#allocation9], 0
          %s279 = sshll.u32 %s4, 4
          %s280 = int_to_ptr.hbm [resolvable:$true] %s279
          %s281 = sshll.u32 [#allocation8], 4
          %s282 = int_to_ptr.vmem [resolvable:$true] %s281
          %287 = dma.hbm_to_vmem [thread:$0]  %s280, 256, %s282, [#allocation9], 64, 64, 4
        $region24: #{tpu_custom_call.1} parent=11 // pred_fallthru
          _
      $region12: #{tpu_custom_call.1} parent=5 // pred_fallthru
        _
      %p288 = scmp.lt.s32.totalorder %s27, 2
      // Predicated region
      $region25: #{tpu_custom_call.1} parent=5 // pred_check
        %p289 = pneg %p288
      $region26: #{tpu_custom_call.1} parent=5 // pred_check_branch
        %291 = sbr.rel (%p289) target = $region28
      $region27: #{tpu_custom_call.1} parent=5 // pred_region
        // Predicated region
        $region29: #{tpu_custom_call.1} parent=27 // pred_check
          %p292 = pneg %p61
        $region30: #{tpu_custom_call.1} parent=27 // pred_check_branch
          %294 = sbr.rel (%p292) target = $region32
        $region31: #{tpu_custom_call.1} parent=27 // pred_region
          %s295 = sand.u32 %s51, 1
          %s296 = scalar_lea.sflag [#allocation3], %s295
          %s297 = sand.u32 %s51, 1
          %s298 = smul.addr %s297, 8
          %s299 = scalar_lea.vmem [#allocation2], %s298
          %301 = vsyncadd %s296, 0
          %s302 = sadd.s32 %s35, %s34
          %s303 = smul.addr %s302, 8
          %s304 = scalar_lea.hbm %s0, %s303
          %s306 = sshll.u32 %s304, 4
          %s307 = int_to_ptr.hbm [resolvable:$true] %s306
          %s308 = sshll.u32 %s299, 4
          %s309 = int_to_ptr.vmem [resolvable:$true] %s308
          %311 = dma.hbm_to_vmem [thread:$0]  %s307, 128, %s309, %s296
        $region32: #{tpu_custom_call.1} parent=27 // pred_fallthru
          _
        // Predicated region
        $region33: #{tpu_custom_call.1} parent=27 // pred_check
          %p312 = pneg %p89
        $region34: #{tpu_custom_call.1} parent=27 // pred_check_branch
          %314 = sbr.rel (%p312) target = $region36
        $region35: #{tpu_custom_call.1} parent=27 // pred_region
          %s315 = sand.u32 %s27, 1
          %s316 = scalar_lea.sflag [#allocation6], %s315
          %s317 = sand.u32 %s79, 1
          %s318 = smul.addr %s317, 4
          %s319 = scalar_lea.vmem [#allocation5], %s318
          %321 = vsyncadd %s316, 0
          %s322 = sadd.s32 %s35, %s34
          %s323 = smul.addr %s322, 4
          %s324 = scalar_lea.hbm %s1, %s323
          %s326 = sshll.u32 %s324, 4
          %s327 = int_to_ptr.hbm [resolvable:$true] %s326
          %s328 = sshll.u32 %s319, 4
          %s329 = int_to_ptr.vmem [resolvable:$true] %s328
          %331 = dma.hbm_to_vmem [thread:$0]  %s327, 64, %s329, %s316
        $region36: #{tpu_custom_call.1} parent=27 // pred_fallthru
          _
      $region28: #{tpu_custom_call.1} parent=5 // pred_fallthru
        _
      %p332 = scmp.le.s32.totalorder 1, %s27
      %p333 = scmp.lt.s32.totalorder %s27, 3
      %p334 = pnand %p332, %p333
      %p335 = pneg %p334
      // Predicated region
      $region37: #{tpu_custom_call.1} parent=5 // pred_check
        _
      $region38: #{tpu_custom_call.1} parent=5 // pred_check_branch
        %337 = sbr.rel (%p334) target = $region40
      $region39: #{tpu_custom_call.1} parent=5 // pred_region
        %s338 = ssub.s32 %s27, 1
        %s339 = sand.u32 %s54, 1
        %s340 = scalar_lea.sflag [#allocation3], %s339
        %s341 = sand.u32 %s54, 1
        %s342 = smul.addr %s341, 8
        %s343 = scalar_lea.vmem [#allocation2], %s342
        // Predicated region
        $region41: #{tpu_custom_call.1} parent=39 // pred_check
          %p344 = pneg %p67
        $region42: #{tpu_custom_call.1} parent=39 // pred_check_branch
          %346 = sbr.rel (%p344) target = $region44
        $region43: #{tpu_custom_call.1} parent=39 // pred_region
          %348 = dma.done %s340, 128
        $region44: #{tpu_custom_call.1} parent=39 // pred_fallthru
          _
        %s349 = sand.u32 %s32, 1
        %s350 = scalar_lea.sflag [#allocation6], %s349
        %s351 = sand.u32 %s82, 1
        %s352 = smul.addr %s351, 4
        %s353 = scalar_lea.vmem [#allocation5], %s352
        // Predicated region
        $region45: #{tpu_custom_call.1} parent=39 // pred_check
          %p354 = pneg %p95
        $region46: #{tpu_custom_call.1} parent=39 // pred_check_branch
          %356 = sbr.rel (%p354) target = $region48
        $region47: #{tpu_custom_call.1} parent=39 // pred_region
          %358 = dma.done %s350, 64
        $region48: #{tpu_custom_call.1} parent=39 // pred_fallthru
          _
        // Predicated region
        $region49: #{tpu_custom_call.1} parent=39 // pred_check
          %p359 = pneg %p137
        $region50: #{tpu_custom_call.1} parent=39 // pred_check_branch
          %361 = sbr.rel (%p359) target = $region52
        $region51: #{tpu_custom_call.1} parent=39 // pred_region
          %363 = dma.done [#allocation6], 256
        $region52: #{tpu_custom_call.1} parent=39 // pred_fallthru
          _
        // Predicated region
        $region53: #{tpu_custom_call.1} parent=39 // pred_check
          %p364 = pneg %p158
        $region54: #{tpu_custom_call.1} parent=39 // pred_check_branch
          %366 = sbr.rel (%p364) target = $region56
        $region55: #{tpu_custom_call.1} parent=39 // pred_region
          %368 = dma.done [#allocation9], 256
        $region56: #{tpu_custom_call.1} parent=39 // pred_fallthru
          _
        %s369 = sand.u32 %s54, 1
        %s370 = scalar_lea.sflag [#allocation3], %s369
        %s371 = sand.u32 %s54, 1
        %s372 = smul.addr %s371, 8
        %s373 = scalar_lea.vmem [#allocation2], %s372
        %p374 = pneg %p67
        %p375 = pneg %p64
        %s376 = sand.u32 %s32, 1
        %s377 = scalar_lea.sflag [#allocation6], %s376
        %s378 = sand.u32 %s82, 1
        %s379 = smul.addr %s378, 4
        %s380 = scalar_lea.vmem [#allocation5], %s379
        %p381 = pneg %p95
        %p382 = pneg %p92
        %p383 = pneg %p116
        %p384 = pneg %p113
        %p385 = pneg %p137
        %p386 = pneg %p134
        %p387 = pneg %p158
        %p388 = pneg %p155
        %p389 = pneg %p186
        %p390 = pneg %p183
        %s391 = sand.u32 %s173, 1
        %s392 = scalar_lea.sflag [#allocation4], %s391
        %s393 = sand.u32 %s173, 1
        %s394 = smul.addr %s393, 16
        %s395 = scalar_lea.vmem [#allocation10], %s394
        %p396 = pneg %p214
        %p397 = pneg %p211
        %s398 = sand.u32 %s32, 1
        %s399 = scalar_lea.sflag [#allocation12], %s398
        %s400 = sand.u32 %s201, 1
        %s401 = smul.addr %s400, 16
        %s402 = scalar_lea.vmem [#allocation11], %s401
        %p403 = pneg %p242
        %p404 = pneg %p239
        %s405 = sand.u32 %s32, 1
        %s406 = scalar_lea.sflag [#allocation12], %s405
        %s407 = sand.u32 %s229, 1
        %s408 = smul.addr %s407, 16
        %s409 = scalar_lea.vmem [#allocation13], %s408
        %v411 = vld [vmem:[%s343] sm:$0xff]
        %v412 = vmul.f32 %v411, %v411
        %vm413 = vcmask 261120
        %v414 = vsel %vm413, %v412, 0.0
        %415 = vadd.xlane.f32.xlu0 %v414
        %v416 = vpop.xlane.xlu0 %415
        %v417 = vrcp.pop 32.0
        %v418 = vmul.f32 32.0, %v417
        %v419 = vsub.f32 1.0, %v418
        %v420 = vmul.f32 %v417, %v419
        %v421 = vadd.f32 %v417, %v420
        %vm422 = vweird.f32 %v417
        %v423 = vsel %vm422, %v417, %v421
        %v424 = vmul.f32 %v416, %v423
        %v425 = vmax.f32 %v424, 1e-16
        %v426 = vrsqrt.pop %v425
        %v427 = vmul.f32 %v426, %v425
        %v428 = vmul.f32 %v427, %v426
        %v429 = vmul.f32 0.5, %v428
        %v430 = vsub.f32 1.5, %v429
        %v431 = vmul.f32 %v426, %v430
        %vm432 = vweird.f32 %v425
        %vm433 = vweird.f32 %v426
        %vm434 = vmor %vm432, %vm433
        %v435 = vsel %vm434, %v426, %v431
        %v436 = vmul.f32 %v411, %v435
        %v437 = vld [vmem:[%s2] sm:$0x1]
        %v439 = vperm.slane %v437, 0
        %v441 = vmul.f32 %v436, %v439
        %v442 = vpack.c.bf16 %v441, %v441
        %v443 = vld [vmem:[#allocation7] sm:$0xf]
        %v444 = vld [vmem:[#allocation7 + $0x4] sm:$0xf]
        %v445 = vld [vmem:[#allocation7 + $0x8] sm:$0xf]
        %v446 = vld [vmem:[#allocation7 + $0xc] sm:$0xf]
        %v451 = vunpack.c.l.b16 %v443
        %v452 = vunpack.c.l.b16 %v444
        %v453 = vunpack.c.l.b16 %v445
        %v454 = vunpack.c.l.b16 %v446
        %v455 = vpack.c.b16 %v452, %v451
        %v456 = vpack.c.b16 %v454, %v453
        %v460 = vsel %vm413, %v442, 0
        %462 = vmatpush.bf16.msra.mxu0 0
        %463 = vmatpush.bf16.msra.mxu0 0
        %464 = vmatpush.bf16.msra.mxu0 0
        %465 = vmatpush.bf16.msra.mxu0 0
        %466 = vmatpush.bf16.msra.mxu0 0
        %467 = vmatpush.bf16.msra.mxu0 0
        %468 = vmatpush.bf16.msra.mxu0 %v456
        %469 = vmatpush.bf16.msra.mxu0 %v455
        %470 = vmatmul.bf16.gmra.mxu0 %v460
        %v471 = vpop.f32.mrf.mxu0
        %v472 = vadd.f32 0.0, %v471
        %v473 = vpop.f32.mrf.mxu0
        %474 = vdwg.mxu0
        %v475 = vld [vmem:[#allocation8] sm:$0xf]
        %v476 = vld [vmem:[#allocation8 + $0x4] sm:$0xf]
        %v477 = vld [vmem:[#allocation8 + $0x8] sm:$0xf]
        %v478 = vld [vmem:[#allocation8 + $0xc] sm:$0xf]
        %v483 = vunpack.c.l.b16 %v475
        %v484 = vunpack.c.l.b16 %v476
        %v485 = vunpack.c.l.b16 %v477
        %v486 = vunpack.c.l.b16 %v478
        %v487 = vpack.c.b16 %v484, %v483
        %v488 = vpack.c.b16 %v486, %v485
        %491 = vmatpush.bf16.msra.mxu0 0
        %492 = vmatpush.bf16.msra.mxu0 0
        %493 = vmatpush.bf16.msra.mxu0 0
        %494 = vmatpush.bf16.msra.mxu0 0
        %495 = vmatpush.bf16.msra.mxu0 0
        %496 = vmatpush.bf16.msra.mxu0 0
        %497 = vmatpush.bf16.msra.mxu0 %v488
        %498 = vmatpush.bf16.msra.mxu0 %v487
        %499 = vmatmul.bf16.gmra.mxu0 %v460
        %v500 = vpop.f32.mrf.mxu0
        %v501 = vadd.f32 0.0, %v500
        %v502 = vpop.f32.mrf.mxu0
        %503 = vdwg.mxu0
        %505 = vrot.lane.b32.xlu0 %v472, 120
        %v506 = vpop.permute.xlu0 %505
        %508 = vrot.lane.b32.xlu0 %v472, 112
        %v509 = vpop.permute.xlu0 %508
        %511 = vrot.lane.b32.xlu0 %v472, 104
        %v512 = vpop.permute.xlu0 %511
        %514 = vrot.lane.b32.xlu0 %v472, 96
        %v515 = vpop.permute.xlu0 %514
        %517 = vrot.lane.b32.xlu0 %v472, 88
        %v518 = vpop.permute.xlu0 %517
        %520 = vrot.lane.b32.xlu0 %v472, 80
        %v521 = vpop.permute.xlu0 %520
        %523 = vrot.lane.b32.xlu0 %v472, 72
        %v524 = vpop.permute.xlu0 %523
        %v526 = vrot.slane %v509, 4
        %vm527 = vcmask 1047556
        %v528 = vsel %vm527, %v526, %v472
        %v529 = vrot.slane %v472, 4
        %v530 = vsel %vm527, %v509, %v529
        %v532 = vunpack.c.l.s4 1983009808
        %v533 = vunpack.c.0.s8 %v532
        %v534 = vperm.slane %v528, %v533
        %v536 = vunpack.c.l.s4 1983009808
        %v537 = vunpack.c.0.s8 %v536
        %v538 = vperm.slane %v530, %v537
        %v539 = vrot.slane %v512, 4
        %v540 = vsel %vm527, %v539, %v506
        %v541 = vrot.slane %v506, 4
        %v542 = vsel %vm527, %v512, %v541
        %v544 = vunpack.c.l.s4 1983009808
        %v545 = vunpack.c.0.s8 %v544
        %v546 = vperm.slane %v540, %v545
        %v548 = vunpack.c.l.s4 1983009808
        %v549 = vunpack.c.0.s8 %v548
        %v550 = vperm.slane %v542, %v549
        %v551 = vrot.slane %v521, 4
        %v552 = vsel %vm527, %v551, %v515
        %v553 = vrot.slane %v515, 4
        %v554 = vsel %vm527, %v521, %v553
        %v556 = vunpack.c.l.s4 1983009808
        %v557 = vunpack.c.0.s8 %v556
        %v558 = vperm.slane %v552, %v557
        %v560 = vunpack.c.l.s4 1983009808
        %v561 = vunpack.c.0.s8 %v560
        %v562 = vperm.slane %v554, %v561
        %v563 = vrot.slane %v524, 4
        %v564 = vsel %vm527, %v563, %v518
        %v565 = vrot.slane %v518, 4
        %v566 = vsel %vm527, %v524, %v565
        %v568 = vunpack.c.l.s4 1983009808
        %v569 = vunpack.c.0.s8 %v568
        %v570 = vperm.slane %v564, %v569
        %v572 = vunpack.c.l.s4 1983009808
        %v573 = vunpack.c.0.s8 %v572
        %v574 = vperm.slane %v566, %v573
        %v575 = vrot.slane %v546, 4
        %v576 = vsel %vm527, %v575, %v534
        %v577 = vrot.slane %v534, 4
        %v578 = vsel %vm527, %v546, %v577
        %v580 = vunpack.c.l.s4 1934713408
        %v581 = vunpack.c.0.s8 %v580
        %v582 = vperm.slane %v576, %v581
        %v584 = vunpack.c.l.s4 1934713408
        %v585 = vunpack.c.0.s8 %v584
        %v586 = vperm.slane %v578, %v585
        %v587 = vrot.slane %v550, 4
        %v588 = vsel %vm527, %v587, %v538
        %v589 = vrot.slane %v538, 4
        %v590 = vsel %vm527, %v550, %v589
        %v592 = vunpack.c.l.s4 1934713408
        %v593 = vunpack.c.0.s8 %v592
        %v594 = vperm.slane %v588, %v593
        %v596 = vunpack.c.l.s4 1934713408
        %v597 = vunpack.c.0.s8 %v596
        %v598 = vperm.slane %v590, %v597
        %v599 = vrot.slane %v570, 4
        %v600 = vsel %vm527, %v599, %v558
        %v601 = vrot.slane %v558, 4
        %v602 = vsel %vm527, %v570, %v601
        %v604 = vunpack.c.l.s4 1934713408
        %v605 = vunpack.c.0.s8 %v604
        %v606 = vperm.slane %v600, %v605
        %v608 = vunpack.c.l.s4 1934713408
        %v609 = vunpack.c.0.s8 %v608
        %v610 = vperm.slane %v602, %v609
        %v611 = vrot.slane %v574, 4
        %v612 = vsel %vm527, %v611, %v562
        %v613 = vrot.slane %v562, 4
        %v614 = vsel %vm527, %v574, %v613
        %v616 = vunpack.c.l.s4 1934713408
        %v617 = vunpack.c.0.s8 %v616
        %v618 = vperm.slane %v612, %v617
        %v620 = vunpack.c.l.s4 1934713408
        %v621 = vunpack.c.0.s8 %v620
        %v622 = vperm.slane %v614, %v621
        %v623 = vrot.slane %v606, 4
        %v624 = vsel %vm527, %v623, %v582
        %v625 = vrot.slane %v582, 4
        %v626 = vsel %vm527, %v606, %v625
        %v627 = vrot.slane %v610, 4
        %v628 = vsel %vm527, %v627, %v586
        %v629 = vrot.slane %v586, 4
        %v630 = vsel %vm527, %v610, %v629
        %v631 = vrot.slane %v618, 4
        %v632 = vsel %vm527, %v631, %v594
        %v633 = vrot.slane %v594, 4
        %v634 = vsel %vm527, %v618, %v633
        %v635 = vrot.slane %v622, 4
        %v636 = vsel %vm527, %v635, %v598
        %v637 = vrot.slane %v598, 4
        %v638 = vsel %vm527, %v622, %v637
        %v639 = vld [vmem:[%s353] sm:$0xf]
        %v640 = vunpack.c.l.bf16 %v639
        %v642 = vrot.slane %v640, 1
        %v643 = vrot.slane %v640, 2
        %v644 = vrot.slane %v640, 3
        %v645 = vrot.slane %v640, 4
        %v646 = vrot.slane %v640, 5
        %v647 = vrot.slane %v640, 6
        %v648 = vrot.slane %v640, 7
        %650 = vset.pattern.permute.xlu0 0
        %651 = vperm.xlu0 %650, %v624
        %v652 = vpop.permute.xlu0 %651
        %655 = vset.pattern.permute.xlu0 0
        %656 = vperm.xlu0 %655, %v626
        %v657 = vpop.permute.xlu0 %656
        %660 = vset.pattern.permute.xlu0 0
        %661 = vperm.xlu0 %660, %v628
        %v662 = vpop.permute.xlu0 %661
        %665 = vset.pattern.permute.xlu0 0
        %666 = vperm.xlu0 %665, %v630
        %v667 = vpop.permute.xlu0 %666
        %670 = vset.pattern.permute.xlu0 0
        %671 = vperm.xlu0 %670, %v632
        %v672 = vpop.permute.xlu0 %671
        %675 = vset.pattern.permute.xlu0 0
        %676 = vperm.xlu0 %675, %v634
        %v677 = vpop.permute.xlu0 %676
        %680 = vset.pattern.permute.xlu0 0
        %681 = vperm.xlu0 %680, %v636
        %v682 = vpop.permute.xlu0 %681
        %685 = vset.pattern.permute.xlu0 0
        %686 = vperm.xlu0 %685, %v638
        %v687 = vpop.permute.xlu0 %686
        %v689 = vperm.slane %v640, 0
        %v690 = vperm.slane %v642, 0
        %v691 = vperm.slane %v643, 0
        %v692 = vperm.slane %v644, 0
        %v693 = vperm.slane %v645, 0
        %v694 = vperm.slane %v646, 0
        %v695 = vperm.slane %v647, 0
        %v696 = vperm.slane %v648, 0
        %v705 = vmul.f32 %v652, %v689
        %v706 = vmul.f32 %v657, %v690
        %v707 = vmul.f32 %v662, %v691
        %v708 = vmul.f32 %v667, %v692
        %v709 = vmul.f32 %v672, %v693
        %v710 = vmul.f32 %v677, %v694
        %v711 = vmul.f32 %v682, %v695
        %v712 = vmul.f32 %v687, %v696
        %713 = vset.pattern.permute.xlu0 1
        %714 = vperm.xlu0 %713, %v624
        %v715 = vpop.permute.xlu0 %714
        %717 = vset.pattern.permute.xlu0 1
        %718 = vperm.xlu0 %717, %v626
        %v719 = vpop.permute.xlu0 %718
        %721 = vset.pattern.permute.xlu0 1
        %722 = vperm.xlu0 %721, %v628
        %v723 = vpop.permute.xlu0 %722
        %725 = vset.pattern.permute.xlu0 1
        %726 = vperm.xlu0 %725, %v630
        %v727 = vpop.permute.xlu0 %726
        %729 = vset.pattern.permute.xlu0 1
        %730 = vperm.xlu0 %729, %v632
        %v731 = vpop.permute.xlu0 %730
        %733 = vset.pattern.permute.xlu0 1
        %734 = vperm.xlu0 %733, %v634
        %v735 = vpop.permute.xlu0 %734
        %737 = vset.pattern.permute.xlu0 1
        %738 = vperm.xlu0 %737, %v636
        %v739 = vpop.permute.xlu0 %738
        %741 = vset.pattern.permute.xlu0 1
        %742 = vperm.xlu0 %741, %v638
        %v743 = vpop.permute.xlu0 %742
        %v745 = vmul.f32 %v715, %v689
        %v746 = vmul.f32 %v719, %v690
        %v747 = vmul.f32 %v723, %v691
        %v748 = vmul.f32 %v727, %v692
        %v749 = vmul.f32 %v731, %v693
        %v750 = vmul.f32 %v735, %v694
        %v751 = vmul.f32 %v739, %v695
        %v752 = vmul.f32 %v743, %v696
        %761 = vrot.lane.b32.xlu0 %v745, 120
        %v762 = vpop.permute.xlu0 %761
        %763 = vrot.lane.b32.xlu0 %v746, 120
        %v764 = vpop.permute.xlu0 %763
        %765 = vrot.lane.b32.xlu0 %v747, 120
        %v766 = vpop.permute.xlu0 %765
        %767 = vrot.lane.b32.xlu0 %v748, 120
        %v768 = vpop.permute.xlu0 %767
        %769 = vrot.lane.b32.xlu0 %v749, 120
        %v770 = vpop.permute.xlu0 %769
        %771 = vrot.lane.b32.xlu0 %v750, 120
        %v772 = vpop.permute.xlu0 %771
        %773 = vrot.lane.b32.xlu0 %v751, 120
        %v774 = vpop.permute.xlu0 %773
        %775 = vrot.lane.b32.xlu0 %v752, 120
        %v776 = vpop.permute.xlu0 %775
        %v785 = vadd.f32 %v705, %v762
        %v786 = vadd.f32 %v706, %v764
        %v787 = vadd.f32 %v707, %v766
        %v788 = vadd.f32 %v708, %v768
        %v789 = vadd.f32 %v709, %v770
        %v790 = vadd.f32 %v710, %v772
        %v791 = vadd.f32 %v711, %v774
        %v792 = vadd.f32 %v712, %v776
        %793 = vset.pattern.permute.xlu0 2
        %794 = vperm.xlu0 %793, %v624
        %v795 = vpop.permute.xlu0 %794
        %797 = vset.pattern.permute.xlu0 2
        %798 = vperm.xlu0 %797, %v626
        %v799 = vpop.permute.xlu0 %798
        %801 = vset.pattern.permute.xlu0 2
        %802 = vperm.xlu0 %801, %v628
        %v803 = vpop.permute.xlu0 %802
        %805 = vset.pattern.permute.xlu0 2
        %806 = vperm.xlu0 %805, %v630
        %v807 = vpop.permute.xlu0 %806
        %809 = vset.pattern.permute.xlu0 2
        %810 = vperm.xlu0 %809, %v632
        %v811 = vpop.permute.xlu0 %810
        %813 = vset.pattern.permute.xlu0 2
        %814 = vperm.xlu0 %813, %v634
        %v815 = vpop.permute.xlu0 %814
        %817 = vset.pattern.permute.xlu0 2
        %818 = vperm.xlu0 %817, %v636
        %v819 = vpop.permute.xlu0 %818
        %821 = vset.pattern.permute.xlu0 2
        %822 = vperm.xlu0 %821, %v638
        %v823 = vpop.permute.xlu0 %822
        %v825 = vmul.f32 %v795, %v689
        %v826 = vmul.f32 %v799, %v690
        %v827 = vmul.f32 %v803, %v691
        %v828 = vmul.f32 %v807, %v692
        %v829 = vmul.f32 %v811, %v693
        %v830 = vmul.f32 %v815, %v694
        %v831 = vmul.f32 %v819, %v695
        %v832 = vmul.f32 %v823, %v696
        %841 = vrot.lane.b32.xlu0 %v825, 112
        %v842 = vpop.permute.xlu0 %841
        %843 = vrot.lane.b32.xlu0 %v826, 112
        %v844 = vpop.permute.xlu0 %843
        %845 = vrot.lane.b32.xlu0 %v827, 112
        %v846 = vpop.permute.xlu0 %845
        %847 = vrot.lane.b32.xlu0 %v828, 112
        %v848 = vpop.permute.xlu0 %847
        %849 = vrot.lane.b32.xlu0 %v829, 112
        %v850 = vpop.permute.xlu0 %849
        %851 = vrot.lane.b32.xlu0 %v830, 112
        %v852 = vpop.permute.xlu0 %851
        %853 = vrot.lane.b32.xlu0 %v831, 112
        %v854 = vpop.permute.xlu0 %853
        %855 = vrot.lane.b32.xlu0 %v832, 112
        %v856 = vpop.permute.xlu0 %855
        %v865 = vadd.f32 %v785, %v842
        %v866 = vadd.f32 %v786, %v844
        %v867 = vadd.f32 %v787, %v846
        %v868 = vadd.f32 %v788, %v848
        %v869 = vadd.f32 %v789, %v850
        %v870 = vadd.f32 %v790, %v852
        %v871 = vadd.f32 %v791, %v854
        %v872 = vadd.f32 %v792, %v856
        %873 = vset.pattern.permute.xlu0 3
        %874 = vperm.xlu0 %873, %v624
        %v875 = vpop.permute.xlu0 %874
        %877 = vset.pattern.permute.xlu0 3
        %878 = vperm.xlu0 %877, %v626
        %v879 = vpop.permute.xlu0 %878
        %881 = vset.pattern.permute.xlu0 3
        %882 = vperm.xlu0 %881, %v628
        %v883 = vpop.permute.xlu0 %882
        %885 = vset.pattern.permute.xlu0 3
        %886 = vperm.xlu0 %885, %v630
        %v887 = vpop.permute.xlu0 %886
        %889 = vset.pattern.permute.xlu0 3
        %890 = vperm.xlu0 %889, %v632
        %v891 = vpop.permute.xlu0 %890
        %893 = vset.pattern.permute.xlu0 3
        %894 = vperm.xlu0 %893, %v634
        %v895 = vpop.permute.xlu0 %894
        %897 = vset.pattern.permute.xlu0 3
        %898 = vperm.xlu0 %897, %v636
        %v899 = vpop.permute.xlu0 %898
        %901 = vset.pattern.permute.xlu0 3
        %902 = vperm.xlu0 %901, %v638
        %v903 = vpop.permute.xlu0 %902
        %v905 = vmul.f32 %v875, %v689
        %v906 = vmul.f32 %v879, %v690
        %v907 = vmul.f32 %v883, %v691
        %v908 = vmul.f32 %v887, %v692
        %v909 = vmul.f32 %v891, %v693
        %v910 = vmul.f32 %v895, %v694
        %v911 = vmul.f32 %v899, %v695
        %v912 = vmul.f32 %v903, %v696
        %921 = vrot.lane.b32.xlu0 %v905, 104
        %v922 = vpop.permute.xlu0 %921
        %923 = vrot.lane.b32.xlu0 %v906, 104
        %v924 = vpop.permute.xlu0 %923
        %925 = vrot.lane.b32.xlu0 %v907, 104
        %v926 = vpop.permute.xlu0 %925
        %927 = vrot.lane.b32.xlu0 %v908, 104
        %v928 = vpop.permute.xlu0 %927
        %929 = vrot.lane.b32.xlu0 %v909, 104
        %v930 = vpop.permute.xlu0 %929
        %931 = vrot.lane.b32.xlu0 %v910, 104
        %v932 = vpop.permute.xlu0 %931
        %933 = vrot.lane.b32.xlu0 %v911, 104
        %v934 = vpop.permute.xlu0 %933
        %935 = vrot.lane.b32.xlu0 %v912, 104
        %v936 = vpop.permute.xlu0 %935
        %v945 = vadd.f32 %v865, %v922
        %v946 = vadd.f32 %v866, %v924
        %v947 = vadd.f32 %v867, %v926
        %v948 = vadd.f32 %v868, %v928
        %v949 = vadd.f32 %v869, %v930
        %v950 = vadd.f32 %v870, %v932
        %v951 = vadd.f32 %v871, %v934
        %v952 = vadd.f32 %v872, %v936
        %953 = vset.pattern.permute.xlu0 4
        %954 = vperm.xlu0 %953, %v624
        %v955 = vpop.permute.xlu0 %954
        %957 = vset.pattern.permute.xlu0 4
        %958 = vperm.xlu0 %957, %v626
        %v959 = vpop.permute.xlu0 %958
        %961 = vset.pattern.permute.xlu0 4
        %962 = vperm.xlu0 %961, %v628
        %v963 = vpop.permute.xlu0 %962
        %965 = vset.pattern.permute.xlu0 4
        %966 = vperm.xlu0 %965, %v630
        %v967 = vpop.permute.xlu0 %966
        %969 = vset.pattern.permute.xlu0 4
        %970 = vperm.xlu0 %969, %v632
        %v971 = vpop.permute.xlu0 %970
        %973 = vset.pattern.permute.xlu0 4
        %974 = vperm.xlu0 %973, %v634
        %v975 = vpop.permute.xlu0 %974
        %977 = vset.pattern.permute.xlu0 4
        %978 = vperm.xlu0 %977, %v636
        %v979 = vpop.permute.xlu0 %978
        %981 = vset.pattern.permute.xlu0 4
        %982 = vperm.xlu0 %981, %v638
        %v983 = vpop.permute.xlu0 %982
        %v985 = vmul.f32 %v955, %v689
        %v986 = vmul.f32 %v959, %v690
        %v987 = vmul.f32 %v963, %v691
        %v988 = vmul.f32 %v967, %v692
        %v989 = vmul.f32 %v971, %v693
        %v990 = vmul.f32 %v975, %v694
        %v991 = vmul.f32 %v979, %v695
        %v992 = vmul.f32 %v983, %v696
        %1001 = vrot.lane.b32.xlu0 %v985, 96
        %v1002 = vpop.permute.xlu0 %1001
        %1003 = vrot.lane.b32.xlu0 %v986, 96
        %v1004 = vpop.permute.xlu0 %1003
        %1005 = vrot.lane.b32.xlu0 %v987, 96
        %v1006 = vpop.permute.xlu0 %1005
        %1007 = vrot.lane.b32.xlu0 %v988, 96
        %v1008 = vpop.permute.xlu0 %1007
        %1009 = vrot.lane.b32.xlu0 %v989, 96
        %v1010 = vpop.permute.xlu0 %1009
        %1011 = vrot.lane.b32.xlu0 %v990, 96
        %v1012 = vpop.permute.xlu0 %1011
        %1013 = vrot.lane.b32.xlu0 %v991, 96
        %v1014 = vpop.permute.xlu0 %1013
        %1015 = vrot.lane.b32.xlu0 %v992, 96
        %v1016 = vpop.permute.xlu0 %1015
        %v1025 = vadd.f32 %v945, %v1002
        %v1026 = vadd.f32 %v946, %v1004
        %v1027 = vadd.f32 %v947, %v1006
        %v1028 = vadd.f32 %v948, %v1008
        %v1029 = vadd.f32 %v949, %v1010
        %v1030 = vadd.f32 %v950, %v1012
        %v1031 = vadd.f32 %v951, %v1014
        %v1032 = vadd.f32 %v952, %v1016
        %1033 = vset.pattern.permute.xlu0 5
        %1034 = vperm.xlu0 %1033, %v624
        %v1035 = vpop.permute.xlu0 %1034
        %1037 = vset.pattern.permute.xlu0 5
        %1038 = vperm.xlu0 %1037, %v626
        %v1039 = vpop.permute.xlu0 %1038
        %1041 = vset.pattern.permute.xlu0 5
        %1042 = vperm.xlu0 %1041, %v628
        %v1043 = vpop.permute.xlu0 %1042
        %1045 = vset.pattern.permute.xlu0 5
        %1046 = vperm.xlu0 %1045, %v630
        %v1047 = vpop.permute.xlu0 %1046
        %1049 = vset.pattern.permute.xlu0 5
        %1050 = vperm.xlu0 %1049, %v632
        %v1051 = vpop.permute.xlu0 %1050
        %1053 = vset.pattern.permute.xlu0 5
        %1054 = vperm.xlu0 %1053, %v634
        %v1055 = vpop.permute.xlu0 %1054
        %1057 = vset.pattern.permute.xlu0 5
        %1058 = vperm.xlu0 %1057, %v636
        %v1059 = vpop.permute.xlu0 %1058
        %1061 = vset.pattern.permute.xlu0 5
        %1062 = vperm.xlu0 %1061, %v638
        %v1063 = vpop.permute.xlu0 %1062
        %v1065 = vmul.f32 %v1035, %v689
        %v1066 = vmul.f32 %v1039, %v690
        %v1067 = vmul.f32 %v1043, %v691
        %v1068 = vmul.f32 %v1047, %v692
        %v1069 = vmul.f32 %v1051, %v693
        %v1070 = vmul.f32 %v1055, %v694
        %v1071 = vmul.f32 %v1059, %v695
        %v1072 = vmul.f32 %v1063, %v696
        %1081 = vrot.lane.b32.xlu0 %v1065, 88
        %v1082 = vpop.permute.xlu0 %1081
        %1083 = vrot.lane.b32.xlu0 %v1066, 88
        %v1084 = vpop.permute.xlu0 %1083
        %1085 = vrot.lane.b32.xlu0 %v1067, 88
        %v1086 = vpop.permute.xlu0 %1085
        %1087 = vrot.lane.b32.xlu0 %v1068, 88
        %v1088 = vpop.permute.xlu0 %1087
        %1089 = vrot.lane.b32.xlu0 %v1069, 88
        %v1090 = vpop.permute.xlu0 %1089
        %1091 = vrot.lane.b32.xlu0 %v1070, 88
        %v1092 = vpop.permute.xlu0 %1091
        %1093 = vrot.lane.b32.xlu0 %v1071, 88
        %v1094 = vpop.permute.xlu0 %1093
        %1095 = vrot.lane.b32.xlu0 %v1072, 88
        %v1096 = vpop.permute.xlu0 %1095
        %v1105 = vadd.f32 %v1025, %v1082
        %v1106 = vadd.f32 %v1026, %v1084
        %v1107 = vadd.f32 %v1027, %v1086
        %v1108 = vadd.f32 %v1028, %v1088
        %v1109 = vadd.f32 %v1029, %v1090
        %v1110 = vadd.f32 %v1030, %v1092
        %v1111 = vadd.f32 %v1031, %v1094
        %v1112 = vadd.f32 %v1032, %v1096
        %1113 = vset.pattern.permute.xlu0 6
        %1114 = vperm.xlu0 %1113, %v624
        %v1115 = vpop.permute.xlu0 %1114
        %1117 = vset.pattern.permute.xlu0 6
        %1118 = vperm.xlu0 %1117, %v626
        %v1119 = vpop.permute.xlu0 %1118
        %1121 = vset.pattern.permute.xlu0 6
        %1122 = vperm.xlu0 %1121, %v628
        %v1123 = vpop.permute.xlu0 %1122
        %1125 = vset.pattern.permute.xlu0 6
        %1126 = vperm.xlu0 %1125, %v630
        %v1127 = vpop.permute.xlu0 %1126
        %1129 = vset.pattern.permute.xlu0 6
        %1130 = vperm.xlu0 %1129, %v632
        %v1131 = vpop.permute.xlu0 %1130
        %1133 = vset.pattern.permute.xlu0 6
        %1134 = vperm.xlu0 %1133, %v634
        %v1135 = vpop.permute.xlu0 %1134
        %1137 = vset.pattern.permute.xlu0 6
        %1138 = vperm.xlu0 %1137, %v636
        %v1139 = vpop.permute.xlu0 %1138
        %1141 = vset.pattern.permute.xlu0 6
        %1142 = vperm.xlu0 %1141, %v638
        %v1143 = vpop.permute.xlu0 %1142
        %v1145 = vmul.f32 %v1115, %v689
        %v1146 = vmul.f32 %v1119, %v690
        %v1147 = vmul.f32 %v1123, %v691
        %v1148 = vmul.f32 %v1127, %v692
        %v1149 = vmul.f32 %v1131, %v693
        %v1150 = vmul.f32 %v1135, %v694
        %v1151 = vmul.f32 %v1139, %v695
        %v1152 = vmul.f32 %v1143, %v696
        %1161 = vrot.lane.b32.xlu0 %v1145, 80
        %v1162 = vpop.permute.xlu0 %1161
        %1163 = vrot.lane.b32.xlu0 %v1146, 80
        %v1164 = vpop.permute.xlu0 %1163
        %1165 = vrot.lane.b32.xlu0 %v1147, 80
        %v1166 = vpop.permute.xlu0 %1165
        %1167 = vrot.lane.b32.xlu0 %v1148, 80
        %v1168 = vpop.permute.xlu0 %1167
        %1169 = vrot.lane.b32.xlu0 %v1149, 80
        %v1170 = vpop.permute.xlu0 %1169
        %1171 = vrot.lane.b32.xlu0 %v1150, 80
        %v1172 = vpop.permute.xlu0 %1171
        %1173 = vrot.lane.b32.xlu0 %v1151, 80
        %v1174 = vpop.permute.xlu0 %1173
        %1175 = vrot.lane.b32.xlu0 %v1152, 80
        %v1176 = vpop.permute.xlu0 %1175
        %v1185 = vadd.f32 %v1105, %v1162
        %v1186 = vadd.f32 %v1106, %v1164
        %v1187 = vadd.f32 %v1107, %v1166
        %v1188 = vadd.f32 %v1108, %v1168
        %v1189 = vadd.f32 %v1109, %v1170
        %v1190 = vadd.f32 %v1110, %v1172
        %v1191 = vadd.f32 %v1111, %v1174
        %v1192 = vadd.f32 %v1112, %v1176
        %1193 = vset.pattern.permute.xlu0 7
        %1194 = vperm.xlu0 %1193, %v624
        %v1195 = vpop.permute.xlu0 %1194
        %1197 = vset.pattern.permute.xlu0 7
        %1198 = vperm.xlu0 %1197, %v626
        %v1199 = vpop.permute.xlu0 %1198
        %1201 = vset.pattern.permute.xlu0 7
        %1202 = vperm.xlu0 %1201, %v628
        %v1203 = vpop.permute.xlu0 %1202
        %1205 = vset.pattern.permute.xlu0 7
        %1206 = vperm.xlu0 %1205, %v630
        %v1207 = vpop.permute.xlu0 %1206
        %1209 = vset.pattern.permute.xlu0 7
        %1210 = vperm.xlu0 %1209, %v632
        %v1211 = vpop.permute.xlu0 %1210
        %1213 = vset.pattern.permute.xlu0 7
        %1214 = vperm.xlu0 %1213, %v634
        %v1215 = vpop.permute.xlu0 %1214
        %1217 = vset.pattern.permute.xlu0 7
        %1218 = vperm.xlu0 %1217, %v636
        %v1219 = vpop.permute.xlu0 %1218
        %1221 = vset.pattern.permute.xlu0 7
        %1222 = vperm.xlu0 %1221, %v638
        %v1223 = vpop.permute.xlu0 %1222
        %v1225 = vmul.f32 %v1195, %v689
        %v1226 = vmul.f32 %v1199, %v690
        %v1227 = vmul.f32 %v1203, %v691
        %v1228 = vmul.f32 %v1207, %v692
        %v1229 = vmul.f32 %v1211, %v693
        %v1230 = vmul.f32 %v1215, %v694
        %v1231 = vmul.f32 %v1219, %v695
        %v1232 = vmul.f32 %v1223, %v696
        %1241 = vrot.lane.b32.xlu0 %v1225, 72
        %v1242 = vpop.permute.xlu0 %1241
        %1243 = vrot.lane.b32.xlu0 %v1226, 72
        %v1244 = vpop.permute.xlu0 %1243
        %1245 = vrot.lane.b32.xlu0 %v1227, 72
        %v1246 = vpop.permute.xlu0 %1245
        %1247 = vrot.lane.b32.xlu0 %v1228, 72
        %v1248 = vpop.permute.xlu0 %1247
        %1249 = vrot.lane.b32.xlu0 %v1229, 72
        %v1250 = vpop.permute.xlu0 %1249
        %1251 = vrot.lane.b32.xlu0 %v1230, 72
        %v1252 = vpop.permute.xlu0 %1251
        %1253 = vrot.lane.b32.xlu0 %v1231, 72
        %v1254 = vpop.permute.xlu0 %1253
        %1255 = vrot.lane.b32.xlu0 %v1232, 72
        %v1256 = vpop.permute.xlu0 %1255
        %v1265 = vadd.f32 %v1185, %v1242
        %v1266 = vadd.f32 %v1186, %v1244
        %v1267 = vadd.f32 %v1187, %v1246
        %v1268 = vadd.f32 %v1188, %v1248
        %v1269 = vadd.f32 %v1189, %v1250
        %v1270 = vadd.f32 %v1190, %v1252
        %v1271 = vadd.f32 %v1191, %v1254
        %v1272 = vadd.f32 %v1192, %v1256
        %v1273 = vpack.c.bf16 %v1265, %v1265
        %v1274 = vpack.c.bf16 %v1266, %v1266
        %v1275 = vpack.c.bf16 %v1267, %v1267
        %v1276 = vpack.c.bf16 %v1268, %v1268
        %v1277 = vpack.c.bf16 %v1269, %v1269
        %v1278 = vpack.c.bf16 %v1270, %v1270
        %v1279 = vpack.c.bf16 %v1271, %v1271
        %v1280 = vpack.c.bf16 %v1272, %v1272
        %v1281 = vrot.slane %v1277, 4
        %vm1282 = vcmask 1047556
        %v1283 = vsel %vm1282, %v1281, %v1273
        %v1285 = vunpack.c.l.s4 1983009808
        %v1286 = vunpack.c.0.s8 %v1285
        %v1287 = vperm.slane %v1283, %v1286
        %v1288 = vrot.slane %v1279, 4
        %v1289 = vsel %vm1282, %v1288, %v1275
        %v1291 = vunpack.c.l.s4 1983009808
        %v1292 = vunpack.c.0.s8 %v1291
        %v1293 = vperm.slane %v1289, %v1292
        %v1294 = vrot.slane %v1293, 4
        %v1295 = vsel %vm1282, %v1294, %v1287
        %v1296 = vrot.slane %v1287, 4
        %v1297 = vsel %vm1282, %v1293, %v1296
        %v1299 = vunpack.c.l.s4 1934713408
        %v1300 = vunpack.c.0.s8 %v1299
        %v1301 = vperm.slane %v1295, %v1300
        %v1303 = vunpack.c.l.s4 1934713408
        %v1304 = vunpack.c.0.s8 %v1303
        %v1305 = vperm.slane %v1297, %v1304
        %v1306 = vrot.slane %v1301, 4
        %v1307 = vsel %vm1282, 0, %v1306
        %v1308 = vrot.slane %v1305, 4
        %v1309 = vsel %vm1282, 0, %v1308
        %v1310 = vrot.slane %v1278, 4
        %v1311 = vsel %vm1282, %v1310, %v1274
        %v1313 = vunpack.c.l.s4 1983009808
        %v1314 = vunpack.c.0.s8 %v1313
        %v1315 = vperm.slane %v1311, %v1314
        %v1316 = vrot.slane %v1280, 4
        %v1317 = vsel %vm1282, %v1316, %v1276
        %v1319 = vunpack.c.l.s4 1983009808
        %v1320 = vunpack.c.0.s8 %v1319
        %v1321 = vperm.slane %v1317, %v1320
        %v1322 = vrot.slane %v1321, 4
        %v1323 = vsel %vm1282, %v1322, %v1315
        %v1324 = vrot.slane %v1315, 4
        %v1325 = vsel %vm1282, %v1321, %v1324
        %v1327 = vunpack.c.l.s4 1934713408
        %v1328 = vunpack.c.0.s8 %v1327
        %v1329 = vperm.slane %v1323, %v1328
        %v1331 = vunpack.c.l.s4 1934713408
        %v1332 = vunpack.c.0.s8 %v1331
        %v1333 = vperm.slane %v1325, %v1332
        %v1334 = vrot.slane %v1329, 4
        %v1335 = vsel %vm1282, 0, %v1334
        %v1336 = vrot.slane %v1333, 4
        %v1337 = vsel %vm1282, 0, %v1336
        %v1340 = vpack.i.b16 %v1329, %v1301
        %v1342 = vshrl.u32 %v1301, 16
        %v1343 = vshrl.u32 %v1329, 16
        %v1344 = vpack.i.b16 %v1343, %v1342
        %v1348 = vpack.i.b16 %v1335, %v1307
        %v1350 = vshrl.u32 %v1307, 16
        %v1351 = vshrl.u32 %v1335, 16
        %v1352 = vpack.i.b16 %v1351, %v1350
        %v1356 = vpack.i.b16 %v1333, %v1305
        %v1358 = vshrl.u32 %v1305, 16
        %v1359 = vshrl.u32 %v1333, 16
        %v1360 = vpack.i.b16 %v1359, %v1358
        %v1364 = vpack.i.b16 %v1337, %v1309
        %v1366 = vshrl.u32 %v1309, 16
        %v1367 = vshrl.u32 %v1337, 16
        %v1368 = vpack.i.b16 %v1367, %v1366
        %vm1370 = vcmask 60416
        %1371 = vst.msk [vmem:[%s395] sm:$0xf] %vm1370, %v1340
        %1372 = vst.msk [vmem:[%s395 + $0x4] sm:$0xf] %vm1370, %v1344
        %1373 = vst.msk [vmem:[%s395 + $0x8] sm:$0xf] %vm1370, %v1348
        %1374 = vst.msk [vmem:[%s395 + $0xc] sm:$0xf] %vm1370, %v1352
        %1375 = vst.msk [vmem:[%s402] sm:$0xf] %vm1370, %v1356
        %1376 = vst.msk [vmem:[%s402 + $0x4] sm:$0xf] %vm1370, %v1360
        %1377 = vst.msk [vmem:[%s402 + $0x8] sm:$0xf] %vm1370, %v1364
        %1378 = vst.msk [vmem:[%s402 + $0xc] sm:$0xf] %vm1370, %v1368
        %1380 = vrot.lane.b32.xlu0 %v501, 120
        %v1381 = vpop.permute.xlu0 %1380
        %1383 = vrot.lane.b32.xlu0 %v501, 112
        %v1384 = vpop.permute.xlu0 %1383
        %1386 = vrot.lane.b32.xlu0 %v501, 104
        %v1387 = vpop.permute.xlu0 %1386
        %v1389 = vrot.slane %v1384, 4
        %v1390 = vsel %vm527, %v1389, %v501
        %v1391 = vrot.slane %v501, 4
        %v1392 = vsel %vm527, %v1384, %v1391
        %v1394 = vunpack.c.l.s4 1983009808
        %v1395 = vunpack.c.0.s8 %v1394
        %v1396 = vperm.slane %v1390, %v1395
        %v1398 = vunpack.c.l.s4 1983009808
        %v1399 = vunpack.c.0.s8 %v1398
        %v1400 = vperm.slane %v1392, %v1399
        %v1401 = vrot.slane %v1387, 4
        %v1402 = vsel %vm527, %v1401, %v1381
        %v1403 = vrot.slane %v1381, 4
        %v1404 = vsel %vm527, %v1387, %v1403
        %v1406 = vunpack.c.l.s4 1983009808
        %v1407 = vunpack.c.0.s8 %v1406
        %v1408 = vperm.slane %v1402, %v1407
        %v1410 = vunpack.c.l.s4 1983009808
        %v1411 = vunpack.c.0.s8 %v1410
        %v1412 = vperm.slane %v1404, %v1411
        %v1413 = vrot.slane %v1408, 4
        %v1414 = vsel %vm527, %v1413, %v1396
        %v1415 = vrot.slane %v1396, 4
        %v1416 = vsel %vm527, %v1408, %v1415
        %v1418 = vunpack.c.l.s4 1934713408
        %v1419 = vunpack.c.0.s8 %v1418
        %v1420 = vperm.slane %v1414, %v1419
        %v1422 = vunpack.c.l.s4 1934713408
        %v1423 = vunpack.c.0.s8 %v1422
        %v1424 = vperm.slane %v1416, %v1423
        %v1425 = vrot.slane %v1412, 4
        %v1426 = vsel %vm527, %v1425, %v1400
        %v1427 = vrot.slane %v1400, 4
        %v1428 = vsel %vm527, %v1412, %v1427
        %v1430 = vunpack.c.l.s4 1934713408
        %v1431 = vunpack.c.0.s8 %v1430
        %v1432 = vperm.slane %v1426, %v1431
        %v1434 = vunpack.c.l.s4 1934713408
        %v1435 = vunpack.c.0.s8 %v1434
        %v1436 = vperm.slane %v1428, %v1435
        %v1437 = vrot.slane %v1420, 4
        %v1438 = vsel %vm527, 0.0, %v1437
        %v1439 = vrot.slane %v1424, 4
        %v1440 = vsel %vm527, 0.0, %v1439
        %v1441 = vrot.slane %v1432, 4
        %v1442 = vsel %vm527, 0.0, %v1441
        %v1443 = vrot.slane %v1436, 4
        %v1444 = vsel %vm527, 0.0, %v1443
        %v1445 = vpack.c.bf16 %v1420, %v1420
        %v1446 = vpack.c.bf16 %v1438, %v1438
        %v1447 = vpack.c.bf16 %v1424, %v1424
        %v1448 = vpack.c.bf16 %v1440, %v1440
        %v1449 = vpack.c.bf16 %v1432, %v1432
        %v1450 = vpack.c.bf16 %v1442, %v1442
        %v1451 = vpack.c.bf16 %v1436, %v1436
        %v1452 = vpack.c.bf16 %v1444, %v1444
        %v1453 = vrot.slane %v1449, 4
        %v1454 = vsel %vm1282, %v1453, %v1445
        %v1456 = vunpack.c.l.s4 1983009808
        %v1457 = vunpack.c.0.s8 %v1456
        %v1458 = vperm.slane %v1454, %v1457
        %v1459 = vrot.slane %v1451, 4
        %v1460 = vsel %vm1282, %v1459, %v1447
        %v1462 = vunpack.c.l.s4 1983009808
        %v1463 = vunpack.c.0.s8 %v1462
        %v1464 = vperm.slane %v1460, %v1463
        %v1465 = vrot.slane %v1464, 4
        %v1466 = vsel %vm1282, %v1465, %v1458
        %v1468 = vunpack.c.l.s4 1934713408
        %v1469 = vunpack.c.0.s8 %v1468
        %v1470 = vperm.slane %v1466, %v1469
        %v1471 = vrot.slane %v1470, 4
        %v1472 = vsel %vm1282, 0, %v1471
        %v1473 = vrot.slane %v1450, 4
        %v1474 = vsel %vm1282, %v1473, %v1446
        %v1476 = vunpack.c.l.s4 1983009808
        %v1477 = vunpack.c.0.s8 %v1476
        %v1478 = vperm.slane %v1474, %v1477
        %v1479 = vrot.slane %v1452, 4
        %v1480 = vsel %vm1282, %v1479, %v1448
        %v1482 = vunpack.c.l.s4 1983009808
        %v1483 = vunpack.c.0.s8 %v1482
        %v1484 = vperm.slane %v1480, %v1483
        %v1485 = vrot.slane %v1484, 4
        %v1486 = vsel %vm1282, %v1485, %v1478
        %v1488 = vunpack.c.l.s4 1934713408
        %v1489 = vunpack.c.0.s8 %v1488
        %v1490 = vperm.slane %v1486, %v1489
        %v1491 = vrot.slane %v1490, 4
        %v1492 = vsel %vm1282, 0, %v1491
        %v1495 = vpack.i.b16 %v1490, %v1470
        %v1497 = vshrl.u32 %v1470, 16
        %v1498 = vshrl.u32 %v1490, 16
        %v1499 = vpack.i.b16 %v1498, %v1497
        %v1503 = vpack.i.b16 %v1492, %v1472
        %v1505 = vshrl.u32 %v1472, 16
        %v1506 = vshrl.u32 %v1492, 16
        %v1507 = vpack.i.b16 %v1506, %v1505
        %1509 = vst.msk [vmem:[%s409] sm:$0xf] %vm1370, %v1495
        %1510 = vst.msk [vmem:[%s409 + $0x4] sm:$0xf] %vm1370, %v1499
        %1511 = vst.msk [vmem:[%s409 + $0x8] sm:$0xf] %vm1370, %v1503
        %1512 = vst.msk [vmem:[%s409 + $0xc] sm:$0xf] %vm1370, %v1507
        %s1513 = sand.u32 %s173, 1
        %s1514 = scalar_lea.sflag [#allocation4], %s1513
        %s1515 = sand.u32 %s173, 1
        %s1516 = smul.addr %s1515, 16
        %s1517 = scalar_lea.vmem [#allocation10], %s1516
        %s1518 = sand.u32 %s32, 1
        %s1519 = scalar_lea.sflag [#allocation12], %s1518
        %s1520 = sand.u32 %s201, 1
        %s1521 = smul.addr %s1520, 16
        %s1522 = scalar_lea.vmem [#allocation11], %s1521
        %s1523 = sand.u32 %s32, 1
        %s1524 = scalar_lea.sflag [#allocation12], %s1523
        %s1525 = sand.u32 %s229, 1
        %s1526 = smul.addr %s1525, 16
        %s1527 = scalar_lea.vmem [#allocation13], %s1526
        // Predicated region
        $region57: #{tpu_custom_call.1} parent=39 // pred_check
          %p1528 = pneg %p183
        $region58: #{tpu_custom_call.1} parent=39 // pred_check_branch
          %1530 = sbr.rel (%p1528) target = $region60
        $region59: #{tpu_custom_call.1} parent=39 // pred_region
          %1532 = vsyncadd %s1514, 0
          %s1533 = smul.addr %s36, 4
          %s1534 = sadd.s32 %s37, %s1533
          %s1535 = smul.addr %s1534, 4
          %s1536 = scalar_lea.hbm %s5, %s1535
          %s1537 = sshll.u32 %s1517, 4
          %s1538 = int_to_ptr.vmem [resolvable:$true] %s1537
          %s1539 = sshll.u32 %s1536, 4
          %s1540 = int_to_ptr.hbm [resolvable:$true] %s1539
          %1545 = dma.vmem_to_hbm [thread:$0]  %s1538, 256, %s1540, %s1514, 64, 64, 4
        $region60: #{tpu_custom_call.1} parent=39 // pred_fallthru
          _
        // Predicated region
        $region61: #{tpu_custom_call.1} parent=39 // pred_check
          %p1546 = pneg %p211
        $region62: #{tpu_custom_call.1} parent=39 // pred_check_branch
          %1548 = sbr.rel (%p1546) target = $region64
        $region63: #{tpu_custom_call.1} parent=39 // pred_region
          %1550 = vsyncadd %s1519, 0
          %s1551 = smul.addr %s36, 4
          %s1552 = sadd.s32 %s37, %s1551
          %s1553 = smul.addr %s1552, 4
          %s1554 = scalar_lea.hbm %s6, %s1553
          %s1555 = sshll.u32 %s1522, 4
          %s1556 = int_to_ptr.vmem [resolvable:$true] %s1555
          %s1557 = sshll.u32 %s1554, 4
          %s1558 = int_to_ptr.hbm [resolvable:$true] %s1557
          %1563 = dma.vmem_to_hbm [thread:$0]  %s1556, 256, %s1558, %s1519, 64, 64, 4
        $region64: #{tpu_custom_call.1} parent=39 // pred_fallthru
          _
        // Predicated region
        $region65: #{tpu_custom_call.1} parent=39 // pred_check
          %p1564 = pneg %p239
        $region66: #{tpu_custom_call.1} parent=39 // pred_check_branch
          %1566 = sbr.rel (%p1564) target = $region68
        $region67: #{tpu_custom_call.1} parent=39 // pred_region
          %1568 = vsyncadd %s1524, 0
          %s1569 = smul.addr %s36, 4
          %s1570 = sadd.s32 %s37, %s1569
          %s1571 = smul.addr %s1570, 4
          %s1572 = scalar_lea.hbm %s7, %s1571
          %s1573 = sshll.u32 %s1527, 4
          %s1574 = int_to_ptr.vmem [resolvable:$true] %s1573
          %s1575 = sshll.u32 %s1572, 4
          %s1576 = int_to_ptr.hbm [resolvable:$true] %s1575
          %1581 = dma.vmem_to_hbm [thread:$0]  %s1574, 256, %s1576, %s1524, 64, 64, 4
        $region68: #{tpu_custom_call.1} parent=39 // pred_fallthru
          _
      $region40: #{tpu_custom_call.1} parent=5 // pred_fallthru
        _
      %p1582 = scmp.le.s32.totalorder 2, %s27
      // Predicated region
      $region69: #{tpu_custom_call.1} parent=5 // pred_check
        %p1583 = pneg %p1582
      $region70: #{tpu_custom_call.1} parent=5 // pred_check_branch
        %1585 = sbr.rel (%p1583) target = $region72
      $region71: #{tpu_custom_call.1} parent=5 // pred_region
        %s1586 = ssub.s32 %s27, 2
        // Predicated region
        $region73: #{tpu_custom_call.1} parent=71 // pred_check
          %p1587 = pneg %p189
        $region74: #{tpu_custom_call.1} parent=71 // pred_check_branch
          %1589 = sbr.rel (%p1587) target = $region76
        $region75: #{tpu_custom_call.1} parent=71 // pred_region
          %s1590 = sand.u32 %s174, 1
          %s1591 = scalar_lea.sflag [#allocation4], %s1590
          %s1592 = sand.u32 %s174, 1
          %s1593 = smul.addr %s1592, 16
          %s1594 = scalar_lea.vmem [#allocation10], %s1593
          %1596 = dma.done %s1591, 256
        $region76: #{tpu_custom_call.1} parent=71 // pred_fallthru
          _
        // Predicated region
        $region77: #{tpu_custom_call.1} parent=71 // pred_check
          %p1597 = pneg %p217
        $region78: #{tpu_custom_call.1} parent=71 // pred_check_branch
          %1599 = sbr.rel (%p1597) target = $region80
        $region79: #{tpu_custom_call.1} parent=71 // pred_region
          %s1600 = sand.u32 %s33, 1
          %s1601 = scalar_lea.sflag [#allocation12], %s1600
          %s1602 = sand.u32 %s202, 1
          %s1603 = smul.addr %s1602, 16
          %s1604 = scalar_lea.vmem [#allocation11], %s1603
          %1606 = dma.done %s1601, 256
        $region80: #{tpu_custom_call.1} parent=71 // pred_fallthru
          _
        // Predicated region
        $region81: #{tpu_custom_call.1} parent=71 // pred_check
          %p1607 = pneg %p245
        $region82: #{tpu_custom_call.1} parent=71 // pred_check_branch
          %1609 = sbr.rel (%p1607) target = $region84
        $region83: #{tpu_custom_call.1} parent=71 // pred_region
          %s1610 = sand.u32 %s33, 1
          %s1611 = scalar_lea.sflag [#allocation12], %s1610
          %s1612 = sand.u32 %s230, 1
          %s1613 = smul.addr %s1612, 16
          %s1614 = scalar_lea.vmem [#allocation13], %s1613
          %1616 = dma.done %s1611, 256
        $region84: #{tpu_custom_call.1} parent=71 // pred_fallthru
          _
      $region72: #{tpu_custom_call.1} parent=5 // pred_fallthru
        _
    $region6: #{tpu_custom_call.1} parent=1 // loop_footer
      %s31 = sadd.s32 1, %s27
    $region7: #{tpu_custom_call.1} parent=1 // loop_footer_branch
      %26 = sbr.rel target = $region3
    $region8: #{tpu_custom_call.1} parent=1 // loop_exit
      _
    %1617 = vsyncpa [#allocation3], 1
    %s1618 = scalar_lea.sflag [#allocation3], 1
    %1619 = vsyncpa %s1618, 1
    %1620 = vsyncpa [#allocation6], 1
    %s1621 = scalar_lea.sflag [#allocation6], 1
    %1622 = vsyncpa %s1621, 1
    %1623 = vsyncpa [#allocation9], 1
    %1624 = vsyncpa [#allocation4], 1
    %s1625 = scalar_lea.sflag [#allocation4], 1
    %1626 = vsyncpa %s1625, 1
    %1627 = vsyncpa [#allocation12], 1
    %s1628 = scalar_lea.sflag [#allocation12], 1
    %1629 = vsyncpa %s1628, 1

</llo_original>
